<compile_context>
chip_gen: v6e
topology: v6e:2x2x1
jax: 0.10.0
libtpu: 0.0.40
codegen_flags: <defaults>
</compile_context>

<pallas_src>
import functools
import math

import jax
import jax.numpy as jnp
from jax import lax
from jax.experimental import pallas as pl
from jax.experimental.pallas import tpu as pltpu


_VMEM_LIMIT = 48 * 1024 * 1024   # explicit scoped-VMEM budget (safe on v5e/v6e/v7x)


# ------------------------------ tiling helpers ------------------------------

def _pick_tile(n, desired, align):
    """Largest multiple of `align` that divides n and is <= desired, else n."""
    if n <= desired:
        return n
    t = (desired // align) * align
    while t >= align:
        if n % t == 0:
            return t
        t -= align
    return n


def _round_up(n, m):
    return ((n + m - 1) // m) * m


def _pad_rows(a, target):
    n = a.shape[0]
    if n == target:
        return a
    pad = [(0, target - n)] + [(0, 0)] * (a.ndim - 1)
    return jnp.pad(a, pad)


# ------------------------- tiled linear (x @ w + b) ------------------------

def _matmul_bias_kernel(x_ref, w_ref, b_ref, o_ref, acc_ref):
    @pl.when(pl.program_id(2) == 0)
    def _():
        acc_ref[...] = jnp.zeros_like(acc_ref)

    acc_ref[...] += jnp.dot(x_ref[...].astype(jnp.bfloat16),
                            w_ref[...].astype(jnp.bfloat16),
                            preferred_element_type=jnp.float32)

    @pl.when(pl.program_id(2) == pl.num_programs(2) - 1)
    def _():
        o_ref[...] = (acc_ref[...] + b_ref[...]).astype(o_ref.dtype)


def linear(x, w, b, *, out_dtype=jnp.float32, tm=512, tn=256, tk=512):
    """y = x @ w + b   with x:[N,Din], w:[Din,Dout], b:[Dout] (bf16 MXU)."""
    N, Din = x.shape
    Dout = w.shape[1]
    Np = _round_up(N, 8)
    tm = _pick_tile(Np, tm, 8)
    tn = _pick_tile(Dout, tn, 128)
    tk = _pick_tile(Din, tk, 128)
    x_p = _pad_rows(x, Np)
    grid = (Np // tm, Dout // tn, Din // tk)
    out = pl.pallas_call(
        _matmul_bias_kernel,
        out_shape=jax.ShapeDtypeStruct((Np, Dout), out_dtype),
        grid=grid,
        in_specs=[pl.BlockSpec((tm, tk), lambda i, j, k: (i, k)),
                  pl.BlockSpec((tk, tn), lambda i, j, k: (k, j)),
                  pl.BlockSpec((1, tn), lambda i, j, k: (0, j))],
        out_specs=pl.BlockSpec((tm, tn), lambda i, j, k: (i, j)),
        scratch_shapes=[pltpu.VMEM((tm, tn), jnp.float32)],
        compiler_params=pltpu.CompilerParams(
            dimension_semantics=("parallel", "parallel", "arbitrary"),
            vmem_limit_bytes=_VMEM_LIMIT),
    )(x_p, w, b.reshape(1, Dout))
    return out[:N] if Np != N else out


# ------------------------ flash attention (online softmax) ------------------
# grid = (B, q_tiles, kv_tiles); kv axis is the reduction ("arbitrary") axis
# with m/l/acc scratch.  Softmax scale is folded into the q projection weights
# outside the kernel.  Heads are split with static slices and written directly
# into per-head scratch slots (no concatenate).

def _flash_attn_kernel(q_ref, k_ref, v_ref, o_ref, m_sc, l_sc, acc_sc,
                       *, n_heads, dh):
    ki = pl.program_id(2)

    @pl.when(ki == 0)
    def _():
        m_sc[...] = jnp.full_like(m_sc, -jnp.inf)
        l_sc[...] = jnp.zeros_like(l_sc)
        acc_sc[...] = jnp.zeros_like(acc_sc)

    q = q_ref[0]                                    # (tq, D) bf16, pre-scaled
    k = k_ref[0]                                    # (tk, D) bf16
    v = v_ref[0]                                    # (tk, D) bf16

    for h in range(n_heads):
        lo, hi = h * dh, (h + 1) * dh
        s = lax.dot_general(q[:, lo:hi], k[:, lo:hi],
                            (((1,), (1,)), ((), ())),
                            preferred_element_type=jnp.float32)   # (tq, tk)
        m_prev = m_sc[h]                                          # (tq, 1)
        m_new = jnp.maximum(m_prev, jnp.max(s, axis=-1, keepdims=True))
        alpha = jnp.exp(m_prev - m_new)
        p = jnp.exp(s - m_new)
        l_sc[h] = alpha * l_sc[h] + jnp.sum(p, axis=-1, keepdims=True)
        acc_sc[h] = alpha * acc_sc[h] + jnp.dot(
            p.astype(jnp.bfloat16), v[:, lo:hi],
            preferred_element_type=jnp.float32)
        m_sc[h] = m_new

    @pl.when(ki == pl.num_programs(2) - 1)
    def _():
        for h in range(n_heads):
            lo, hi = h * dh, (h + 1) * dh
            o_ref[0, :, lo:hi] = (acc_sc[h] / l_sc[h]).astype(o_ref.dtype)


def flash_attention(q, k, v, n_heads, *, tq=128, tk=128):
    """q:[B,Sq,D], k/v:[B,Sk,D] (bf16, scale folded into q) -> [B,Sq,D] bf16."""
    B, Sq, D = q.shape
    Sk = k.shape[1]
    dh = D // n_heads
    tq = _pick_tile(Sq, tq, 8)
    tk = _pick_tile(Sk, tk, 8)
    grid = (B, Sq // tq, Sk // tk)
    return pl.pallas_call(
        functools.partial(_flash_attn_kernel, n_heads=n_heads, dh=dh),
        out_shape=jax.ShapeDtypeStruct((B, Sq, D), jnp.bfloat16),
        grid=grid,
        in_specs=[pl.BlockSpec((1, tq, D), lambda b, qi, ki: (b, qi, 0)),
                  pl.BlockSpec((1, tk, D), lambda b, qi, ki: (b, ki, 0)),
                  pl.BlockSpec((1, tk, D), lambda b, qi, ki: (b, ki, 0))],
        out_specs=pl.BlockSpec((1, tq, D), lambda b, qi, ki: (b, qi, 0)),
        scratch_shapes=[pltpu.VMEM((n_heads, tq, 1), jnp.float32),
                        pltpu.VMEM((n_heads, tq, 1), jnp.float32),
                        pltpu.VMEM((n_heads, tq, dh), jnp.float32)],
        compiler_params=pltpu.CompilerParams(
            dimension_semantics=("parallel", "parallel", "arbitrary"),
            vmem_limit_bytes=_VMEM_LIMIT),
    )(q, k, v)


# ---------------- fused: out-proj matmul + residual + LayerNorm ------------

def _proj_add_ln_kernel(x_ref, w_ref, b_ref, r_ref, g_ref, be_ref,
                        o_ref, acc_ref, *, eps):
    k = pl.program_id(1)

    @pl.when(k == 0)
    def _():
        acc_ref[...] = jnp.zeros_like(acc_ref)

    acc_ref[...] += jnp.dot(x_ref[...].astype(jnp.bfloat16),
                            w_ref[...].astype(jnp.bfloat16),
                            preferred_element_type=jnp.float32)

    @pl.when(k == pl.num_programs(1) - 1)
    def _():
        h = acc_ref[...] + b_ref[...] + r_ref[...]     # bias + residual (f32)
        mu = jnp.mean(h, axis=-1, keepdims=True)
        d = h - mu
        var = jnp.mean(d * d, axis=-1, keepdims=True)
        o_ref[...] = d * lax.rsqrt(var + eps) * g_ref[...] + be_ref[...]


def proj_residual_ln(x, w, b, residual, gamma, beta, *, eps=1e-5,
                     tm=128, tk=256):
    """LayerNorm(residual + x @ w + b).  x:[N,Din] (bf16 ok), w:[Din,Dout]."""
    N, Din = x.shape
    Dout = w.shape[1]
    Np = _round_up(N, 8)
    tm = _pick_tile(Np, tm, 8)
    tk = _pick_tile(Din, tk, 128)
    x_p = _pad_rows(x, Np)
    r_p = _pad_rows(residual, Np)
    grid = (Np // tm, Din // tk)
    out = pl.pallas_call(
        functools.partial(_proj_add_ln_kernel, eps=eps),
        out_shape=jax.ShapeDtypeStruct((Np, Dout), jnp.float32),
        grid=grid,
        in_specs=[pl.BlockSpec((tm, tk), lambda i, k: (i, k)),
                  pl.BlockSpec((tk, Dout), lambda i, k: (k, 0)),
                  pl.BlockSpec((1, Dout), lambda i, k: (0, 0)),
                  pl.BlockSpec((tm, Dout), lambda i, k: (i, 0)),
                  pl.BlockSpec((1, Dout), lambda i, k: (0, 0)),
                  pl.BlockSpec((1, Dout), lambda i, k: (0, 0))],
        out_specs=pl.BlockSpec((tm, Dout), lambda i, k: (i, 0)),
        scratch_shapes=[pltpu.VMEM((tm, Dout), jnp.float32)],
        compiler_params=pltpu.CompilerParams(
            dimension_semantics=("parallel", "arbitrary"),
            vmem_limit_bytes=_VMEM_LIMIT),
    )(x_p, w, b.reshape(1, Dout), r_p,
      gamma.reshape(1, Dout), beta.reshape(1, Dout))
    return out[:N] if Np != N else out


# ---------- fused MoE: K-tiled expert FFN + weighted combine + res + LN -----
# grid = (row_tiles, E, H_tiles).  The expert axis and the hidden (H) axis are
# both reduction axes: acc_y accumulates one expert's FFN output over H tiles,
# acc_moe accumulates the gate-weighted expert outputs over experts; the final
# (e, j) step applies residual + LayerNorm.  Expert weight blocks are
# (D,tH)/(tH,D), so full (D,H) matrices never have to fit in VMEM.

def _moe_ffn_ln_kernel(x_ref, cw_ref, w1_ref, b1_ref, w2_ref, b2_ref,
                       g_ref, be_ref, o_ref, acc_moe, acc_y, *, eps):
    e = pl.program_id(1)
    j = pl.program_id(2)
    ne = pl.num_programs(1)
    nj = pl.num_programs(2)

    @pl.when((e == 0) & (j == 0))
    def _():
        acc_moe[...] = jnp.zeros_like(acc_moe)

    @pl.when(j == 0)
    def _():
        acc_y[...] = jnp.zeros_like(acc_y)

    xb = x_ref[...].astype(jnp.bfloat16)                         # (tm, D)
    h = jnp.dot(xb, w1_ref[0].astype(jnp.bfloat16),
                preferred_element_type=jnp.float32) + b1_ref[0]  # (tm, tH)
    h = jnp.maximum(h, 0.0)                                      # ReLU
    acc_y[...] += jnp.dot(h.astype(jnp.bfloat16),
                          w2_ref[0].astype(jnp.bfloat16),
                          preferred_element_type=jnp.float32)

    @pl.when(j == nj - 1)
    def _():
        acc_moe[...] += cw_ref[0] * (acc_y[...] + b2_ref[0])     # gated combine

    @pl.when((e == ne - 1) & (j == nj - 1))
    def _():
        hh = x_ref[...].astype(jnp.float32) + acc_moe[...]       # residual
        mu = jnp.mean(hh, axis=-1, keepdims=True)
        d = hh - mu
        var = jnp.mean(d * d, axis=-1, keepdims=True)
        o_ref[...] = (d * lax.rsqrt(var + eps) * g_ref[...]
                      + be_ref[...]).astype(o_ref.dtype)


def moe_ffn_residual_ln(x, cw, w1, b1, w2, b2, gamma, beta, *, eps=1e-5,
                        tm=256, th=512):
    """LayerNorm(x + sum_e cw[:,e] * FFN_e(x)).
    x:[N,D], cw:[N,E], w1:[E,D,H], b1:[E,H], w2:[E,H,D], b2:[E,D]."""
    N, D = x.shape
    E, _, H = w1.shape
    Np = _round_up(N, 8)
    tm = _pick_tile(Np, tm, 8)
    th = _pick_tile(H, th, 128)
    x_p = _pad_rows(x, Np)
    cw_p = _pad_rows(cw, Np)
    cw_t = cw_p.T.reshape(E, Np, 1)                  # per-expert gate column
    grid = (Np // tm, E, H // th)
    out = pl.pallas_call(
        functools.partial(_moe_ffn_ln_kernel, eps=eps),
        out_shape=jax.ShapeDtypeStruct((Np, D), jnp.float32),
        grid=grid,
        in_specs=[pl.BlockSpec((tm, D), lambda i, e, j: (i, 0)),
                  pl.BlockSpec((1, tm, 1), lambda i, e, j: (e, i, 0)),
                  pl.BlockSpec((1, D, th), lambda i, e, j: (e, 0, j)),
                  pl.BlockSpec((1, 1, th), lambda i, e, j: (e, 0, j)),
                  pl.BlockSpec((1, th, D), lambda i, e, j: (e, j, 0)),
                  pl.BlockSpec((1, 1, D), lambda i, e, j: (e, 0, 0)),
                  pl.BlockSpec((1, D), lambda i, e, j: (0, 0)),
                  pl.BlockSpec((1, D), lambda i, e, j: (0, 0))],
        out_specs=pl.BlockSpec((tm, D), lambda i, e, j: (i, 0)),
        scratch_shapes=[pltpu.VMEM((tm, D), jnp.float32),
                        pltpu.VMEM((tm, D), jnp.float32)],
        compiler_params=pltpu.CompilerParams(
            dimension_semantics=("parallel", "arbitrary", "arbitrary"),
            vmem_limit_bytes=_VMEM_LIMIT),
    )(x_p, cw_t, w1, b1.reshape(E, 1, H), w2, b2.reshape(E, 1, D),
      gamma.reshape(1, D), beta.reshape(1, D))
    return out[:N] if Np != N else out


# ------------------------------ Module glue --------------------------------

def decoder_block(x, enc, params, n_heads, n_experts, top_k):
    B, S, D = x.shape
    Senc = enc.shape[1]
    dh = D // n_heads
    scale = 1.0 / math.sqrt(dh)                      # folded into q weights

    xf = x.reshape(B * S, D)
    encf = enc.reshape(B * Senc, D)

    # ---- self-attention -> drop1 (identity, eval) -> add & norm1 ----
    p = params["self_attn"]
    wqkv = jnp.concatenate([p["wq"] * scale, p["wk"], p["wv"]], axis=1)  # [D,3D]
    bqkv = jnp.concatenate([p["bq"] * scale, p["bk"], p["bv"]], axis=0)  # [3D]
    qkv = linear(xf, wqkv, bqkv, out_dtype=jnp.bfloat16).reshape(B, S, 3 * D)
    q, k, v = qkv[:, :, :D], qkv[:, :, D:2 * D], qkv[:, :, 2 * D:]
    sa = flash_attention(q, k, v, n_heads)                               # bf16
    xf = proj_residual_ln(sa.reshape(B * S, D), p["wo"], p["bo"], xf,
                          params["norm1_g"], params["norm1_b"])

    # ---- cross-attention -> drop2 (identity) -> add & norm2 ----
    p = params["cross_attn"]
    q = linear(xf, p["wq"] * scale, p["bq"] * scale,
               out_dtype=jnp.bfloat16).reshape(B, S, D)
    wkv = jnp.concatenate([p["wk"], p["wv"]], axis=1)                    # [D,2D]
    bkv = jnp.concatenate([p["bk"], p["bv"]], axis=0)                    # [2D]
    kv = linear(encf, wkv, bkv, out_dtype=jnp.bfloat16).reshape(B, Senc, 2 * D)
    ke, ve = kv[:, :, :D], kv[:, :, D:]
    ca = flash_attention(q, ke, ve, n_heads)                             # bf16
    xf = proj_residual_ln(ca.reshape(B * S, D), p["wo"], p["bo"], xf,
                          params["norm2_g"], params["norm2_b"])

    # ---- sparse MoE -> drop3 (identity) -> add & norm3 ----
    m = params["moe"]
    logits = linear(xf, m["gate_w"], m["gate_b"])                        # [N,E]
    probs = jax.nn.softmax(logits, axis=-1)
    topv, topi = lax.top_k(probs, top_k)                                 # routing glue
    weights = topv / jnp.sum(topv, axis=-1, keepdims=True)               # renormalized
    one_hot = jax.nn.one_hot(topi, n_experts, dtype=jnp.float32)         # [N,k,E]
    cw = jnp.sum(one_hot * weights[..., None], axis=1)                   # [N,E]
    out = moe_ffn_residual_ln(xf, cw, m["w1"], m["b1"], m["w2"], m["b2"],
                              params["norm3_g"], params["norm3_b"])

    mask = jnp.sum(one_hot, axis=1)                                      # [N,E] 0/1
    f_e = jnp.mean(mask, axis=0) / top_k
    p_e = jnp.mean(probs, axis=0)
    lb = n_experts * jnp.sum(f_e * p_e)

    next_kv = None   # use_cache=False
    return out.reshape(B, S, D), lb, next_kv


# ------------------------------ Param init ---------------------------------

def _init_mha(key, dim):
    ks = jax.random.split(key, 4)
    mk = lambda k: 0.02 * jax.random.normal(k, (dim, dim), jnp.float32)
    return dict(wq=mk(ks[0]), bq=jnp.zeros((dim,), jnp.float32),
                wk=mk(ks[1]), bk=jnp.zeros((dim,), jnp.float32),
                wv=mk(ks[2]), bv=jnp.zeros((dim,), jnp.float32),
                wo=mk(ks[3]), bo=jnp.zeros((dim,), jnp.float32))


def init_params(key, dim, n_heads, n_experts, hidden_mult=4):
    ks = jax.random.split(key, 6)
    hid = hidden_mult * dim
    moe = dict(
        gate_w=0.02 * jax.random.normal(ks[2], (dim, n_experts), jnp.float32),
        gate_b=jnp.zeros((n_experts,), jnp.float32),
        w1=0.02 * jax.random.normal(ks[3], (n_experts, dim, hid), jnp.float32),
        b1=jnp.zeros((n_experts, hid), jnp.float32),
        w2=0.02 * jax.random.normal(ks[4], (n_experts, hid, dim), jnp.float32),
        b2=jnp.zeros((n_experts, dim), jnp.float32),
    )
    return dict(
        self_attn=_init_mha(ks[0], dim),
        cross_attn=_init_mha(ks[1], dim),
        moe=moe,
        norm1_g=jnp.ones((dim,), jnp.float32), norm1_b=jnp.zeros((dim,), jnp.float32),
        norm2_g=jnp.ones((dim,), jnp.float32), norm2_b=jnp.zeros((dim,), jnp.float32),
        norm3_g=jnp.ones((dim,), jnp.float32), norm3_b=jnp.zeros((dim,), jnp.float32),
    )


# --------------------------------- Main -------------------------------------

if __name__ == "__main__":
    B, S, S_enc = 2, 8, 8
    dim, n_heads, n_experts, top_k = 32, 4, 4, 2

    key = jax.random.PRNGKey(0)
    kx, kenc, kp = jax.random.split(key, 3)
    x = jax.random.normal(kx, (B, S, dim), jnp.float32)
    enc = jax.random.normal(kenc, (B, S_enc, dim), jnp.float32)
    params = init_params(kp, dim, n_heads, n_experts)

    decoder_jit = jax.jit(functools.partial(
        decoder_block, n_heads=n_heads, n_experts=n_experts, top_k=top_k))

    out, lb, next_kv = decoder_jit(x, enc, params)
    jax.block_until_ready(out)
    jax.block_until_ready(lb)

    assert out.shape == (B, S, dim) and out.dtype == jnp.float32
    assert next_kv is None
    assert bool(jnp.all(jnp.isfinite(out)))
    assert bool(jnp.isfinite(lb))
    print("KERNEL_OK")
</pallas_src>

<mosaic_0001>
module attributes {stable_mosaic.version = 11 : i64} {
  func.func @_matmul_bias_kernel(%arg0: i32, %arg1: i32, %arg2: i32, %arg3: memref<16x32xf32, #tpu.memory_space<vmem>>, %arg4: memref<32x64xf32, #tpu.memory_space<vmem>>, %arg5: memref<1x64xf32, #tpu.memory_space<vmem>>, %arg6: memref<16x64xbf16, #tpu.memory_space<vmem>>, %arg7: memref<16x64xf32, #tpu.memory_space<vmem>>) attributes {dimension_semantics = [#tpu.dimension_semantics<parallel>, #tpu.dimension_semantics<parallel>, #tpu.dimension_semantics<arbitrary>], iteration_bounds = array<i64: 1, 1, 1>, scalar_prefetch = 0 : i64, scratch_operands = 1 : i64, tpu.core_type = #tpu.core_type<tc>, window_params = [{transform_indices = @transform_0, window_bounds = array<i64: 16, 32>}, {transform_indices = @transform_1, window_bounds = array<i64: 32, 64>}, {transform_indices = @transform_2, window_bounds = array<i64: 1, 64>}, {transform_indices = @transform_3, window_bounds = array<i64: 16, 64>}]} {
    %c0_i32 = arith.constant 0 : i32
    %0 = arith.cmpi eq, %arg2, %c0_i32 : i32
    %1 = arith.extui %0 : i1 to i32
    %c0_i32_0 = arith.constant 0 : i32
    %2 = arith.cmpi ne, %1, %c0_i32_0 : i32
    scf.if %2 {
      %cst_10 = arith.constant 0.000000e+00 : f32
      %14 = vector.broadcast %cst_10 : f32 to vector<16x64xf32>
      %c0_11 = arith.constant 0 : index
      %c0_12 = arith.constant 0 : index
      %15 = vector.load %arg7[%c0_11, %c0_12] : memref<16x64xf32, #tpu.memory_space<vmem>>, vector<16x64xf32>
      tpu.vector_store %arg7[%c0_11, %c0_12], %14 {strides = array<i32>} : memref<16x64xf32, #tpu.memory_space<vmem>>, vector<16x64xf32>,
    } else {
    }
    %c0 = arith.constant 0 : index
    %c0_1 = arith.constant 0 : index
    %3 = vector.load %arg7[%c0, %c0_1] : memref<16x64xf32, #tpu.memory_space<vmem>>, vector<16x64xf32>
    %c0_2 = arith.constant 0 : index
    %c0_3 = arith.constant 0 : index
    %4 = vector.load %arg3[%c0_2, %c0_3] : memref<16x32xf32, #tpu.memory_space<vmem>>, vector<16x32xf32>
    %5 = arith.truncf %4 : vector<16x32xf32> to vector<16x32xbf16>
    %c0_4 = arith.constant 0 : index
    %c0_5 = arith.constant 0 : index
    %6 = vector.load %arg4[%c0_4, %c0_5] : memref<32x64xf32, #tpu.memory_space<vmem>>, vector<32x64xf32>
    %7 = arith.truncf %6 : vector<32x64xf32> to vector<32x64xbf16>
    %cst = arith.constant dense<0.000000e+00> : vector<16x64xf32>
    %8 = tpu.matmul %5, %7, %cst {dimension_numbers = #tpu.dot_dimension_numbers<[1], [0], [0], [1], [0, 0, 1, 1], [], []>} : vector<16x32xbf16>, vector<32x64xbf16>, vector<16x64xf32> -> vector<16x64xf32>
    %9 = arith.addf %3, %8 : vector<16x64xf32>
    %c0_6 = arith.constant 0 : index
    %c0_7 = arith.constant 0 : index
    %10 = vector.load %arg7[%c0_6, %c0_7] : memref<16x64xf32, #tpu.memory_space<vmem>>, vector<16x64xf32>
    tpu.vector_store %arg7[%c0_6, %c0_7], %9 {strides = array<i32>} : memref<16x64xf32, #tpu.memory_space<vmem>>, vector<16x64xf32>,
    %c0_i32_8 = arith.constant 0 : i32
    %11 = arith.cmpi eq, %arg2, %c0_i32_8 : i32
    %12 = arith.extui %11 : i1 to i32
    %c0_i32_9 = arith.constant 0 : i32
    %13 = arith.cmpi ne, %12, %c0_i32_9 : i32
    scf.if %13 {
      %c0_10 = arith.constant 0 : index
      %c0_11 = arith.constant 0 : index
      %14 = vector.load %arg7[%c0_10, %c0_11] : memref<16x64xf32, #tpu.memory_space<vmem>>, vector<16x64xf32>
      %c0_12 = arith.constant 0 : index
      %c0_13 = arith.constant 0 : index
      %15 = vector.load %arg5[%c0_12, %c0_13] : memref<1x64xf32, #tpu.memory_space<vmem>>, vector<1x64xf32>
      %16 = vector.broadcast %15 : vector<1x64xf32> to vector<16x64xf32>
      %17 = arith.addf %14, %16 : vector<16x64xf32>
      %18 = arith.truncf %17 : vector<16x64xf32> to vector<16x64xbf16>
      %c0_14 = arith.constant 0 : index
      %c0_15 = arith.constant 0 : index
      %19 = vector.load %arg6[%c0_14, %c0_15] : memref<16x64xbf16, #tpu.memory_space<vmem>>, vector<16x64xbf16>
      tpu.vector_store %arg6[%c0_14, %c0_15], %18 {strides = array<i32>} : memref<16x64xbf16, #tpu.memory_space<vmem>>, vector<16x64xbf16>,
    } else {
    }
    return
  }
  func.func @transform_0(%arg0: i32, %arg1: i32, %arg2: i32) -> (i32, i32) {
    %c0_i32 = arith.constant 0 : i32
    return %arg0, %arg2 : i32, i32
  }
  func.func @transform_1(%arg0: i32, %arg1: i32, %arg2: i32) -> (i32, i32) {
    %c0_i32 = arith.constant 0 : i32
    return %arg2, %arg1 : i32, i32
  }
  func.func @transform_2(%arg0: i32, %arg1: i32, %arg2: i32) -> (i32, i32) {
    %c0_i32 = arith.constant 0 : i32
    %c0_i32_0 = arith.constant 0 : i32
    return %c0_i32, %arg1 : i32, i32
  }
  func.func @transform_3(%arg0: i32, %arg1: i32, %arg2: i32) -> (i32, i32) {
    %c0_i32 = arith.constant 0 : i32
    return %arg0, %arg1 : i32, i32
  }
}

module attributes {stable_mosaic.version = 11 : i64} {
  func.func @_matmul_bias_kernel(%arg0: i32, %arg1: i32, %arg2: i32, %arg3: memref<16x32xf32, #tpu.memory_space<vmem>>, %arg4: memref<32x96xf32, #tpu.memory_space<vmem>>, %arg5: memref<1x96xf32, #tpu.memory_space<vmem>>, %arg6: memref<16x96xbf16, #tpu.memory_space<vmem>>, %arg7: memref<16x96xf32, #tpu.memory_space<vmem>>) attributes {dimension_semantics = [#tpu.dimension_semantics<parallel>, #tpu.dimension_semantics<parallel>, #tpu.dimension_semantics<arbitrary>], iteration_bounds = array<i64: 1, 1, 1>, scalar_prefetch = 0 : i64, scratch_operands = 1 : i64, tpu.core_type = #tpu.core_type<tc>, window_params = [{transform_indices = @transform_0, window_bounds = array<i64: 16, 32>}, {transform_indices = @transform_1, window_bounds = array<i64: 32, 96>}, {transform_indices = @transform_2, window_bounds = array<i64: 1, 96>}, {transform_indices = @transform_3, window_bounds = array<i64: 16, 96>}]} {
    %c0_i32 = arith.constant 0 : i32
    %0 = arith.cmpi eq, %arg2, %c0_i32 : i32
    %1 = arith.extui %0 : i1 to i32
    %c0_i32_0 = arith.constant 0 : i32
    %2 = arith.cmpi ne, %1, %c0_i32_0 : i32
    scf.if %2 {
      %cst_10 = arith.constant 0.000000e+00 : f32
      %14 = vector.broadcast %cst_10 : f32 to vector<16x96xf32>
      %c0_11 = arith.constant 0 : index
      %c0_12 = arith.constant 0 : index
      %15 = vector.load %arg7[%c0_11, %c0_12] : memref<16x96xf32, #tpu.memory_space<vmem>>, vector<16x96xf32>
      tpu.vector_store %arg7[%c0_11, %c0_12], %14 {strides = array<i32>} : memref<16x96xf32, #tpu.memory_space<vmem>>, vector<16x96xf32>,
    } else {
    }
    %c0 = arith.constant 0 : index
    %c0_1 = arith.constant 0 : index
    %3 = vector.load %arg7[%c0, %c0_1] : memref<16x96xf32, #tpu.memory_space<vmem>>, vector<16x96xf32>
    %c0_2 = arith.constant 0 : index
    %c0_3 = arith.constant 0 : index
    %4 = vector.load %arg3[%c0_2, %c0_3] : memref<16x32xf32, #tpu.memory_space<vmem>>, vector<16x32xf32>
    %5 = arith.truncf %4 : vector<16x32xf32> to vector<16x32xbf16>
    %c0_4 = arith.constant 0 : index
    %c0_5 = arith.constant 0 : index
    %6 = vector.load %arg4[%c0_4, %c0_5] : memref<32x96xf32, #tpu.memory_space<vmem>>, vector<32x96xf32>
    %7 = arith.truncf %6 : vector<32x96xf32> to vector<32x96xbf16>
    %cst = arith.constant dense<0.000000e+00> : vector<16x96xf32>
    %8 = tpu.matmul %5, %7, %cst {dimension_numbers = #tpu.dot_dimension_numbers<[1], [0], [0], [1], [0, 0, 1, 1], [], []>} : vector<16x32xbf16>, vector<32x96xbf16>, vector<16x96xf32> -> vector<16x96xf32>
    %9 = arith.addf %3, %8 : vector<16x96xf32>
    %c0_6 = arith.constant 0 : index
    %c0_7 = arith.constant 0 : index
    %10 = vector.load %arg7[%c0_6, %c0_7] : memref<16x96xf32, #tpu.memory_space<vmem>>, vector<16x96xf32>
    tpu.vector_store %arg7[%c0_6, %c0_7], %9 {strides = array<i32>} : memref<16x96xf32, #tpu.memory_space<vmem>>, vector<16x96xf32>,
    %c0_i32_8 = arith.constant 0 : i32
    %11 = arith.cmpi eq, %arg2, %c0_i32_8 : i32
    %12 = arith.extui %11 : i1 to i32
    %c0_i32_9 = arith.constant 0 : i32
    %13 = arith.cmpi ne, %12, %c0_i32_9 : i32
    scf.if %13 {
      %c0_10 = arith.constant 0 : index
      %c0_11 = arith.constant 0 : index
      %14 = vector.load %arg7[%c0_10, %c0_11] : memref<16x96xf32, #tpu.memory_space<vmem>>, vector<16x96xf32>
      %c0_12 = arith.constant 0 : index
      %c0_13 = arith.constant 0 : index
      %15 = vector.load %arg5[%c0_12, %c0_13] : memref<1x96xf32, #tpu.memory_space<vmem>>, vector<1x96xf32>
      %16 = vector.broadcast %15 : vector<1x96xf32> to vector<16x96xf32>
      %17 = arith.addf %14, %16 : vector<16x96xf32>
      %18 = arith.truncf %17 : vector<16x96xf32> to vector<16x96xbf16>
      %c0_14 = arith.constant 0 : index
      %c0_15 = arith.constant 0 : index
      %19 = vector.load %arg6[%c0_14, %c0_15] : memref<16x96xbf16, #tpu.memory_space<vmem>>, vector<16x96xbf16>
      tpu.vector_store %arg6[%c0_14, %c0_15], %18 {strides = array<i32>} : memref<16x96xbf16, #tpu.memory_space<vmem>>, vector<16x96xbf16>,
    } else {
    }
    return
  }
  func.func @transform_0(%arg0: i32, %arg1: i32, %arg2: i32) -> (i32, i32) {
    %c0_i32 = arith.constant 0 : i32
    return %arg0, %arg2 : i32, i32
  }
  func.func @transform_1(%arg0: i32, %arg1: i32, %arg2: i32) -> (i32, i32) {
    %c0_i32 = arith.constant 0 : i32
    return %arg2, %arg1 : i32, i32
  }
  func.func @transform_2(%arg0: i32, %arg1: i32, %arg2: i32) -> (i32, i32) {
    %c0_i32 = arith.constant 0 : i32
    %c0_i32_0 = arith.constant 0 : i32
    return %c0_i32, %arg1 : i32, i32
  }
  func.func @transform_3(%arg0: i32, %arg1: i32, %arg2: i32) -> (i32, i32) {
    %c0_i32 = arith.constant 0 : i32
    return %arg0, %arg1 : i32, i32
  }
}

module attributes {stable_mosaic.version = 11 : i64} {
  func.func @_proj_add_ln_kernel(%arg0: i32, %arg1: i32, %arg2: memref<16x32xbf16, #tpu.memory_space<vmem>>, %arg3: memref<32x32xf32, #tpu.memory_space<vmem>>, %arg4: memref<1x32xf32, #tpu.memory_space<vmem>>, %arg5: memref<16x32xf32, #tpu.memory_space<vmem>>, %arg6: memref<1x32xf32, #tpu.memory_space<vmem>>, %arg7: memref<1x32xf32, #tpu.memory_space<vmem>>, %arg8: memref<16x32xf32, #tpu.memory_space<vmem>>, %arg9: memref<16x32xf32, #tpu.memory_space<vmem>>) attributes {dimension_semantics = [#tpu.dimension_semantics<parallel>, #tpu.dimension_semantics<arbitrary>], iteration_bounds = array<i64: 1, 1>, scalar_prefetch = 0 : i64, scratch_operands = 1 : i64, tpu.core_type = #tpu.core_type<tc>, window_params = [{transform_indices = @transform_0, window_bounds = array<i64: 16, 32>}, {transform_indices = @transform_1, window_bounds = array<i64: 32, 32>}, {pipeline_mode = #tpu.pipeline_mode<synchronous>, transform_indices = @transform_2, window_bounds = array<i64: 1, 32>}, {transform_indices = @transform_3, window_bounds = array<i64: 16, 32>}, {pipeline_mode = #tpu.pipeline_mode<synchronous>, transform_indices = @transform_4, window_bounds = array<i64: 1, 32>}, {pipeline_mode = #tpu.pipeline_mode<synchronous>, transform_indices = @transform_5, window_bounds = array<i64: 1, 32>}, {transform_indices = @transform_6, window_bounds = array<i64: 16, 32>}]} {
    %c0_i32 = arith.constant 0 : i32
    %0 = arith.cmpi eq, %arg1, %c0_i32 : i32
    %1 = arith.extui %0 : i1 to i32
    %c0_i32_0 = arith.constant 0 : i32
    %2 = arith.cmpi ne, %1, %c0_i32_0 : i32
    scf.if %2 {
      %cst_10 = arith.constant 0.000000e+00 : f32
      %13 = vector.broadcast %cst_10 : f32 to vector<16x32xf32>
      %c0_11 = arith.constant 0 : index
      %c0_12 = arith.constant 0 : index
      %14 = vector.load %arg9[%c0_11, %c0_12] : memref<16x32xf32, #tpu.memory_space<vmem>>, vector<16x32xf32>
      tpu.vector_store %arg9[%c0_11, %c0_12], %13 {strides = array<i32>} : memref<16x32xf32, #tpu.memory_space<vmem>>, vector<16x32xf32>,
    } else {
    }
    %c0 = arith.constant 0 : index
    %c0_1 = arith.constant 0 : index
    %3 = vector.load %arg9[%c0, %c0_1] : memref<16x32xf32, #tpu.memory_space<vmem>>, vector<16x32xf32>
    %c0_2 = arith.constant 0 : index
    %c0_3 = arith.constant 0 : index
    %4 = vector.load %arg2[%c0_2, %c0_3] : memref<16x32xbf16, #tpu.memory_space<vmem>>, vector<16x32xbf16>
    %c0_4 = arith.constant 0 : index
    %c0_5 = arith.constant 0 : index
    %5 = vector.load %arg3[%c0_4, %c0_5] : memref<32x32xf32, #tpu.memory_space<vmem>>, vector<32x32xf32>
    %6 = arith.truncf %5 : vector<32x32xf32> to vector<32x32xbf16>
    %cst = arith.constant dense<0.000000e+00> : vector<16x32xf32>
    %7 = tpu.matmul %4, %6, %cst {dimension_numbers = #tpu.dot_dimension_numbers<[1], [0], [0], [1], [0, 0, 1, 1], [], []>} : vector<16x32xbf16>, vector<32x32xbf16>, vector<16x32xf32> -> vector<16x32xf32>
    %8 = arith.addf %3, %7 : vector<16x32xf32>
    %c0_6 = arith.constant 0 : index
    %c0_7 = arith.constant 0 : index
    %9 = vector.load %arg9[%c0_6, %c0_7] : memref<16x32xf32, #tpu.memory_space<vmem>>, vector<16x32xf32>
    tpu.vector_store %arg9[%c0_6, %c0_7], %8 {strides = array<i32>} : memref<16x32xf32, #tpu.memory_space<vmem>>, vector<16x32xf32>,
    %c0_i32_8 = arith.constant 0 : i32
    %10 = arith.cmpi eq, %arg1, %c0_i32_8 : i32
    %11 = arith.extui %10 : i1 to i32
    %c0_i32_9 = arith.constant 0 : i32
    %12 = arith.cmpi ne, %11, %c0_i32_9 : i32
    scf.if %12 {
      %c0_10 = arith.constant 0 : index
      %c0_11 = arith.constant 0 : index
      %13 = vector.load %arg9[%c0_10, %c0_11] : memref<16x32xf32, #tpu.memory_space<vmem>>, vector<16x32xf32>
      %c0_12 = arith.constant 0 : index
      %c0_13 = arith.constant 0 : index
      %14 = vector.load %arg4[%c0_12, %c0_13] : memref<1x32xf32, #tpu.memory_space<vmem>>, vector<1x32xf32>
      %15 = vector.broadcast %14 : vector<1x32xf32> to vector<16x32xf32>
      %16 = arith.addf %13, %15 : vector<16x32xf32>
      %c0_14 = arith.constant 0 : index
      %c0_15 = arith.constant 0 : index
      %17 = vector.load %arg5[%c0_14, %c0_15] : memref<16x32xf32, #tpu.memory_space<vmem>>, vector<16x32xf32>
      %18 = arith.addf %16, %17 : vector<16x32xf32>
      %cst_16 = arith.constant dense<0.000000e+00> : vector<16xf32>
      %19 = vector.multi_reduction <add>, %18, %cst_16 [1] : vector<16x32xf32> to vector<16xf32>
      %20 = vector.shape_cast %19 : vector<16xf32> to vector<16x1xf32>
      %cst_17 = arith.constant 3.200000e+01 : f32
      %21 = vector.broadcast %cst_17 : f32 to vector<16x1xf32>
      %22 = arith.divf %20, %21 : vector<16x1xf32>
      %23 = vector.broadcast %22 : vector<16x1xf32> to vector<16x32xf32>
      %24 = arith.subf %18, %23 : vector<16x32xf32>
      %25 = arith.mulf %24, %24 : vector<16x32xf32>
      %cst_18 = arith.constant dense<0.000000e+00> : vector<16xf32>
      %26 = vector.multi_reduction <add>, %25, %cst_18 [1] : vector<16x32xf32> to vector<16xf32>
      %27 = vector.shape_cast %26 : vector<16xf32> to vector<16x1xf32>
      %cst_19 = arith.constant 3.200000e+01 : f32
      %28 = vector.broadcast %cst_19 : f32 to vector<16x1xf32>
      %29 = arith.divf %27, %28 : vector<16x1xf32>
      %cst_20 = arith.constant 9.99999974E-6 : f32
      %30 = vector.broadcast %cst_20 : f32 to vector<16x1xf32>
      %31 = arith.addf %29, %30 : vector<16x1xf32>
      %32 = math.rsqrt %31 : vector<16x1xf32>
      %33 = vector.broadcast %32 : vector<16x1xf32> to vector<16x32xf32>
      %34 = arith.mulf %24, %33 : vector<16x32xf32>
      %c0_21 = arith.constant 0 : index
      %c0_22 = arith.constant 0 : index
      %35 = vector.load %arg6[%c0_21, %c0_22] : memref<1x32xf32, #tpu.memory_space<vmem>>, vector<1x32xf32>
      %36 = vector.broadcast %35 : vector<1x32xf32> to vector<16x32xf32>
      %37 = arith.mulf %34, %36 : vector<16x32xf32>
      %c0_23 = arith.constant 0 : index
      %c0_24 = arith.constant 0 : index
      %38 = vector.load %arg7[%c0_23, %c0_24] : memref<1x32xf32, #tpu.memory_space<vmem>>, vector<1x32xf32>
      %39 = vector.broadcast %38 : vector<1x32xf32> to vector<16x32xf32>
      %40 = arith.addf %37, %39 : vector<16x32xf32>
      %c0_25 = arith.constant 0 : index
      %c0_26 = arith.constant 0 : index
      %41 = vector.load %arg8[%c0_25, %c0_26] : memref<16x32xf32, #tpu.memory_space<vmem>>, vector<16x32xf32>
      tpu.vector_store %arg8[%c0_25, %c0_26], %40 {strides = array<i32>} : memref<16x32xf32, #tpu.memory_space<vmem>>, vector<16x32xf32>,
    } else {
    }
    return
  }
  func.func @transform_0(%arg0: i32, %arg1: i32) -> (i32, i32) {
    %c0_i32 = arith.constant 0 : i32
    return %arg0, %arg1 : i32, i32
  }
  func.func @transform_1(%arg0: i32, %arg1: i32) -> (i32, i32) {
    %c0_i32 = arith.constant 0 : i32
    %c0_i32_0 = arith.constant 0 : i32
    return %arg1, %c0_i32 : i32, i32
  }
  func.func @transform_2(%arg0: i32, %arg1: i32) -> (i32, i32) {
    %c0_i32 = arith.constant 0 : i32
    %c0_i32_0 = arith.constant 0 : i32
    %c0_i32_1 = arith.constant 0 : i32
    return %c0_i32, %c0_i32_0 : i32, i32
  }
  func.func @transform_3(%arg0: i32, %arg1: i32) -> (i32, i32) {
    %c0_i32 = arith.constant 0 : i32
    %c0_i32_0 = arith.constant 0 : i32
    return %arg0, %c0_i32 : i32, i32
  }
  func.func @transform_4(%arg0: i32, %arg1: i32) -> (i32, i32) {
    %c0_i32 = arith.constant 0 : i32
    %c0_i32_0 = arith.constant 0 : i32
    %c0_i32_1 = arith.constant 0 : i32
    return %c0_i32, %c0_i32_0 : i32, i32
  }
  func.func @transform_5(%arg0: i32, %arg1: i32) -> (i32, i32) {
    %c0_i32 = arith.constant 0 : i32
    %c0_i32_0 = arith.constant 0 : i32
    %c0_i32_1 = arith.constant 0 : i32
    return %c0_i32, %c0_i32_0 : i32, i32
  }
  func.func @transform_6(%arg0: i32, %arg1: i32) -> (i32, i32) {
    %c0_i32 = arith.constant 0 : i32
    %c0_i32_0 = arith.constant 0 : i32
    return %arg0, %c0_i32 : i32, i32
  }
}

module attributes {stable_mosaic.version = 11 : i64} {
  func.func @_flash_attn_kernel(%arg0: i32, %arg1: i32, %arg2: i32, %arg3: memref<1x8x32xbf16, #tpu.memory_space<vmem>>, %arg4: memref<1x8x32xbf16, #tpu.memory_space<vmem>>, %arg5: memref<1x8x32xbf16, #tpu.memory_space<vmem>>, %arg6: memref<1x8x32xbf16, #tpu.memory_space<vmem>>, %arg7: memref<4x8x1xf32, #tpu.memory_space<vmem>>, %arg8: memref<4x8x1xf32, #tpu.memory_space<vmem>>, %arg9: memref<4x8x8xf32, #tpu.memory_space<vmem>>) attributes {dimension_semantics = [#tpu.dimension_semantics<parallel>, #tpu.dimension_semantics<parallel>, #tpu.dimension_semantics<arbitrary>], iteration_bounds = array<i64: 2, 1, 1>, scalar_prefetch = 0 : i64, scratch_operands = 3 : i64, tpu.core_type = #tpu.core_type<tc>, window_params = [{transform_indices = @transform_0, window_bounds = array<i64: 1, 8, 32>}, {transform_indices = @transform_1, window_bounds = array<i64: 1, 8, 32>}, {transform_indices = @transform_2, window_bounds = array<i64: 1, 8, 32>}, {transform_indices = @transform_3, window_bounds = array<i64: 1, 8, 32>}]} {
    %c0_i32 = arith.constant 0 : i32
    %0 = arith.cmpi eq, %arg2, %c0_i32 : i32
    %1 = arith.extui %0 : i1 to i32
    %c0_i32_0 = arith.constant 0 : i32
    %2 = arith.cmpi ne, %1, %c0_i32_0 : i32
    scf.if %2 {
      %cst_95 = arith.constant 0xFF800000 : f32
      %156 = vector.broadcast %cst_95 : f32 to vector<4x8x1xf32>
      %c0_96 = arith.constant 0 : index
      %c0_97 = arith.constant 0 : index
      %c0_98 = arith.constant 0 : index
      %157 = vector.load %arg7[%c0_96, %c0_97, %c0_98] : memref<4x8x1xf32, #tpu.memory_space<vmem>>, vector<4x8x1xf32>
      tpu.vector_store %arg7[%c0_96, %c0_97, %c0_98], %156 {strides = array<i32>} : memref<4x8x1xf32, #tpu.memory_space<vmem>>, vector<4x8x1xf32>,
      %cst_99 = arith.constant 0.000000e+00 : f32
      %158 = vector.broadcast %cst_99 : f32 to vector<4x8x1xf32>
      %c0_100 = arith.constant 0 : index
      %c0_101 = arith.constant 0 : index
      %c0_102 = arith.constant 0 : index
      %159 = vector.load %arg8[%c0_100, %c0_101, %c0_102] : memref<4x8x1xf32, #tpu.memory_space<vmem>>, vector<4x8x1xf32>
      tpu.vector_store %arg8[%c0_100, %c0_101, %c0_102], %158 {strides = array<i32>} : memref<4x8x1xf32, #tpu.memory_space<vmem>>, vector<4x8x1xf32>,
      %cst_103 = arith.constant 0.000000e+00 : f32
      %160 = vector.broadcast %cst_103 : f32 to vector<4x8x8xf32>
      %c0_104 = arith.constant 0 : index
      %c0_105 = arith.constant 0 : index
      %c0_106 = arith.constant 0 : index
      %161 = vector.load %arg9[%c0_104, %c0_105, %c0_106] : memref<4x8x8xf32, #tpu.memory_space<vmem>>, vector<4x8x8xf32>
      tpu.vector_store %arg9[%c0_104, %c0_105, %c0_106], %160 {strides = array<i32>} : memref<4x8x8xf32, #tpu.memory_space<vmem>>, vector<4x8x8xf32>,
    } else {
    }
    %c0 = arith.constant 0 : index
    %c0_1 = arith.constant 0 : index
    %c0_2 = arith.constant 0 : index
    %3 = vector.load %arg3[%c0, %c0_1, %c0_2] : memref<1x8x32xbf16, #tpu.memory_space<vmem>>, vector<1x8x32xbf16>
    %4 = vector.shape_cast %3 : vector<1x8x32xbf16> to vector<8x32xbf16>
    %c0_3 = arith.constant 0 : index
    %c0_4 = arith.constant 0 : index
    %c0_5 = arith.constant 0 : index
    %5 = vector.load %arg4[%c0_3, %c0_4, %c0_5] : memref<1x8x32xbf16, #tpu.memory_space<vmem>>, vector<1x8x32xbf16>
    %6 = vector.shape_cast %5 : vector<1x8x32xbf16> to vector<8x32xbf16>
    %c0_6 = arith.constant 0 : index
    %c0_7 = arith.constant 0 : index
    %c0_8 = arith.constant 0 : index
    %7 = vector.load %arg5[%c0_6, %c0_7, %c0_8] : memref<1x8x32xbf16, #tpu.memory_space<vmem>>, vector<1x8x32xbf16>
    %8 = vector.shape_cast %7 : vector<1x8x32xbf16> to vector<8x32xbf16>
    %9 = vector.extract_strided_slice %4 {offsets = [0, 0], sizes = [8, 8], strides = [1, 1]} : vector<8x32xbf16> to vector<8x8xbf16>
    %10 = vector.extract_strided_slice %6 {offsets = [0, 0], sizes = [8, 8], strides = [1, 1]} : vector<8x32xbf16> to vector<8x8xbf16>
    %cst = arith.constant dense<0.000000e+00> : vector<8x8xf32>
    %11 = tpu.matmul %9, %10, %cst {dimension_numbers = #tpu.dot_dimension_numbers<[1], [1], [0], [0], [0, 0, 1, 0], [], []>} : vector<8x8xbf16>, vector<8x8xbf16>, vector<8x8xf32> -> vector<8x8xf32>
    %c0_9 = arith.constant 0 : index
    %c0_10 = arith.constant 0 : index
    %c0_11 = arith.constant 0 : index
    %12 = vector.load %arg7[%c0_9, %c0_10, %c0_11] : memref<4x8x1xf32, #tpu.memory_space<vmem>>, vector<1x8x1xf32>
    %13 = vector.shape_cast %12 : vector<1x8x1xf32> to vector<8x1xf32>
    %cst_12 = arith.constant dense<0xFF800000> : vector<8xf32>
    %14 = vector.multi_reduction <maximumf>, %11, %cst_12 [1] : vector<8x8xf32> to vector<8xf32>
    %15 = vector.shape_cast %14 : vector<8xf32> to vector<8x1xf32>
    %16 = arith.maximumf %13, %15 : vector<8x1xf32>
    %17 = arith.subf %13, %16 : vector<8x1xf32>
    %18 = math.exp %17 : vector<8x1xf32>
    %19 = vector.broadcast %16 : vector<8x1xf32> to vector<8x8xf32>
    %20 = arith.subf %11, %19 : vector<8x8xf32>
    %21 = math.exp %20 : vector<8x8xf32>
    %c0_13 = arith.constant 0 : index
    %c0_14 = arith.constant 0 : index
    %c0_15 = arith.constant 0 : index
    %22 = vector.load %arg8[%c0_13, %c0_14, %c0_15] : memref<4x8x1xf32, #tpu.memory_space<vmem>>, vector<1x8x1xf32>
    %23 = vector.shape_cast %22 : vector<1x8x1xf32> to vector<8x1xf32>
    %24 = arith.mulf %18, %23 : vector<8x1xf32>
    %cst_16 = arith.constant dense<0.000000e+00> : vector<8xf32>
    %25 = vector.multi_reduction <add>, %21, %cst_16 [1] : vector<8x8xf32> to vector<8xf32>
    %26 = vector.shape_cast %25 : vector<8xf32> to vector<8x1xf32>
    %27 = arith.addf %24, %26 : vector<8x1xf32>
    %c0_17 = arith.constant 0 : index
    %c0_18 = arith.constant 0 : index
    %c0_19 = arith.constant 0 : index
    %28 = vector.load %arg8[%c0_17, %c0_18, %c0_19] : memref<4x8x1xf32, #tpu.memory_space<vmem>>, vector<1x8x1xf32>
    %29 = vector.shape_cast %28 : vector<1x8x1xf32> to vector<8x1xf32>
    %30 = vector.shape_cast %27 : vector<8x1xf32> to vector<1x8x1xf32>
    tpu.vector_store %arg8[%c0_17, %c0_18, %c0_19], %30 {strides = array<i32>} : memref<4x8x1xf32, #tpu.memory_space<vmem>>, vector<1x8x1xf32>,
    %c0_20 = arith.constant 0 : index
    %c0_21 = arith.constant 0 : index
    %c0_22 = arith.constant 0 : index
    %31 = vector.load %arg9[%c0_20, %c0_21, %c0_22] : memref<4x8x8xf32, #tpu.memory_space<vmem>>, vector<1x8x8xf32>
    %32 = vector.shape_cast %31 : vector<1x8x8xf32> to vector<8x8xf32>
    %33 = vector.broadcast %18 : vector<8x1xf32> to vector<8x8xf32>
    %34 = arith.mulf %33, %32 : vector<8x8xf32>
    %35 = arith.truncf %21 : vector<8x8xf32> to vector<8x8xbf16>
    %36 = vector.extract_strided_slice %8 {offsets = [0, 0], sizes = [8, 8], strides = [1, 1]} : vector<8x32xbf16> to vector<8x8xbf16>
    %cst_23 = arith.constant dense<0.000000e+00> : vector<8x8xf32>
    %37 = tpu.matmul %35, %36, %cst_23 {dimension_numbers = #tpu.dot_dimension_numbers<[1], [0], [0], [1], [0, 0, 1, 1], [], []>} : vector<8x8xbf16>, vector<8x8xbf16>, vector<8x8xf32> -> vector<8x8xf32>
    %38 = arith.addf %34, %37 : vector<8x8xf32>
    %c0_24 = arith.constant 0 : index
    %c0_25 = arith.constant 0 : index
    %c0_26 = arith.constant 0 : index
    %39 = vector.load %arg9[%c0_24, %c0_25, %c0_26] : memref<4x8x8xf32, #tpu.memory_space<vmem>>, vector<1x8x8xf32>
    %40 = vector.shape_cast %39 : vector<1x8x8xf32> to vector<8x8xf32>
    %41 = vector.shape_cast %38 : vector<8x8xf32> to vector<1x8x8xf32>
    tpu.vector_store %arg9[%c0_24, %c0_25, %c0_26], %41 {strides = array<i32>} : memref<4x8x8xf32, #tpu.memory_space<vmem>>, vector<1x8x8xf32>,
    %c0_27 = arith.constant 0 : index
    %c0_28 = arith.constant 0 : index
    %c0_29 = arith.constant 0 : index
    %42 = vector.load %arg7[%c0_27, %c0_28, %c0_29] : memref<4x8x1xf32, #tpu.memory_space<vmem>>, vector<1x8x1xf32>
    %43 = vector.shape_cast %42 : vector<1x8x1xf32> to vector<8x1xf32>
    %44 = vector.shape_cast %16 : vector<8x1xf32> to vector<1x8x1xf32>
    tpu.vector_store %arg7[%c0_27, %c0_28, %c0_29], %44 {strides = array<i32>} : memref<4x8x1xf32, #tpu.memory_space<vmem>>, vector<1x8x1xf32>,
    %45 = vector.extract_strided_slice %4 {offsets = [0, 8], sizes = [8, 8], strides = [1, 1]} : vector<8x32xbf16> to vector<8x8xbf16>
    %46 = vector.extract_strided_slice %6 {offsets = [0, 8], sizes = [8, 8], strides = [1, 1]} : vector<8x32xbf16> to vector<8x8xbf16>
    %cst_30 = arith.constant dense<0.000000e+00> : vector<8x8xf32>
    %47 = tpu.matmul %45, %46, %cst_30 {dimension_numbers = #tpu.dot_dimension_numbers<[1], [1], [0], [0], [0, 0, 1, 0], [], []>} : vector<8x8xbf16>, vector<8x8xbf16>, vector<8x8xf32> -> vector<8x8xf32>
    %c1 = arith.constant 1 : index
    %c0_31 = arith.constant 0 : index
    %c0_32 = arith.constant 0 : index
    %48 = vector.load %arg7[%c1, %c0_31, %c0_32] : memref<4x8x1xf32, #tpu.memory_space<vmem>>, vector<1x8x1xf32>
    %49 = vector.shape_cast %48 : vector<1x8x1xf32> to vector<8x1xf32>
    %cst_33 = arith.constant dense<0xFF800000> : vector<8xf32>
    %50 = vector.multi_reduction <maximumf>, %47, %cst_33 [1] : vector<8x8xf32> to vector<8xf32>
    %51 = vector.shape_cast %50 : vector<8xf32> to vector<8x1xf32>
    %52 = arith.maximumf %49, %51 : vector<8x1xf32>
    %53 = arith.subf %49, %52 : vector<8x1xf32>
    %54 = math.exp %53 : vector<8x1xf32>
    %55 = vector.broadcast %52 : vector<8x1xf32> to vector<8x8xf32>
    %56 = arith.subf %47, %55 : vector<8x8xf32>
    %57 = math.exp %56 : vector<8x8xf32>
    %c1_34 = arith.constant 1 : index
    %c0_35 = arith.constant 0 : index
    %c0_36 = arith.constant 0 : index
    %58 = vector.load %arg8[%c1_34, %c0_35, %c0_36] : memref<4x8x1xf32, #tpu.memory_space<vmem>>, vector<1x8x1xf32>
    %59 = vector.shape_cast %58 : vector<1x8x1xf32> to vector<8x1xf32>
    %60 = arith.mulf %54, %59 : vector<8x1xf32>
    %cst_37 = arith.constant dense<0.000000e+00> : vector<8xf32>
    %61 = vector.multi_reduction <add>, %57, %cst_37 [1] : vector<8x8xf32> to vector<8xf32>
    %62 = vector.shape_cast %61 : vector<8xf32> to vector<8x1xf32>
    %63 = arith.addf %60, %62 : vector<8x1xf32>
    %c1_38 = arith.constant 1 : index
    %c0_39 = arith.constant 0 : index
    %c0_40 = arith.constant 0 : index
    %64 = vector.load %arg8[%c1_38, %c0_39, %c0_40] : memref<4x8x1xf32, #tpu.memory_space<vmem>>, vector<1x8x1xf32>
    %65 = vector.shape_cast %64 : vector<1x8x1xf32> to vector<8x1xf32>
    %66 = vector.shape_cast %63 : vector<8x1xf32> to vector<1x8x1xf32>
    tpu.vector_store %arg8[%c1_38, %c0_39, %c0_40], %66 {strides = array<i32>} : memref<4x8x1xf32, #tpu.memory_space<vmem>>, vector<1x8x1xf32>,
    %c1_41 = arith.constant 1 : index
    %c0_42 = arith.constant 0 : index
    %c0_43 = arith.constant 0 : index
    %67 = vector.load %arg9[%c1_41, %c0_42, %c0_43] : memref<4x8x8xf32, #tpu.memory_space<vmem>>, vector<1x8x8xf32>
    %68 = vector.shape_cast %67 : vector<1x8x8xf32> to vector<8x8xf32>
    %69 = vector.broadcast %54 : vector<8x1xf32> to vector<8x8xf32>
    %70 = arith.mulf %69, %68 : vector<8x8xf32>
    %71 = arith.truncf %57 : vector<8x8xf32> to vector<8x8xbf16>
    %72 = vector.extract_strided_slice %8 {offsets = [0, 8], sizes = [8, 8], strides = [1, 1]} : vector<8x32xbf16> to vector<8x8xbf16>
    %cst_44 = arith.constant dense<0.000000e+00> : vector<8x8xf32>
    %73 = tpu.matmul %71, %72, %cst_44 {dimension_numbers = #tpu.dot_dimension_numbers<[1], [0], [0], [1], [0, 0, 1, 1], [], []>} : vector<8x8xbf16>, vector<8x8xbf16>, vector<8x8xf32> -> vector<8x8xf32>
    %74 = arith.addf %70, %73 : vector<8x8xf32>
    %c1_45 = arith.constant 1 : index
    %c0_46 = arith.constant 0 : index
    %c0_47 = arith.constant 0 : index
    %75 = vector.load %arg9[%c1_45, %c0_46, %c0_47] : memref<4x8x8xf32, #tpu.memory_space<vmem>>, vector<1x8x8xf32>
    %76 = vector.shape_cast %75 : vector<1x8x8xf32> to vector<8x8xf32>
    %77 = vector.shape_cast %74 : vector<8x8xf32> to vector<1x8x8xf32>
    tpu.vector_store %arg9[%c1_45, %c0_46, %c0_47], %77 {strides = array<i32>} : memref<4x8x8xf32, #tpu.memory_space<vmem>>, vector<1x8x8xf32>,
    %c1_48 = arith.constant 1 : index
    %c0_49 = arith.constant 0 : index
    %c0_50 = arith.constant 0 : index
    %78 = vector.load %arg7[%c1_48, %c0_49, %c0_50] : memref<4x8x1xf32, #tpu.memory_space<vmem>>, vector<1x8x1xf32>
    %79 = vector.shape_cast %78 : vector<1x8x1xf32> to vector<8x1xf32>
    %80 = vector.shape_cast %52 : vector<8x1xf32> to vector<1x8x1xf32>
    tpu.vector_store %arg7[%c1_48, %c0_49, %c0_50], %80 {strides = array<i32>} : memref<4x8x1xf32, #tpu.memory_space<vmem>>, vector<1x8x1xf32>,
    %81 = vector.extract_strided_slice %4 {offsets = [0, 16], sizes = [8, 8], strides = [1, 1]} : vector<8x32xbf16> to vector<8x8xbf16>
    %82 = vector.extract_strided_slice %6 {offsets = [0, 16], sizes = [8, 8], strides = [1, 1]} : vector<8x32xbf16> to vector<8x8xbf16>
    %cst_51 = arith.constant dense<0.000000e+00> : vector<8x8xf32>
    %83 = tpu.matmul %81, %82, %cst_51 {dimension_numbers = #tpu.dot_dimension_numbers<[1], [1], [0], [0], [0, 0, 1, 0], [], []>} : vector<8x8xbf16>, vector<8x8xbf16>, vector<8x8xf32> -> vector<8x8xf32>
    %c2 = arith.constant 2 : index
    %c0_52 = arith.constant 0 : index
    %c0_53 = arith.constant 0 : index
    %84 = vector.load %arg7[%c2, %c0_52, %c0_53] : memref<4x8x1xf32, #tpu.memory_space<vmem>>, vector<1x8x1xf32>
    %85 = vector.shape_cast %84 : vector<1x8x1xf32> to vector<8x1xf32>
    %cst_54 = arith.constant dense<0xFF800000> : vector<8xf32>
    %86 = vector.multi_reduction <maximumf>, %83, %cst_54 [1] : vector<8x8xf32> to vector<8xf32>
    %87 = vector.shape_cast %86 : vector<8xf32> to vector<8x1xf32>
    %88 = arith.maximumf %85, %87 : vector<8x1xf32>
    %89 = arith.subf %85, %88 : vector<8x1xf32>
    %90 = math.exp %89 : vector<8x1xf32>
    %91 = vector.broadcast %88 : vector<8x1xf32> to vector<8x8xf32>
    %92 = arith.subf %83, %91 : vector<8x8xf32>
    %93 = math.exp %92 : vector<8x8xf32>
    %c2_55 = arith.constant 2 : index
    %c0_56 = arith.constant 0 : index
    %c0_57 = arith.constant 0 : index
    %94 = vector.load %arg8[%c2_55, %c0_56, %c0_57] : memref<4x8x1xf32, #tpu.memory_space<vmem>>, vector<1x8x1xf32>
    %95 = vector.shape_cast %94 : vector<1x8x1xf32> to vector<8x1xf32>
    %96 = arith.mulf %90, %95 : vector<8x1xf32>
    %cst_58 = arith.constant dense<0.000000e+00> : vector<8xf32>
    %97 = vector.multi_reduction <add>, %93, %cst_58 [1] : vector<8x8xf32> to vector<8xf32>
    %98 = vector.shape_cast %97 : vector<8xf32> to vector<8x1xf32>
    %99 = arith.addf %96, %98 : vector<8x1xf32>
    %c2_59 = arith.constant 2 : index
    %c0_60 = arith.constant 0 : index
    %c0_61 = arith.constant 0 : index
    %100 = vector.load %arg8[%c2_59, %c0_60, %c0_61] : memref<4x8x1xf32, #tpu.memory_space<vmem>>, vector<1x8x1xf32>
    %101 = vector.shape_cast %100 : vector<1x8x1xf32> to vector<8x1xf32>
    %102 = vector.shape_cast %99 : vector<8x1xf32> to vector<1x8x1xf32>
    tpu.vector_store %arg8[%c2_59, %c0_60, %c0_61], %102 {strides = array<i32>} : memref<4x8x1xf32, #tpu.memory_space<vmem>>, vector<1x8x1xf32>,
    %c2_62 = arith.constant 2 : index
    %c0_63 = arith.constant 0 : index
    %c0_64 = arith.constant 0 : index
    %103 = vector.load %arg9[%c2_62, %c0_63, %c0_64] : memref<4x8x8xf32, #tpu.memory_space<vmem>>, vector<1x8x8xf32>
    %104 = vector.shape_cast %103 : vector<1x8x8xf32> to vector<8x8xf32>
    %105 = vector.broadcast %90 : vector<8x1xf32> to vector<8x8xf32>
    %106 = arith.mulf %105, %104 : vector<8x8xf32>
    %107 = arith.truncf %93 : vector<8x8xf32> to vector<8x8xbf16>
    %108 = vector.extract_strided_slice %8 {offsets = [0, 16], sizes = [8, 8], strides = [1, 1]} : vector<8x32xbf16> to vector<8x8xbf16>
    %cst_65 = arith.constant dense<0.000000e+00> : vector<8x8xf32>
    %109 = tpu.matmul %107, %108, %cst_65 {dimension_numbers = #tpu.dot_dimension_numbers<[1], [0], [0], [1], [0, 0, 1, 1], [], []>} : vector<8x8xbf16>, vector<8x8xbf16>, vector<8x8xf32> -> vector<8x8xf32>
    %110 = arith.addf %106, %109 : vector<8x8xf32>
    %c2_66 = arith.constant 2 : index
    %c0_67 = arith.constant 0 : index
    %c0_68 = arith.constant 0 : index
    %111 = vector.load %arg9[%c2_66, %c0_67, %c0_68] : memref<4x8x8xf32, #tpu.memory_space<vmem>>, vector<1x8x8xf32>
    %112 = vector.shape_cast %111 : vector<1x8x8xf32> to vector<8x8xf32>
    %113 = vector.shape_cast %110 : vector<8x8xf32> to vector<1x8x8xf32>
    tpu.vector_store %arg9[%c2_66, %c0_67, %c0_68], %113 {strides = array<i32>} : memref<4x8x8xf32, #tpu.memory_space<vmem>>, vector<1x8x8xf32>,
    %c2_69 = arith.constant 2 : index
    %c0_70 = arith.constant 0 : index
    %c0_71 = arith.constant 0 : index
    %114 = vector.load %arg7[%c2_69, %c0_70, %c0_71] : memref<4x8x1xf32, #tpu.memory_space<vmem>>, vector<1x8x1xf32>
    %115 = vector.shape_cast %114 : vector<1x8x1xf32> to vector<8x1xf32>
    %116 = vector.shape_cast %88 : vector<8x1xf32> to vector<1x8x1xf32>
    tpu.vector_store %arg7[%c2_69, %c0_70, %c0_71], %116 {strides = array<i32>} : memref<4x8x1xf32, #tpu.memory_space<vmem>>, vector<1x8x1xf32>,
    %117 = vector.extract_strided_slice %4 {offsets = [0, 24], sizes = [8, 8], strides = [1, 1]} : vector<8x32xbf16> to vector<8x8xbf16>
    %118 = vector.extract_strided_slice %6 {offsets = [0, 24], sizes = [8, 8], strides = [1, 1]} : vector<8x32xbf16> to vector<8x8xbf16>
    %cst_72 = arith.constant dense<0.000000e+00> : vector<8x8xf32>
    %119 = tpu.matmul %117, %118, %cst_72 {dimension_numbers = #tpu.dot_dimension_numbers<[1], [1], [0], [0], [0, 0, 1, 0], [], []>} : vector<8x8xbf16>, vector<8x8xbf16>, vector<8x8xf32> -> vector<8x8xf32>
    %c3 = arith.constant 3 : index
    %c0_73 = arith.constant 0 : index
    %c0_74 = arith.constant 0 : index
    %120 = vector.load %arg7[%c3, %c0_73, %c0_74] : memref<4x8x1xf32, #tpu.memory_space<vmem>>, vector<1x8x1xf32>
    %121 = vector.shape_cast %120 : vector<1x8x1xf32> to vector<8x1xf32>
    %cst_75 = arith.constant dense<0xFF800000> : vector<8xf32>
    %122 = vector.multi_reduction <maximumf>, %119, %cst_75 [1] : vector<8x8xf32> to vector<8xf32>
    %123 = vector.shape_cast %122 : vector<8xf32> to vector<8x1xf32>
    %124 = arith.maximumf %121, %123 : vector<8x1xf32>
    %125 = arith.subf %121, %124 : vector<8x1xf32>
    %126 = math.exp %125 : vector<8x1xf32>
    %127 = vector.broadcast %124 : vector<8x1xf32> to vector<8x8xf32>
    %128 = arith.subf %119, %127 : vector<8x8xf32>
    %129 = math.exp %128 : vector<8x8xf32>
    %c3_76 = arith.constant 3 : index
    %c0_77 = arith.constant 0 : index
    %c0_78 = arith.constant 0 : index
    %130 = vector.load %arg8[%c3_76, %c0_77, %c0_78] : memref<4x8x1xf32, #tpu.memory_space<vmem>>, vector<1x8x1xf32>
    %131 = vector.shape_cast %130 : vector<1x8x1xf32> to vector<8x1xf32>
    %132 = arith.mulf %126, %131 : vector<8x1xf32>
    %cst_79 = arith.constant dense<0.000000e+00> : vector<8xf32>
    %133 = vector.multi_reduction <add>, %129, %cst_79 [1] : vector<8x8xf32> to vector<8xf32>
    %134 = vector.shape_cast %133 : vector<8xf32> to vector<8x1xf32>
    %135 = arith.addf %132, %134 : vector<8x1xf32>
    %c3_80 = arith.constant 3 : index
    %c0_81 = arith.constant 0 : index
    %c0_82 = arith.constant 0 : index
    %136 = vector.load %arg8[%c3_80, %c0_81, %c0_82] : memref<4x8x1xf32, #tpu.memory_space<vmem>>, vector<1x8x1xf32>
    %137 = vector.shape_cast %136 : vector<1x8x1xf32> to vector<8x1xf32>
    %138 = vector.shape_cast %135 : vector<8x1xf32> to vector<1x8x1xf32>
    tpu.vector_store %arg8[%c3_80, %c0_81, %c0_82], %138 {strides = array<i32>} : memref<4x8x1xf32, #tpu.memory_space<vmem>>, vector<1x8x1xf32>,
    %c3_83 = arith.constant 3 : index
    %c0_84 = arith.constant 0 : index
    %c0_85 = arith.constant 0 : index
    %139 = vector.load %arg9[%c3_83, %c0_84, %c0_85] : memref<4x8x8xf32, #tpu.memory_space<vmem>>, vector<1x8x8xf32>
    %140 = vector.shape_cast %139 : vector<1x8x8xf32> to vector<8x8xf32>
    %141 = vector.broadcast %126 : vector<8x1xf32> to vector<8x8xf32>
    %142 = arith.mulf %141, %140 : vector<8x8xf32>
    %143 = arith.truncf %129 : vector<8x8xf32> to vector<8x8xbf16>
    %144 = vector.extract_strided_slice %8 {offsets = [0, 24], sizes = [8, 8], strides = [1, 1]} : vector<8x32xbf16> to vector<8x8xbf16>
    %cst_86 = arith.constant dense<0.000000e+00> : vector<8x8xf32>
    %145 = tpu.matmul %143, %144, %cst_86 {dimension_numbers = #tpu.dot_dimension_numbers<[1], [0], [0], [1], [0, 0, 1, 1], [], []>} : vector<8x8xbf16>, vector<8x8xbf16>, vector<8x8xf32> -> vector<8x8xf32>
    %146 = arith.addf %142, %145 : vector<8x8xf32>
    %c3_87 = arith.constant 3 : index
    %c0_88 = arith.constant 0 : index
    %c0_89 = arith.constant 0 : index
    %147 = vector.load %arg9[%c3_87, %c0_88, %c0_89] : memref<4x8x8xf32, #tpu.memory_space<vmem>>, vector<1x8x8xf32>
    %148 = vector.shape_cast %147 : vector<1x8x8xf32> to vector<8x8xf32>
    %149 = vector.shape_cast %146 : vector<8x8xf32> to vector<1x8x8xf32>
    tpu.vector_store %arg9[%c3_87, %c0_88, %c0_89], %149 {strides = array<i32>} : memref<4x8x8xf32, #tpu.memory_space<vmem>>, vector<1x8x8xf32>,
    %c3_90 = arith.constant 3 : index
    %c0_91 = arith.constant 0 : index
    %c0_92 = arith.constant 0 : index
    %150 = vector.load %arg7[%c3_90, %c0_91, %c0_92] : memref<4x8x1xf32, #tpu.memory_space<vmem>>, vector<1x8x1xf32>
    %151 = vector.shape_cast %150 : vector<1x8x1xf32> to vector<8x1xf32>
    %152 = vector.shape_cast %124 : vector<8x1xf32> to vector<1x8x1xf32>
    tpu.vector_store %arg7[%c3_90, %c0_91, %c0_92], %152 {strides = array<i32>} : memref<4x8x1xf32, #tpu.memory_space<vmem>>, vector<1x8x1xf32>,
    %c0_i32_93 = arith.constant 0 : i32
    %153 = arith.cmpi eq, %arg2, %c0_i32_93 : i32
    %154 = arith.extui %153 : i1 to i32
    %c0_i32_94 = arith.constant 0 : i32
    %155 = arith.cmpi ne, %154, %c0_i32_94 : i32
    scf.if %155 {
      %c0_95 = arith.constant 0 : index
      %c0_96 = arith.constant 0 : index
      %c0_97 = arith.constant 0 : index
      %156 = vector.load %arg9[%c0_95, %c0_96, %c0_97] : memref<4x8x8xf32, #tpu.memory_space<vmem>>, vector<1x8x8xf32>
      %157 = vector.shape_cast %156 : vector<1x8x8xf32> to vector<8x8xf32>
      %c0_98 = arith.constant 0 : index
      %c0_99 = arith.constant 0 : index
      %c0_100 = arith.constant 0 : index
      %158 = vector.load %arg8[%c0_98, %c0_99, %c0_100] : memref<4x8x1xf32, #tpu.memory_space<vmem>>, vector<1x8x1xf32>
      %159 = vector.shape_cast %158 : vector<1x8x1xf32> to vector<8x1xf32>
      %160 = vector.broadcast %159 : vector<8x1xf32> to vector<8x8xf32>
      %161 = arith.divf %157, %160 : vector<8x8xf32>
      %162 = arith.truncf %161 : vector<8x8xf32> to vector<8x8xbf16>
      %c0_101 = arith.constant 0 : index
      %c0_102 = arith.constant 0 : index
      %c0_103 = arith.constant 0 : index
      %163 = vector.load %arg6[%c0_101, %c0_102, %c0_103] : memref<1x8x32xbf16, #tpu.memory_space<vmem>>, vector<1x8x8xbf16>
      %164 = vector.shape_cast %163 : vector<1x8x8xbf16> to vector<8x8xbf16>
      %165 = vector.shape_cast %162 : vector<8x8xbf16> to vector<1x8x8xbf16>
      tpu.vector_store %arg6[%c0_101, %c0_102, %c0_103], %165 {strides = array<i32>} : memref<1x8x32xbf16, #tpu.memory_space<vmem>>, vector<1x8x8xbf16>,
      %c1_104 = arith.constant 1 : index
      %c0_105 = arith.constant 0 : index
      %c0_106 = arith.constant 0 : index
      %166 = vector.load %arg9[%c1_104, %c0_105, %c0_106] : memref<4x8x8xf32, #tpu.memory_space<vmem>>, vector<1x8x8xf32>
      %167 = vector.shape_cast %166 : vector<1x8x8xf32> to vector<8x8xf32>
      %c1_107 = arith.constant 1 : index
      %c0_108 = arith.constant 0 : index
      %c0_109 = arith.constant 0 : index
      %168 = vector.load %arg8[%c1_107, %c0_108, %c0_109] : memref<4x8x1xf32, #tpu.memory_space<vmem>>, vector<1x8x1xf32>
      %169 = vector.shape_cast %168 : vector<1x8x1xf32> to vector<8x1xf32>
      %170 = vector.broadcast %169 : vector<8x1xf32> to vector<8x8xf32>
      %171 = arith.divf %167, %170 : vector<8x8xf32>
      %172 = arith.truncf %171 : vector<8x8xf32> to vector<8x8xbf16>
      %c0_110 = arith.constant 0 : index
      %c0_111 = arith.constant 0 : index
      %c8 = arith.constant 8 : index
      %173 = vector.load %arg6[%c0_110, %c0_111, %c8] : memref<1x8x32xbf16, #tpu.memory_space<vmem>>, vector<1x8x8xbf16>
      %174 = vector.shape_cast %173 : vector<1x8x8xbf16> to vector<8x8xbf16>
      %175 = vector.shape_cast %172 : vector<8x8xbf16> to vector<1x8x8xbf16>
      tpu.vector_store %arg6[%c0_110, %c0_111, %c8], %175 {strides = array<i32>} : memref<1x8x32xbf16, #tpu.memory_space<vmem>>, vector<1x8x8xbf16>,
      %c2_112 = arith.constant 2 : index
      %c0_113 = arith.constant 0 : index
      %c0_114 = arith.constant 0 : index
      %176 = vector.load %arg9[%c2_112, %c0_113, %c0_114] : memref<4x8x8xf32, #tpu.memory_space<vmem>>, vector<1x8x8xf32>
      %177 = vector.shape_cast %176 : vector<1x8x8xf32> to vector<8x8xf32>
      %c2_115 = arith.constant 2 : index
      %c0_116 = arith.constant 0 : index
      %c0_117 = arith.constant 0 : index
      %178 = vector.load %arg8[%c2_115, %c0_116, %c0_117] : memref<4x8x1xf32, #tpu.memory_space<vmem>>, vector<1x8x1xf32>
      %179 = vector.shape_cast %178 : vector<1x8x1xf32> to vector<8x1xf32>
      %180 = vector.broadcast %179 : vector<8x1xf32> to vector<8x8xf32>
      %181 = arith.divf %177, %180 : vector<8x8xf32>
      %182 = arith.truncf %181 : vector<8x8xf32> to vector<8x8xbf16>
      %c0_118 = arith.constant 0 : index
      %c0_119 = arith.constant 0 : index
      %c16 = arith.constant 16 : index
      %183 = vector.load %arg6[%c0_118, %c0_119, %c16] : memref<1x8x32xbf16, #tpu.memory_space<vmem>>, vector<1x8x8xbf16>
      %184 = vector.shape_cast %183 : vector<1x8x8xbf16> to vector<8x8xbf16>
      %185 = vector.shape_cast %182 : vector<8x8xbf16> to vector<1x8x8xbf16>
      tpu.vector_store %arg6[%c0_118, %c0_119, %c16], %185 {strides = array<i32>} : memref<1x8x32xbf16, #tpu.memory_space<vmem>>, vector<1x8x8xbf16>,
      %c3_120 = arith.constant 3 : index
      %c0_121 = arith.constant 0 : index
      %c0_122 = arith.constant 0 : index
      %186 = vector.load %arg9[%c3_120, %c0_121, %c0_122] : memref<4x8x8xf32, #tpu.memory_space<vmem>>, vector<1x8x8xf32>
      %187 = vector.shape_cast %186 : vector<1x8x8xf32> to vector<8x8xf32>
      %c3_123 = arith.constant 3 : index
      %c0_124 = arith.constant 0 : index
      %c0_125 = arith.constant 0 : index
      %188 = vector.load %arg8[%c3_123, %c0_124, %c0_125] : memref<4x8x1xf32, #tpu.memory_space<vmem>>, vector<1x8x1xf32>
      %189 = vector.shape_cast %188 : vector<1x8x1xf32> to vector<8x1xf32>
      %190 = vector.broadcast %189 : vector<8x1xf32> to vector<8x8xf32>
      %191 = arith.divf %187, %190 : vector<8x8xf32>
      %192 = arith.truncf %191 : vector<8x8xf32> to vector<8x8xbf16>
      %c0_126 = arith.constant 0 : index
      %c0_127 = arith.constant 0 : index
      %c24 = arith.constant 24 : index
      %193 = vector.load %arg6[%c0_126, %c0_127, %c24] : memref<1x8x32xbf16, #tpu.memory_space<vmem>>, vector<1x8x8xbf16>
      %194 = vector.shape_cast %193 : vector<1x8x8xbf16> to vector<8x8xbf16>
      %195 = vector.shape_cast %192 : vector<8x8xbf16> to vector<1x8x8xbf16>
      tpu.vector_store %arg6[%c0_126, %c0_127, %c24], %195 {strides = array<i32>} : memref<1x8x32xbf16, #tpu.memory_space<vmem>>, vector<1x8x8xbf16>,
    } else {
    }
    return
  }
  func.func @transform_0(%arg0: i32, %arg1: i32, %arg2: i32) -> (i32, i32, i32) {
    %c0_i32 = arith.constant 0 : i32
    %c0_i32_0 = arith.constant 0 : i32
    return %arg0, %arg1, %c0_i32 : i32, i32, i32
  }
  func.func @transform_1(%arg0: i32, %arg1: i32, %arg2: i32) -> (i32, i32, i32) {
    %c0_i32 = arith.constant 0 : i32
    %c0_i32_0 = arith.constant 0 : i32
    return %arg0, %arg2, %c0_i32 : i32, i32, i32
  }
  func.func @transform_2(%arg0: i32, %arg1: i32, %arg2: i32) -> (i32, i32, i32) {
    %c0_i32 = arith.constant 0 : i32
    %c0_i32_0 = arith.constant 0 : i32
    return %arg0, %arg2, %c0_i32 : i32, i32, i32
  }
  func.func @transform_3(%arg0: i32, %arg1: i32, %arg2: i32) -> (i32, i32, i32) {
    %c0_i32 = arith.constant 0 : i32
    %c0_i32_0 = arith.constant 0 : i32
    return %arg0, %arg1, %c0_i32 : i32, i32, i32
  }
}

module attributes {stable_mosaic.version = 11 : i64} {
  func.func @_matmul_bias_kernel(%arg0: i32, %arg1: i32, %arg2: i32, %arg3: memref<16x32xf32, #tpu.memory_space<vmem>>, %arg4: memref<32x32xf32, #tpu.memory_space<vmem>>, %arg5: memref<1x32xf32, #tpu.memory_space<vmem>>, %arg6: memref<16x32xbf16, #tpu.memory_space<vmem>>, %arg7: memref<16x32xf32, #tpu.memory_space<vmem>>) attributes {dimension_semantics = [#tpu.dimension_semantics<parallel>, #tpu.dimension_semantics<parallel>, #tpu.dimension_semantics<arbitrary>], iteration_bounds = array<i64: 1, 1, 1>, scalar_prefetch = 0 : i64, scratch_operands = 1 : i64, tpu.core_type = #tpu.core_type<tc>, window_params = [{transform_indices = @transform_0, window_bounds = array<i64: 16, 32>}, {transform_indices = @transform_1, window_bounds = array<i64: 32, 32>}, {transform_indices = @transform_2, window_bounds = array<i64: 1, 32>}, {transform_indices = @transform_3, window_bounds = array<i64: 16, 32>}]} {
    %c0_i32 = arith.constant 0 : i32
    %0 = arith.cmpi eq, %arg2, %c0_i32 : i32
    %1 = arith.extui %0 : i1 to i32
    %c0_i32_0 = arith.constant 0 : i32
    %2 = arith.cmpi ne, %1, %c0_i32_0 : i32
    scf.if %2 {
      %cst_10 = arith.constant 0.000000e+00 : f32
      %14 = vector.broadcast %cst_10 : f32 to vector<16x32xf32>
      %c0_11 = arith.constant 0 : index
      %c0_12 = arith.constant 0 : index
      %15 = vector.load %arg7[%c0_11, %c0_12] : memref<16x32xf32, #tpu.memory_space<vmem>>, vector<16x32xf32>
      tpu.vector_store %arg7[%c0_11, %c0_12], %14 {strides = array<i32>} : memref<16x32xf32, #tpu.memory_space<vmem>>, vector<16x32xf32>,
    } else {
    }
    %c0 = arith.constant 0 : index
    %c0_1 = arith.constant 0 : index
    %3 = vector.load %arg7[%c0, %c0_1] : memref<16x32xf32, #tpu.memory_space<vmem>>, vector<16x32xf32>
    %c0_2 = arith.constant 0 : index
    %c0_3 = arith.constant 0 : index
    %4 = vector.load %arg3[%c0_2, %c0_3] : memref<16x32xf32, #tpu.memory_space<vmem>>, vector<16x32xf32>
    %5 = arith.truncf %4 : vector<16x32xf32> to vector<16x32xbf16>
    %c0_4 = arith.constant 0 : index
    %c0_5 = arith.constant 0 : index
    %6 = vector.load %arg4[%c0_4, %c0_5] : memref<32x32xf32, #tpu.memory_space<vmem>>, vector<32x32xf32>
    %7 = arith.truncf %6 : vector<32x32xf32> to vector<32x32xbf16>
    %cst = arith.constant dense<0.000000e+00> : vector<16x32xf32>
    %8 = tpu.matmul %5, %7, %cst {dimension_numbers = #tpu.dot_dimension_numbers<[1], [0], [0], [1], [0, 0, 1, 1], [], []>} : vector<16x32xbf16>, vector<32x32xbf16>, vector<16x32xf32> -> vector<16x32xf32>
    %9 = arith.addf %3, %8 : vector<16x32xf32>
    %c0_6 = arith.constant 0 : index
    %c0_7 = arith.constant 0 : index
    %10 = vector.load %arg7[%c0_6, %c0_7] : memref<16x32xf32, #tpu.memory_space<vmem>>, vector<16x32xf32>
    tpu.vector_store %arg7[%c0_6, %c0_7], %9 {strides = array<i32>} : memref<16x32xf32, #tpu.memory_space<vmem>>, vector<16x32xf32>,
    %c0_i32_8 = arith.constant 0 : i32
    %11 = arith.cmpi eq, %arg2, %c0_i32_8 : i32
    %12 = arith.extui %11 : i1 to i32
    %c0_i32_9 = arith.constant 0 : i32
    %13 = arith.cmpi ne, %12, %c0_i32_9 : i32
    scf.if %13 {
      %c0_10 = arith.constant 0 : index
      %c0_11 = arith.constant 0 : index
      %14 = vector.load %arg7[%c0_10, %c0_11] : memref<16x32xf32, #tpu.memory_space<vmem>>, vector<16x32xf32>
      %c0_12 = arith.constant 0 : index
      %c0_13 = arith.constant 0 : index
      %15 = vector.load %arg5[%c0_12, %c0_13] : memref<1x32xf32, #tpu.memory_space<vmem>>, vector<1x32xf32>
      %16 = vector.broadcast %15 : vector<1x32xf32> to vector<16x32xf32>
      %17 = arith.addf %14, %16 : vector<16x32xf32>
      %18 = arith.truncf %17 : vector<16x32xf32> to vector<16x32xbf16>
      %c0_14 = arith.constant 0 : index
      %c0_15 = arith.constant 0 : index
      %19 = vector.load %arg6[%c0_14, %c0_15] : memref<16x32xbf16, #tpu.memory_space<vmem>>, vector<16x32xbf16>
      tpu.vector_store %arg6[%c0_14, %c0_15], %18 {strides = array<i32>} : memref<16x32xbf16, #tpu.memory_space<vmem>>, vector<16x32xbf16>,
    } else {
    }
    return
  }
  func.func @transform_0(%arg0: i32, %arg1: i32, %arg2: i32) -> (i32, i32) {
    %c0_i32 = arith.constant 0 : i32
    return %arg0, %arg2 : i32, i32
  }
  func.func @transform_1(%arg0: i32, %arg1: i32, %arg2: i32) -> (i32, i32) {
    %c0_i32 = arith.constant 0 : i32
    return %arg2, %arg1 : i32, i32
  }
  func.func @transform_2(%arg0: i32, %arg1: i32, %arg2: i32) -> (i32, i32) {
    %c0_i32 = arith.constant 0 : i32
    %c0_i32_0 = arith.constant 0 : i32
    return %c0_i32, %arg1 : i32, i32
  }
  func.func @transform_3(%arg0: i32, %arg1: i32, %arg2: i32) -> (i32, i32) {
    %c0_i32 = arith.constant 0 : i32
    return %arg0, %arg1 : i32, i32
  }
}

module attributes {stable_mosaic.version = 11 : i64} {
  func.func @_matmul_bias_kernel(%arg0: i32, %arg1: i32, %arg2: i32, %arg3: memref<16x32xf32, #tpu.memory_space<vmem>>, %arg4: memref<32x4xf32, #tpu.memory_space<vmem>>, %arg5: memref<1x4xf32, #tpu.memory_space<vmem>>, %arg6: memref<16x4xf32, #tpu.memory_space<vmem>>, %arg7: memref<16x4xf32, #tpu.memory_space<vmem>>) attributes {dimension_semantics = [#tpu.dimension_semantics<parallel>, #tpu.dimension_semantics<parallel>, #tpu.dimension_semantics<arbitrary>], iteration_bounds = array<i64: 1, 1, 1>, scalar_prefetch = 0 : i64, scratch_operands = 1 : i64, tpu.core_type = #tpu.core_type<tc>, window_params = [{transform_indices = @transform_0, window_bounds = array<i64: 16, 32>}, {transform_indices = @transform_1, window_bounds = array<i64: 32, 4>}, {transform_indices = @transform_2, window_bounds = array<i64: 1, 4>}, {transform_indices = @transform_3, window_bounds = array<i64: 16, 4>}]} {
    %c0_i32 = arith.constant 0 : i32
    %0 = arith.cmpi eq, %arg2, %c0_i32 : i32
    %1 = arith.extui %0 : i1 to i32
    %c0_i32_0 = arith.constant 0 : i32
    %2 = arith.cmpi ne, %1, %c0_i32_0 : i32
    scf.if %2 {
      %cst_10 = arith.constant 0.000000e+00 : f32
      %14 = vector.broadcast %cst_10 : f32 to vector<16x4xf32>
      %c0_11 = arith.constant 0 : index
      %c0_12 = arith.constant 0 : index
      %15 = vector.load %arg7[%c0_11, %c0_12] : memref<16x4xf32, #tpu.memory_space<vmem>>, vector<16x4xf32>
      tpu.vector_store %arg7[%c0_11, %c0_12], %14 {strides = array<i32>} : memref<16x4xf32, #tpu.memory_space<vmem>>, vector<16x4xf32>,
    } else {
    }
    %c0 = arith.constant 0 : index
    %c0_1 = arith.constant 0 : index
    %3 = vector.load %arg7[%c0, %c0_1] : memref<16x4xf32, #tpu.memory_space<vmem>>, vector<16x4xf32>
    %c0_2 = arith.constant 0 : index
    %c0_3 = arith.constant 0 : index
    %4 = vector.load %arg3[%c0_2, %c0_3] : memref<16x32xf32, #tpu.memory_space<vmem>>, vector<16x32xf32>
    %5 = arith.truncf %4 : vector<16x32xf32> to vector<16x32xbf16>
    %c0_4 = arith.constant 0 : index
    %c0_5 = arith.constant 0 : index
    %6 = vector.load %arg4[%c0_4, %c0_5] : memref<32x4xf32, #tpu.memory_space<vmem>>, vector<32x4xf32>
    %7 = arith.truncf %6 : vector<32x4xf32> to vector<32x4xbf16>
    %cst = arith.constant dense<0.000000e+00> : vector<16x4xf32>
    %8 = tpu.matmul %5, %7, %cst {dimension_numbers = #tpu.dot_dimension_numbers<[1], [0], [0], [1], [0, 0, 1, 1], [], []>} : vector<16x32xbf16>, vector<32x4xbf16>, vector<16x4xf32> -> vector<16x4xf32>
    %9 = arith.addf %3, %8 : vector<16x4xf32>
    %c0_6 = arith.constant 0 : index
    %c0_7 = arith.constant 0 : index
    %10 = vector.load %arg7[%c0_6, %c0_7] : memref<16x4xf32, #tpu.memory_space<vmem>>, vector<16x4xf32>
    tpu.vector_store %arg7[%c0_6, %c0_7], %9 {strides = array<i32>} : memref<16x4xf32, #tpu.memory_space<vmem>>, vector<16x4xf32>,
    %c0_i32_8 = arith.constant 0 : i32
    %11 = arith.cmpi eq, %arg2, %c0_i32_8 : i32
    %12 = arith.extui %11 : i1 to i32
    %c0_i32_9 = arith.constant 0 : i32
    %13 = arith.cmpi ne, %12, %c0_i32_9 : i32
    scf.if %13 {
      %c0_10 = arith.constant 0 : index
      %c0_11 = arith.constant 0 : index
      %14 = vector.load %arg7[%c0_10, %c0_11] : memref<16x4xf32, #tpu.memory_space<vmem>>, vector<16x4xf32>
      %c0_12 = arith.constant 0 : index
      %c0_13 = arith.constant 0 : index
      %15 = vector.load %arg5[%c0_12, %c0_13] : memref<1x4xf32, #tpu.memory_space<vmem>>, vector<1x4xf32>
      %16 = vector.broadcast %15 : vector<1x4xf32> to vector<16x4xf32>
      %17 = arith.addf %14, %16 : vector<16x4xf32>
      %c0_14 = arith.constant 0 : index
      %c0_15 = arith.constant 0 : index
      %18 = vector.load %arg6[%c0_14, %c0_15] : memref<16x4xf32, #tpu.memory_space<vmem>>, vector<16x4xf32>
      tpu.vector_store %arg6[%c0_14, %c0_15], %17 {strides = array<i32>} : memref<16x4xf32, #tpu.memory_space<vmem>>, vector<16x4xf32>,
    } else {
    }
    return
  }
  func.func @transform_0(%arg0: i32, %arg1: i32, %arg2: i32) -> (i32, i32) {
    %c0_i32 = arith.constant 0 : i32
    return %arg0, %arg2 : i32, i32
  }
  func.func @transform_1(%arg0: i32, %arg1: i32, %arg2: i32) -> (i32, i32) {
    %c0_i32 = arith.constant 0 : i32
    return %arg2, %arg1 : i32, i32
  }
  func.func @transform_2(%arg0: i32, %arg1: i32, %arg2: i32) -> (i32, i32) {
    %c0_i32 = arith.constant 0 : i32
    %c0_i32_0 = arith.constant 0 : i32
    return %c0_i32, %arg1 : i32, i32
  }
  func.func @transform_3(%arg0: i32, %arg1: i32, %arg2: i32) -> (i32, i32) {
    %c0_i32 = arith.constant 0 : i32
    return %arg0, %arg1 : i32, i32
  }
}

module attributes {stable_mosaic.version = 11 : i64} {
  func.func @_moe_ffn_ln_kernel(%arg0: i32, %arg1: i32, %arg2: i32, %arg3: memref<16x32xf32, #tpu.memory_space<vmem>>, %arg4: memref<1x16x1xf32, #tpu.memory_space<vmem>>, %arg5: memref<1x32x128xf32, #tpu.memory_space<vmem>>, %arg6: memref<1x1x128xf32, #tpu.memory_space<vmem>>, %arg7: memref<1x128x32xf32, #tpu.memory_space<vmem>>, %arg8: memref<1x1x32xf32, #tpu.memory_space<vmem>>, %arg9: memref<1x32xf32, #tpu.memory_space<vmem>>, %arg10: memref<1x32xf32, #tpu.memory_space<vmem>>, %arg11: memref<16x32xf32, #tpu.memory_space<vmem>>, %arg12: memref<16x32xf32, #tpu.memory_space<vmem>>, %arg13: memref<16x32xf32, #tpu.memory_space<vmem>>) attributes {dimension_semantics = [#tpu.dimension_semantics<parallel>, #tpu.dimension_semantics<arbitrary>, #tpu.dimension_semantics<arbitrary>], iteration_bounds = array<i64: 1, 4, 1>, scalar_prefetch = 0 : i64, scratch_operands = 2 : i64, tpu.core_type = #tpu.core_type<tc>, window_params = [{transform_indices = @transform_0, window_bounds = array<i64: 16, 32>}, {transform_indices = @transform_1, window_bounds = array<i64: 1, 16, 1>}, {transform_indices = @transform_2, window_bounds = array<i64: 1, 32, 128>}, {transform_indices = @transform_3, window_bounds = array<i64: 1, 1, 128>}, {transform_indices = @transform_4, window_bounds = array<i64: 1, 128, 32>}, {transform_indices = @transform_5, window_bounds = array<i64: 1, 1, 32>}, {pipeline_mode = #tpu.pipeline_mode<synchronous>, transform_indices = @transform_6, window_bounds = array<i64: 1, 32>}, {pipeline_mode = #tpu.pipeline_mode<synchronous>, transform_indices = @transform_7, window_bounds = array<i64: 1, 32>}, {transform_indices = @transform_8, window_bounds = array<i64: 16, 32>}]} {
    %c0_i32 = arith.constant 0 : i32
    %0 = arith.cmpi eq, %arg1, %c0_i32 : i32
    %c0_i32_0 = arith.constant 0 : i32
    %1 = arith.cmpi eq, %arg2, %c0_i32_0 : i32
    %2 = arith.andi %0, %1 : i1
    %3 = arith.extui %2 : i1 to i32
    %c0_i32_1 = arith.constant 0 : i32
    %4 = arith.cmpi ne, %3, %c0_i32_1 : i32
    scf.if %4 {
      %cst_24 = arith.constant 0.000000e+00 : f32
      %36 = vector.broadcast %cst_24 : f32 to vector<16x32xf32>
      %c0_25 = arith.constant 0 : index
      %c0_26 = arith.constant 0 : index
      %37 = vector.load %arg12[%c0_25, %c0_26] : memref<16x32xf32, #tpu.memory_space<vmem>>, vector<16x32xf32>
      tpu.vector_store %arg12[%c0_25, %c0_26], %36 {strides = array<i32>} : memref<16x32xf32, #tpu.memory_space<vmem>>, vector<16x32xf32>,
    } else {
    }
    %c0_i32_2 = arith.constant 0 : i32
    %5 = arith.cmpi eq, %arg2, %c0_i32_2 : i32
    %6 = arith.extui %5 : i1 to i32
    %c0_i32_3 = arith.constant 0 : i32
    %7 = arith.cmpi ne, %6, %c0_i32_3 : i32
    scf.if %7 {
      %cst_24 = arith.constant 0.000000e+00 : f32
      %36 = vector.broadcast %cst_24 : f32 to vector<16x32xf32>
      %c0_25 = arith.constant 0 : index
      %c0_26 = arith.constant 0 : index
      %37 = vector.load %arg13[%c0_25, %c0_26] : memref<16x32xf32, #tpu.memory_space<vmem>>, vector<16x32xf32>
      tpu.vector_store %arg13[%c0_25, %c0_26], %36 {strides = array<i32>} : memref<16x32xf32, #tpu.memory_space<vmem>>, vector<16x32xf32>,
    } else {
    }
    %c0 = arith.constant 0 : index
    %c0_4 = arith.constant 0 : index
    %8 = vector.load %arg3[%c0, %c0_4] : memref<16x32xf32, #tpu.memory_space<vmem>>, vector<16x32xf32>
    %9 = arith.truncf %8 : vector<16x32xf32> to vector<16x32xbf16>
    %c0_5 = arith.constant 0 : index
    %c0_6 = arith.constant 0 : index
    %c0_7 = arith.constant 0 : index
    %10 = vector.load %arg5[%c0_5, %c0_6, %c0_7] : memref<1x32x128xf32, #tpu.memory_space<vmem>>, vector<1x32x128xf32>
    %11 = vector.shape_cast %10 : vector<1x32x128xf32> to vector<32x128xf32>
    %12 = arith.truncf %11 : vector<32x128xf32> to vector<32x128xbf16>
    %cst = arith.constant dense<0.000000e+00> : vector<16x128xf32>
    %13 = tpu.matmul %9, %12, %cst {dimension_numbers = #tpu.dot_dimension_numbers<[1], [0], [0], [1], [0, 0, 1, 1], [], []>} : vector<16x32xbf16>, vector<32x128xbf16>, vector<16x128xf32> -> vector<16x128xf32>
    %c0_8 = arith.constant 0 : index
    %c0_9 = arith.constant 0 : index
    %c0_10 = arith.constant 0 : index
    %14 = vector.load %arg6[%c0_8, %c0_9, %c0_10] : memref<1x1x128xf32, #tpu.memory_space<vmem>>, vector<1x1x128xf32>
    %15 = vector.shape_cast %14 : vector<1x1x128xf32> to vector<1x128xf32>
    %16 = vector.broadcast %15 : vector<1x128xf32> to vector<16x128xf32>
    %17 = arith.addf %13, %16 : vector<16x128xf32>
    %cst_11 = arith.constant 0.000000e+00 : f32
    %18 = vector.broadcast %cst_11 : f32 to vector<16x128xf32>
    %19 = arith.maximumf %17, %18 : vector<16x128xf32>
    %c0_12 = arith.constant 0 : index
    %c0_13 = arith.constant 0 : index
    %20 = vector.load %arg13[%c0_12, %c0_13] : memref<16x32xf32, #tpu.memory_space<vmem>>, vector<16x32xf32>
    %21 = arith.truncf %19 : vector<16x128xf32> to vector<16x128xbf16>
    %c0_14 = arith.constant 0 : index
    %c0_15 = arith.constant 0 : index
    %c0_16 = arith.constant 0 : index
    %22 = vector.load %arg7[%c0_14, %c0_15, %c0_16] : memref<1x128x32xf32, #tpu.memory_space<vmem>>, vector<1x128x32xf32>
    %23 = vector.shape_cast %22 : vector<1x128x32xf32> to vector<128x32xf32>
    %24 = arith.truncf %23 : vector<128x32xf32> to vector<128x32xbf16>
    %cst_17 = arith.constant dense<0.000000e+00> : vector<16x32xf32>
    %25 = tpu.matmul %21, %24, %cst_17 {dimension_numbers = #tpu.dot_dimension_numbers<[1], [0], [0], [1], [0, 0, 1, 1], [], []>} : vector<16x128xbf16>, vector<128x32xbf16>, vector<16x32xf32> -> vector<16x32xf32>
    %26 = arith.addf %20, %25 : vector<16x32xf32>
    %c0_18 = arith.constant 0 : index
    %c0_19 = arith.constant 0 : index
    %27 = vector.load %arg13[%c0_18, %c0_19] : memref<16x32xf32, #tpu.memory_space<vmem>>, vector<16x32xf32>
    tpu.vector_store %arg13[%c0_18, %c0_19], %26 {strides = array<i32>} : memref<16x32xf32, #tpu.memory_space<vmem>>, vector<16x32xf32>,
    %c0_i32_20 = arith.constant 0 : i32
    %28 = arith.cmpi eq, %arg2, %c0_i32_20 : i32
    %29 = arith.extui %28 : i1 to i32
    %c0_i32_21 = arith.constant 0 : i32
    %30 = arith.cmpi ne, %29, %c0_i32_21 : i32
    scf.if %30 {
      %c0_24 = arith.constant 0 : index
      %c0_25 = arith.constant 0 : index
      %36 = vector.load %arg12[%c0_24, %c0_25] : memref<16x32xf32, #tpu.memory_space<vmem>>, vector<16x32xf32>
      %c0_26 = arith.constant 0 : index
      %c0_27 = arith.constant 0 : index
      %c0_28 = arith.constant 0 : index
      %37 = vector.load %arg4[%c0_26, %c0_27, %c0_28] : memref<1x16x1xf32, #tpu.memory_space<vmem>>, vector<1x16x1xf32>
      %38 = vector.shape_cast %37 : vector<1x16x1xf32> to vector<16x1xf32>
      %c0_29 = arith.constant 0 : index
      %c0_30 = arith.constant 0 : index
      %39 = vector.load %arg13[%c0_29, %c0_30] : memref<16x32xf32, #tpu.memory_space<vmem>>, vector<16x32xf32>
      %c0_31 = arith.constant 0 : index
      %c0_32 = arith.constant 0 : index
      %c0_33 = arith.constant 0 : index
      %40 = vector.load %arg8[%c0_31, %c0_32, %c0_33] : memref<1x1x32xf32, #tpu.memory_space<vmem>>, vector<1x1x32xf32>
      %41 = vector.shape_cast %40 : vector<1x1x32xf32> to vector<1x32xf32>
      %42 = vector.broadcast %41 : vector<1x32xf32> to vector<16x32xf32>
      %43 = arith.addf %39, %42 : vector<16x32xf32>
      %44 = vector.broadcast %38 : vector<16x1xf32> to vector<16x32xf32>
      %45 = arith.mulf %44, %43 : vector<16x32xf32>
      %46 = arith.addf %36, %45 : vector<16x32xf32>
      %c0_34 = arith.constant 0 : index
      %c0_35 = arith.constant 0 : index
      %47 = vector.load %arg12[%c0_34, %c0_35] : memref<16x32xf32, #tpu.memory_space<vmem>>, vector<16x32xf32>
      tpu.vector_store %arg12[%c0_34, %c0_35], %46 {strides = array<i32>} : memref<16x32xf32, #tpu.memory_space<vmem>>, vector<16x32xf32>,
    } else {
    }
    %c3_i32 = arith.constant 3 : i32
    %31 = arith.cmpi eq, %arg1, %c3_i32 : i32
    %c0_i32_22 = arith.constant 0 : i32
    %32 = arith.cmpi eq, %arg2, %c0_i32_22 : i32
    %33 = arith.andi %31, %32 : i1
    %34 = arith.extui %33 : i1 to i32
    %c0_i32_23 = arith.constant 0 : i32
    %35 = arith.cmpi ne, %34, %c0_i32_23 : i32
    scf.if %35 {
      %c0_24 = arith.constant 0 : index
      %c0_25 = arith.constant 0 : index
      %36 = vector.load %arg3[%c0_24, %c0_25] : memref<16x32xf32, #tpu.memory_space<vmem>>, vector<16x32xf32>
      %c0_26 = arith.constant 0 : index
      %c0_27 = arith.constant 0 : index
      %37 = vector.load %arg12[%c0_26, %c0_27] : memref<16x32xf32, #tpu.memory_space<vmem>>, vector<16x32xf32>
      %38 = arith.addf %36, %37 : vector<16x32xf32>
      %cst_28 = arith.constant dense<0.000000e+00> : vector<16xf32>
      %39 = vector.multi_reduction <add>, %38, %cst_28 [1] : vector<16x32xf32> to vector<16xf32>
      %40 = vector.shape_cast %39 : vector<16xf32> to vector<16x1xf32>
      %cst_29 = arith.constant 3.200000e+01 : f32
      %41 = vector.broadcast %cst_29 : f32 to vector<16x1xf32>
      %42 = arith.divf %40, %41 : vector<16x1xf32>
      %43 = vector.broadcast %42 : vector<16x1xf32> to vector<16x32xf32>
      %44 = arith.subf %38, %43 : vector<16x32xf32>
      %45 = arith.mulf %44, %44 : vector<16x32xf32>
      %cst_30 = arith.constant dense<0.000000e+00> : vector<16xf32>
      %46 = vector.multi_reduction <add>, %45, %cst_30 [1] : vector<16x32xf32> to vector<16xf32>
      %47 = vector.shape_cast %46 : vector<16xf32> to vector<16x1xf32>
      %cst_31 = arith.constant 3.200000e+01 : f32
      %48 = vector.broadcast %cst_31 : f32 to vector<16x1xf32>
      %49 = arith.divf %47, %48 : vector<16x1xf32>
      %cst_32 = arith.constant 9.99999974E-6 : f32
      %50 = vector.broadcast %cst_32 : f32 to vector<16x1xf32>
      %51 = arith.addf %49, %50 : vector<16x1xf32>
      %52 = math.rsqrt %51 : vector<16x1xf32>
      %53 = vector.broadcast %52 : vector<16x1xf32> to vector<16x32xf32>
      %54 = arith.mulf %44, %53 : vector<16x32xf32>
      %c0_33 = arith.constant 0 : index
      %c0_34 = arith.constant 0 : index
      %55 = vector.load %arg9[%c0_33, %c0_34] : memref<1x32xf32, #tpu.memory_space<vmem>>, vector<1x32xf32>
      %56 = vector.broadcast %55 : vector<1x32xf32> to vector<16x32xf32>
      %57 = arith.mulf %54, %56 : vector<16x32xf32>
      %c0_35 = arith.constant 0 : index
      %c0_36 = arith.constant 0 : index
      %58 = vector.load %arg10[%c0_35, %c0_36] : memref<1x32xf32, #tpu.memory_space<vmem>>, vector<1x32xf32>
      %59 = vector.broadcast %58 : vector<1x32xf32> to vector<16x32xf32>
      %60 = arith.addf %57, %59 : vector<16x32xf32>
      %c0_37 = arith.constant 0 : index
      %c0_38 = arith.constant 0 : index
      %61 = vector.load %arg11[%c0_37, %c0_38] : memref<16x32xf32, #tpu.memory_space<vmem>>, vector<16x32xf32>
      tpu.vector_store %arg11[%c0_37, %c0_38], %60 {strides = array<i32>} : memref<16x32xf32, #tpu.memory_space<vmem>>, vector<16x32xf32>,
    } else {
    }
    return
  }
  func.func @transform_0(%arg0: i32, %arg1: i32, %arg2: i32) -> (i32, i32) {
    %c0_i32 = arith.constant 0 : i32
    %c0_i32_0 = arith.constant 0 : i32
    return %arg0, %c0_i32 : i32, i32
  }
  func.func @transform_1(%arg0: i32, %arg1: i32, %arg2: i32) -> (i32, i32, i32) {
    %c0_i32 = arith.constant 0 : i32
    %c0_i32_0 = arith.constant 0 : i32
    return %arg1, %arg0, %c0_i32 : i32, i32, i32
  }
  func.func @transform_2(%arg0: i32, %arg1: i32, %arg2: i32) -> (i32, i32, i32) {
    %c0_i32 = arith.constant 0 : i32
    %c0_i32_0 = arith.constant 0 : i32
    return %arg1, %c0_i32, %arg2 : i32, i32, i32
  }
  func.func @transform_3(%arg0: i32, %arg1: i32, %arg2: i32) -> (i32, i32, i32) {
    %c0_i32 = arith.constant 0 : i32
    %c0_i32_0 = arith.constant 0 : i32
    return %arg1, %c0_i32, %arg2 : i32, i32, i32
  }
  func.func @transform_4(%arg0: i32, %arg1: i32, %arg2: i32) -> (i32, i32, i32) {
    %c0_i32 = arith.constant 0 : i32
    %c0_i32_0 = arith.constant 0 : i32
    return %arg1, %arg2, %c0_i32 : i32, i32, i32
  }
  func.func @transform_5(%arg0: i32, %arg1: i32, %arg2: i32) -> (i32, i32, i32) {
    %c0_i32 = arith.constant 0 : i32
    %c0_i32_0 = arith.constant 0 : i32
    %c0_i32_1 = arith.constant 0 : i32
    return %arg1, %c0_i32, %c0_i32_0 : i32, i32, i32
  }
  func.func @transform_6(%arg0: i32, %arg1: i32, %arg2: i32) -> (i32, i32) {
    %c0_i32 = arith.constant 0 : i32
    %c0_i32_0 = arith.constant 0 : i32
    %c0_i32_1 = arith.constant 0 : i32
    return %c0_i32, %c0_i32_0 : i32, i32
  }
  func.func @transform_7(%arg0: i32, %arg1: i32, %arg2: i32) -> (i32, i32) {
    %c0_i32 = arith.constant 0 : i32
    %c0_i32_0 = arith.constant 0 : i32
    %c0_i32_1 = arith.constant 0 : i32
    return %c0_i32, %c0_i32_0 : i32, i32
  }
  func.func @transform_8(%arg0: i32, %arg1: i32, %arg2: i32) -> (i32, i32) {
    %c0_i32 = arith.constant 0 : i32
    %c0_i32_0 = arith.constant 0 : i32
    return %arg0, %c0_i32 : i32, i32
  }
}

</mosaic_0001>

<llo_original>
// kernel: decoder_block.9
$region0: #{decoder_block.9}
  #allocation0 [shape = 'u32[]', space=smem, size = 0x4, offset = 0x4, fixed_abs, tag = 'smem constant byte address 0x4 - core index']
  #allocation1 [shape = 'u32[144,128]{1,0:T(1,128)}', space=vmem, size = 0x12000, scoped, tag = 'internal scratch']
  #allocation2 [shape = 'f32[16,96]{1,0:T(8,128)}', space=vmem, size = 0x2000, scoped, tag = 'scratch operand']
  %s0 = inlined_call_operand.vmem [shape: f32[16,32], index: 0, kind: input, shape index: {}]
  %s1 = inlined_call_operand.vmem [shape: f32[32,96], index: 1, kind: input, shape index: {}]
  %s2 = inlined_call_operand.vmem [shape: f32[1,96], index: 2, kind: input, shape index: {}]
  %s3 = inlined_call_operand.vmem [shape: bf16[16,96], index: 3, kind: output, shape index: {}]
  %s4 = sld [smem:[#allocation0]]
  $region30: #{decoder_block.9} parent=0
    _
  %s6 = ssub.s32 1, %s4
  %s7 = scalar_select 0, %s6, %s4
  // Predicated region
  $region2: #{decoder_block.9} parent=0 // pred_check
    _
  $region3: #{decoder_block.9} parent=0 // pred_check_branch
    %9 = sbr.rel (0) target = $region5
  $region4: #{decoder_block.9} parent=0 // pred_region
    _
  $region5: #{decoder_block.9} parent=0 // pred_fallthru
    _
  // Predicated region
  $region6: #{decoder_block.9} parent=0 // pred_check
    _
  $region7: #{decoder_block.9} parent=0 // pred_check_branch
    %11 = sbr.rel (0) target = $region9
  $region8: #{decoder_block.9} parent=0 // pred_region
    _
  $region9: #{decoder_block.9} parent=0 // pred_fallthru
    _
  // Predicated region
  $region10: #{decoder_block.9} parent=0 // pred_check
    _
  $region11: #{decoder_block.9} parent=0 // pred_check_branch
    %13 = sbr.rel (0) target = $region13
  $region12: #{decoder_block.9} parent=0 // pred_region
    _
  $region13: #{decoder_block.9} parent=0 // pred_fallthru
    _
  %p15 = scmp.eq.s32.totalorder 0, 0
  // Predicated region
  $region14: #{decoder_block.9} parent=0 // pred_check
    %p16 = pneg %p15
  $region15: #{decoder_block.9} parent=0 // pred_check_branch
    %18 = sbr.rel (%p16) target = $region17
  $region16: #{decoder_block.9} parent=0 // pred_region
    %vm19 = vcmask 785408
    %20 = vst.msk [vmem:[#allocation2] sm:$0xff] %vm19, 0.0
    %21 = vst.msk [vmem:[#allocation2 + $0x8] sm:$0xff] %vm19, 0.0
  $region17: #{decoder_block.9} parent=0 // pred_fallthru
    _
  %v22 = vld [vmem:[#allocation2] sm:$0xff]
  %v23 = vld [vmem:[#allocation2 + $0x8] sm:$0xff]
  %v24 = vld [vmem:[%s0] sm:$0xff]
  %v25 = vld [vmem:[%s0 + $0x8] sm:$0xff]
  %v26 = vpack.c.bf16 %v25, %v24
  %v27 = vld [vmem:[%s1] sm:$0xff]
  %v28 = vld [vmem:[%s1 + $0x8] sm:$0xff]
  %v29 = vld [vmem:[%s1 + $0x10] sm:$0xff]
  %v30 = vld [vmem:[%s1 + $0x18] sm:$0xff]
  %v31 = vpack.c.bf16 %v28, %v27
  %v32 = vpack.c.bf16 %v30, %v29
  %vm33 = vcmask 261120
  %v35 = vsel %vm33, %v26, 0
  %37 = vmatprep.subr.bf16.mxu0 0
  %38 = vmatpush1.bf16.msra.mxu0 0
  %39 = vmatprep.subr.bf16.mxu0 0
  %40 = vmatpush1.bf16.msra.mxu0 0
  %41 = vmatprep.subr.bf16.mxu0 0
  %42 = vmatpush1.bf16.msra.mxu0 0
  %43 = vmatprep.subr.bf16.mxu0 0
  %44 = vmatpush1.bf16.msra.mxu0 0
  %45 = vmatprep.subr.bf16.mxu0 0
  %46 = vmatpush1.bf16.msra.mxu0 0
  %47 = vmatprep.subr.bf16.mxu0 0
  %48 = vmatpush1.bf16.msra.mxu0 0
  %49 = vmatprep.subr.bf16.mxu0 0
  %50 = vmatpush1.bf16.msra.mxu0 %v32
  %51 = vmatprep.subr.bf16.mxu0 0
  %52 = vmatpush1.bf16.msra.mxu0 %v31
  %53 = vmatprep.subr.bf16.mxu0 0
  %54 = vmatpush2.bf16.msra.mxu0 0
  %55 = vmatprep.subr.bf16.mxu0 0
  %56 = vmatpush2.bf16.msra.mxu0 0
  %57 = vmatprep.subr.bf16.mxu0 0
  %58 = vmatpush2.bf16.msra.mxu0 0
  %59 = vmatprep.subr.bf16.mxu0 0
  %60 = vmatpush2.bf16.msra.mxu0 0
  %61 = vmatprep.subr.bf16.mxu0 0
  %62 = vmatpush2.bf16.msra.mxu0 0
  %63 = vmatprep.subr.bf16.mxu0 0
  %64 = vmatpush2.bf16.msra.mxu0 0
  %65 = vmatprep.subr.bf16.mxu0 0
  %66 = vmatpush2.bf16.msra.mxu0 0
  %67 = vmatprep.subr.bf16.mxu0 0
  %68 = vmatpush2.bf16.msra.mxu0 0
  %69 = vmatprep.mubr.bf16.mxu0 0
  %70 = vmatmul.mubr.bf16.gmra.mxu0 %v35
  %v71 = vpop.f32.mrf.mxu0
  %v72 = vadd.f32 0.0, %v71
  %v73 = vpop.f32.mrf.mxu0
  %v74 = vpop.f32.mrf.mxu0
  %v75 = vadd.f32 0.0, %v74
  %v76 = vpop.f32.mrf.mxu0
  %77 = vdwg.mxu0
  %v78 = vadd.f32 %v22, %v72
  %v79 = vadd.f32 %v23, %v75
  %vm80 = vcmask 785408
  %81 = vst.msk [vmem:[#allocation2] sm:$0xff] %vm80, %v78
  %82 = vst.msk [vmem:[#allocation2 + $0x8] sm:$0xff] %vm80, %v79
  // Predicated region
  $region18: #{decoder_block.9} parent=0 // pred_check
    %p83 = pneg %p15
  $region19: #{decoder_block.9} parent=0 // pred_check_branch
    %85 = sbr.rel (%p83) target = $region21
  $region20: #{decoder_block.9} parent=0 // pred_region
    %v86 = vld [vmem:[#allocation2] sm:$0xff]
    %v87 = vld [vmem:[#allocation2 + $0x8] sm:$0xff]
    %v88 = vld [vmem:[%s2] sm:$0x1]
    %v90 = vlaneseq
    %v91 = vshrl.u32 %v90, 7
    %v92 = vsub.s32 0, %v91
    %v93 = vrot.slane %v88, %v92
    %v95 = vadd.f32 %v86, %v93
    %v96 = vadd.f32 %v87, %v93
    %v97 = vpack.c.bf16 %v96, %v95
    %v99 = vunpack.c.l.b16 %v97
    %v100 = vunpack.c.h.b16 %v97
    %v101 = vpack.c.b16 %v99, %v99
    %v102 = vpack.c.b16 %v100, %v100
    %vm105 = vcmask 781312
    %106 = vst.msk [vmem:[%s3] sm:$0xf] %vm105, %v101
    %107 = vst.msk [vmem:[%s3 + $0x4] sm:$0xf] %vm105, %v102
  $region21: #{decoder_block.9} parent=0 // pred_fallthru
    _
  // Predicated region
  $region22: #{decoder_block.9} parent=0 // pred_check
    _
  $region23: #{decoder_block.9} parent=0 // pred_check_branch
    %109 = sbr.rel (0) target = $region25
  $region24: #{decoder_block.9} parent=0 // pred_region
    _
  $region25: #{decoder_block.9} parent=0 // pred_fallthru
    _
  // Predicated region
  $region26: #{decoder_block.9} parent=0 // pred_check
    _
  $region27: #{decoder_block.9} parent=0 // pred_check_branch
    %111 = sbr.rel (0) target = $region29
  $region28: #{decoder_block.9} parent=0 // pred_region
    _
  $region29: #{decoder_block.9} parent=0 // pred_fallthru
    _

// kernel: decoder_block.13
$region0: #{decoder_block.13}
  #allocation0 [shape = 'u32[]', space=smem, size = 0x4, offset = 0x4, fixed_abs, tag = 'smem constant byte address 0x4 - core index']
  #allocation1 [shape = 'u32[144,128]{1,0:T(1,128)}', space=vmem, size = 0x12000, scoped, tag = 'internal scratch']
  #allocation2 [shape = 'f32[16,64]{1,0:T(8,128)}', space=vmem, size = 0x2000, scoped, tag = 'scratch operand']
  %s0 = inlined_call_operand.vmem [shape: f32[16,32], index: 0, kind: input, shape index: {}]
  %s1 = inlined_call_operand.vmem [shape: f32[32,64], index: 1, kind: input, shape index: {}]
  %s2 = inlined_call_operand.vmem [shape: f32[1,64], index: 2, kind: input, shape index: {}]
  %s3 = inlined_call_operand.vmem [shape: bf16[16,64], index: 3, kind: output, shape index: {}]
  %s4 = sld [smem:[#allocation0]]
  $region30: #{decoder_block.13} parent=0
    _
  %s6 = ssub.s32 1, %s4
  %s7 = scalar_select 0, %s6, %s4
  // Predicated region
  $region2: #{decoder_block.13} parent=0 // pred_check
    _
  $region3: #{decoder_block.13} parent=0 // pred_check_branch
    %9 = sbr.rel (0) target = $region5
  $region4: #{decoder_block.13} parent=0 // pred_region
    _
  $region5: #{decoder_block.13} parent=0 // pred_fallthru
    _
  // Predicated region
  $region6: #{decoder_block.13} parent=0 // pred_check
    _
  $region7: #{decoder_block.13} parent=0 // pred_check_branch
    %11 = sbr.rel (0) target = $region9
  $region8: #{decoder_block.13} parent=0 // pred_region
    _
  $region9: #{decoder_block.13} parent=0 // pred_fallthru
    _
  // Predicated region
  $region10: #{decoder_block.13} parent=0 // pred_check
    _
  $region11: #{decoder_block.13} parent=0 // pred_check_branch
    %13 = sbr.rel (0) target = $region13
  $region12: #{decoder_block.13} parent=0 // pred_region
    _
  $region13: #{decoder_block.13} parent=0 // pred_fallthru
    _
  %p15 = scmp.eq.s32.totalorder 0, 0
  // Predicated region
  $region14: #{decoder_block.13} parent=0 // pred_check
    %p16 = pneg %p15
  $region15: #{decoder_block.13} parent=0 // pred_check_branch
    %18 = sbr.rel (%p16) target = $region17
  $region16: #{decoder_block.13} parent=0 // pred_region
    %vm19 = vcmask 523264
    %20 = vst.msk [vmem:[#allocation2] sm:$0xff] %vm19, 0.0
    %21 = vst.msk [vmem:[#allocation2 + $0x8] sm:$0xff] %vm19, 0.0
  $region17: #{decoder_block.13} parent=0 // pred_fallthru
    _
  %v22 = vld [vmem:[#allocation2] sm:$0xff]
  %v23 = vld [vmem:[#allocation2 + $0x8] sm:$0xff]
  %v24 = vld [vmem:[%s0] sm:$0xff]
  %v25 = vld [vmem:[%s0 + $0x8] sm:$0xff]
  %v26 = vpack.c.bf16 %v25, %v24
  %v27 = vld [vmem:[%s1] sm:$0xff]
  %v28 = vld [vmem:[%s1 + $0x8] sm:$0xff]
  %v29 = vld [vmem:[%s1 + $0x10] sm:$0xff]
  %v30 = vld [vmem:[%s1 + $0x18] sm:$0xff]
  %v31 = vpack.c.bf16 %v28, %v27
  %v32 = vpack.c.bf16 %v30, %v29
  %vm33 = vcmask 261120
  %v35 = vsel %vm33, %v26, 0
  %37 = vmatprep.subr.bf16.mxu0 0
  %38 = vmatpush1.bf16.msra.mxu0 0
  %39 = vmatprep.subr.bf16.mxu0 0
  %40 = vmatpush1.bf16.msra.mxu0 0
  %41 = vmatprep.subr.bf16.mxu0 0
  %42 = vmatpush1.bf16.msra.mxu0 0
  %43 = vmatprep.subr.bf16.mxu0 0
  %44 = vmatpush1.bf16.msra.mxu0 0
  %45 = vmatprep.subr.bf16.mxu0 0
  %46 = vmatpush1.bf16.msra.mxu0 0
  %47 = vmatprep.subr.bf16.mxu0 0
  %48 = vmatpush1.bf16.msra.mxu0 0
  %49 = vmatprep.subr.bf16.mxu0 0
  %50 = vmatpush1.bf16.msra.mxu0 %v32
  %51 = vmatprep.subr.bf16.mxu0 0
  %52 = vmatpush1.bf16.msra.mxu0 %v31
  %53 = vmatprep.subr.bf16.mxu0 0
  %54 = vmatpush2.bf16.msra.mxu0 0
  %55 = vmatprep.subr.bf16.mxu0 0
  %56 = vmatpush2.bf16.msra.mxu0 0
  %57 = vmatprep.subr.bf16.mxu0 0
  %58 = vmatpush2.bf16.msra.mxu0 0
  %59 = vmatprep.subr.bf16.mxu0 0
  %60 = vmatpush2.bf16.msra.mxu0 0
  %61 = vmatprep.subr.bf16.mxu0 0
  %62 = vmatpush2.bf16.msra.mxu0 0
  %63 = vmatprep.subr.bf16.mxu0 0
  %64 = vmatpush2.bf16.msra.mxu0 0
  %65 = vmatprep.subr.bf16.mxu0 0
  %66 = vmatpush2.bf16.msra.mxu0 0
  %67 = vmatprep.subr.bf16.mxu0 0
  %68 = vmatpush2.bf16.msra.mxu0 0
  %69 = vmatprep.mubr.bf16.mxu0 0
  %70 = vmatmul.mubr.bf16.gmra.mxu0 %v35
  %v71 = vpop.f32.mrf.mxu0
  %v72 = vadd.f32 0.0, %v71
  %v73 = vpop.f32.mrf.mxu0
  %v74 = vpop.f32.mrf.mxu0
  %v75 = vadd.f32 0.0, %v74
  %v76 = vpop.f32.mrf.mxu0
  %77 = vdwg.mxu0
  %v78 = vadd.f32 %v22, %v72
  %v79 = vadd.f32 %v23, %v75
  %vm80 = vcmask 523264
  %81 = vst.msk [vmem:[#allocation2] sm:$0xff] %vm80, %v78
  %82 = vst.msk [vmem:[#allocation2 + $0x8] sm:$0xff] %vm80, %v79
  // Predicated region
  $region18: #{decoder_block.13} parent=0 // pred_check
    %p83 = pneg %p15
  $region19: #{decoder_block.13} parent=0 // pred_check_branch
    %85 = sbr.rel (%p83) target = $region21
  $region20: #{decoder_block.13} parent=0 // pred_region
    %v86 = vld [vmem:[#allocation2] sm:$0xff]
    %v87 = vld [vmem:[#allocation2 + $0x8] sm:$0xff]
    %v88 = vld [vmem:[%s2] sm:$0x1]
    %v90 = vlaneseq
    %v91 = vshrl.u32 %v90, 7
    %v92 = vsub.s32 0, %v91
    %v93 = vrot.slane %v88, %v92
    %v95 = vadd.f32 %v86, %v93
    %v96 = vadd.f32 %v87, %v93
    %v97 = vpack.c.bf16 %v96, %v95
    %v99 = vunpack.c.l.b16 %v97
    %v100 = vunpack.c.h.b16 %v97
    %v101 = vpack.c.b16 %v99, %v99
    %v102 = vpack.c.b16 %v100, %v100
    %vm105 = vcmask 519168
    %106 = vst.msk [vmem:[%s3] sm:$0xf] %vm105, %v101
    %107 = vst.msk [vmem:[%s3 + $0x4] sm:$0xf] %vm105, %v102
  $region21: #{decoder_block.13} parent=0 // pred_fallthru
    _
  // Predicated region
  $region22: #{decoder_block.13} parent=0 // pred_check
    _
  $region23: #{decoder_block.13} parent=0 // pred_check_branch
    %109 = sbr.rel (0) target = $region25
  $region24: #{decoder_block.13} parent=0 // pred_region
    _
  $region25: #{decoder_block.13} parent=0 // pred_fallthru
    _
  // Predicated region
  $region26: #{decoder_block.13} parent=0 // pred_check
    _
  $region27: #{decoder_block.13} parent=0 // pred_check_branch
    %111 = sbr.rel (0) target = $region29
  $region28: #{decoder_block.13} parent=0 // pred_region
    _
  $region29: #{decoder_block.13} parent=0 // pred_fallthru
    _

// kernel: decoder_block.11
$region0: #{decoder_block.11}
  #allocation0 [shape = 'u32[]', space=smem, size = 0x4, offset = 0x4, fixed_abs, tag = 'smem constant byte address 0x4 - core index']
  #allocation1 [shape = 'u32[144,128]{1,0:T(1,128)}', space=vmem, size = 0x12000, scoped, tag = 'internal scratch']
  #allocation2 [shape = 'f32[16,32]{1,0:T(8,128)}', space=vmem, size = 0x2000, scoped, tag = 'scratch operand']
  %s0 = inlined_call_operand.vmem [shape: bf16[16,32], index: 0, kind: input, shape index: {}]
  %s1 = inlined_call_operand.vmem [shape: f32[32,32], index: 1, kind: input, shape index: {}]
  %s2 = inlined_call_operand.vmem [shape: f32[1,32], index: 2, kind: input, shape index: {}]
  %s3 = inlined_call_operand.vmem [shape: f32[16,32], index: 3, kind: input, shape index: {}]
  %s4 = inlined_call_operand.vmem [shape: f32[1,32], index: 4, kind: input, shape index: {}]
  %s5 = inlined_call_operand.vmem [shape: f32[1,32], index: 5, kind: input, shape index: {}]
  %s6 = inlined_call_operand.vmem [shape: f32[16,32], index: 6, kind: output, shape index: {}]
  %s7 = sld [smem:[#allocation0]]
  $region42: #{decoder_block.11} parent=0
    _
  %s9 = ssub.s32 1, %s7
  %s10 = scalar_select 0, %s9, %s7
  // Predicated region
  $region2: #{decoder_block.11} parent=0 // pred_check
    _
  $region3: #{decoder_block.11} parent=0 // pred_check_branch
    %12 = sbr.rel (0) target = $region5
  $region4: #{decoder_block.11} parent=0 // pred_region
    _
  $region5: #{decoder_block.11} parent=0 // pred_fallthru
    _
  // Predicated region
  $region6: #{decoder_block.11} parent=0 // pred_check
    _
  $region7: #{decoder_block.11} parent=0 // pred_check_branch
    %14 = sbr.rel (0) target = $region9
  $region8: #{decoder_block.11} parent=0 // pred_region
    _
  $region9: #{decoder_block.11} parent=0 // pred_fallthru
    _
  // Predicated region
  $region10: #{decoder_block.11} parent=0 // pred_check
    _
  $region11: #{decoder_block.11} parent=0 // pred_check_branch
    %16 = sbr.rel (0) target = $region13
  $region12: #{decoder_block.11} parent=0 // pred_region
    _
  $region13: #{decoder_block.11} parent=0 // pred_fallthru
    _
  // Predicated region
  $region14: #{decoder_block.11} parent=0 // pred_check
    _
  $region15: #{decoder_block.11} parent=0 // pred_check_branch
    %18 = sbr.rel (0) target = $region17
  $region16: #{decoder_block.11} parent=0 // pred_region
    _
  $region17: #{decoder_block.11} parent=0 // pred_fallthru
    _
  // Predicated region
  $region18: #{decoder_block.11} parent=0 // pred_check
    _
  $region19: #{decoder_block.11} parent=0 // pred_check_branch
    %20 = sbr.rel (0) target = $region21
  $region20: #{decoder_block.11} parent=0 // pred_region
    _
  $region21: #{decoder_block.11} parent=0 // pred_fallthru
    _
  // Predicated region
  $region22: #{decoder_block.11} parent=0 // pred_check
    _
  $region23: #{decoder_block.11} parent=0 // pred_check_branch
    %22 = sbr.rel (0) target = $region25
  $region24: #{decoder_block.11} parent=0 // pred_region
    _
  $region25: #{decoder_block.11} parent=0 // pred_fallthru
    _
  %p24 = scmp.eq.s32.totalorder 0, 0
  // Predicated region
  $region26: #{decoder_block.11} parent=0 // pred_check
    %p25 = pneg %p24
  $region27: #{decoder_block.11} parent=0 // pred_check_branch
    %27 = sbr.rel (%p25) target = $region29
  $region28: #{decoder_block.11} parent=0 // pred_region
    %vm28 = vcmask 261120
    %29 = vst.msk [vmem:[#allocation2] sm:$0xff] %vm28, 0.0
    %30 = vst.msk [vmem:[#allocation2 + $0x8] sm:$0xff] %vm28, 0.0
  $region29: #{decoder_block.11} parent=0 // pred_fallthru
    _
  %v31 = vld [vmem:[#allocation2] sm:$0xff]
  %v32 = vld [vmem:[#allocation2 + $0x8] sm:$0xff]
  %v33 = vld [vmem:[%s0] sm:$0xf]
  %v34 = vld [vmem:[%s0 + $0x4] sm:$0xf]
  %v35 = vld [vmem:[%s1] sm:$0xff]
  %v36 = vld [vmem:[%s1 + $0x8] sm:$0xff]
  %v37 = vld [vmem:[%s1 + $0x10] sm:$0xff]
  %v38 = vld [vmem:[%s1 + $0x18] sm:$0xff]
  %v39 = vpack.c.bf16 %v36, %v35
  %v40 = vpack.c.bf16 %v38, %v37
  %v43 = vunpack.c.l.b16 %v33
  %v44 = vunpack.c.l.b16 %v34
  %v45 = vpack.c.b16 %v44, %v43
  %vm46 = vcmask 261120
  %v48 = vsel %vm46, %v45, 0
  %50 = vmatprep.subr.bf16.mxu0 0
  %51 = vmatpush1.bf16.msra.mxu0 0
  %52 = vmatprep.subr.bf16.mxu0 0
  %53 = vmatpush1.bf16.msra.mxu0 0
  %54 = vmatprep.subr.bf16.mxu0 0
  %55 = vmatpush1.bf16.msra.mxu0 0
  %56 = vmatprep.subr.bf16.mxu0 0
  %57 = vmatpush1.bf16.msra.mxu0 0
  %58 = vmatprep.subr.bf16.mxu0 0
  %59 = vmatpush1.bf16.msra.mxu0 0
  %60 = vmatprep.subr.bf16.mxu0 0
  %61 = vmatpush1.bf16.msra.mxu0 0
  %62 = vmatprep.subr.bf16.mxu0 0
  %63 = vmatpush1.bf16.msra.mxu0 %v40
  %64 = vmatprep.subr.bf16.mxu0 0
  %65 = vmatpush1.bf16.msra.mxu0 %v39
  %66 = vmatprep.subr.bf16.mxu0 0
  %67 = vmatpush2.bf16.msra.mxu0 0
  %68 = vmatprep.subr.bf16.mxu0 0
  %69 = vmatpush2.bf16.msra.mxu0 0
  %70 = vmatprep.subr.bf16.mxu0 0
  %71 = vmatpush2.bf16.msra.mxu0 0
  %72 = vmatprep.subr.bf16.mxu0 0
  %73 = vmatpush2.bf16.msra.mxu0 0
  %74 = vmatprep.subr.bf16.mxu0 0
  %75 = vmatpush2.bf16.msra.mxu0 0
  %76 = vmatprep.subr.bf16.mxu0 0
  %77 = vmatpush2.bf16.msra.mxu0 0
  %78 = vmatprep.subr.bf16.mxu0 0
  %79 = vmatpush2.bf16.msra.mxu0 0
  %80 = vmatprep.subr.bf16.mxu0 0
  %81 = vmatpush2.bf16.msra.mxu0 0
  %82 = vmatprep.mubr.bf16.mxu0 0
  %83 = vmatmul.mubr.bf16.gmra.mxu0 %v48
  %v84 = vpop.f32.mrf.mxu0
  %v85 = vadd.f32 0.0, %v84
  %v86 = vpop.f32.mrf.mxu0
  %v87 = vpop.f32.mrf.mxu0
  %v88 = vadd.f32 0.0, %v87
  %v89 = vpop.f32.mrf.mxu0
  %90 = vdwg.mxu0
  %v91 = vadd.f32 %v31, %v85
  %v92 = vadd.f32 %v32, %v88
  %93 = vst.msk [vmem:[#allocation2] sm:$0xff] %vm46, %v91
  %94 = vst.msk [vmem:[#allocation2 + $0x8] sm:$0xff] %vm46, %v92
  // Predicated region
  $region30: #{decoder_block.11} parent=0 // pred_check
    %p95 = pneg %p24
  $region31: #{decoder_block.11} parent=0 // pred_check_branch
    %97 = sbr.rel (%p95) target = $region33
  $region32: #{decoder_block.11} parent=0 // pred_region
    %v98 = vld [vmem:[#allocation2] sm:$0xff]
    %v99 = vld [vmem:[#allocation2 + $0x8] sm:$0xff]
    %v100 = vld [vmem:[%s2] sm:$0x1]
    %v102 = vlaneseq
    %v103 = vshrl.u32 %v102, 7
    %v104 = vsub.s32 0, %v103
    %v105 = vrot.slane %v100, %v104
    %v107 = vadd.f32 %v98, %v105
    %v108 = vadd.f32 %v99, %v105
    %v109 = vld [vmem:[%s3] sm:$0xff]
    %v110 = vld [vmem:[%s3 + $0x8] sm:$0xff]
    %v111 = vadd.f32 %v107, %v109
    %v112 = vadd.f32 %v108, %v110
    %v113 = vsel %vm46, %v111, 0.0
    %114 = vadd.xlane.f32.xlu0 %v113
    %v115 = vpop.xlane.xlu0 %114
    %v116 = vsel %vm46, %v112, 0.0
    %117 = vadd.xlane.f32.xlu0 %v116
    %v118 = vpop.xlane.xlu0 %117
    %v119 = vrcp.pop 32.0
    %v120 = vmul.f32 %v115, %v119
    %v121 = vmul.f32 %v118, %v119
    %v122 = vsub.f32 %v111, %v120
    %v123 = vsub.f32 %v112, %v121
    %v124 = vmul.f32 %v122, %v122
    %v125 = vmul.f32 %v123, %v123
    %v126 = vsel %vm46, %v124, 0.0
    %127 = vadd.xlane.f32.xlu0 %v126
    %v128 = vpop.xlane.xlu0 %127
    %v129 = vsel %vm46, %v125, 0.0
    %130 = vadd.xlane.f32.xlu0 %v129
    %v131 = vpop.xlane.xlu0 %130
    %v132 = vmul.f32 %v128, %v119
    %v133 = vmul.f32 %v131, %v119
    %v134 = vadd.f32 %v132, 1e-05
    %v135 = vadd.f32 %v133, 1e-05
    %v136 = vrsqrt.pop %v134
    %v137 = vrsqrt.pop %v135
    %v138 = vmul.f32 %v122, %v136
    %v139 = vmul.f32 %v123, %v137
    %v140 = vld [vmem:[%s4] sm:$0x1]
    %v142 = vlaneseq
    %v143 = vshrl.u32 %v142, 7
    %v144 = vsub.s32 0, %v143
    %v145 = vrot.slane %v140, %v144
    %v147 = vmul.f32 %v138, %v145
    %v148 = vmul.f32 %v139, %v145
    %v149 = vld [vmem:[%s5] sm:$0x1]
    %v151 = vlaneseq
    %v152 = vshrl.u32 %v151, 7
    %v153 = vsub.s32 0, %v152
    %v154 = vrot.slane %v149, %v153
    %v156 = vadd.f32 %v147, %v154
    %v157 = vadd.f32 %v148, %v154
    %158 = vst.msk [vmem:[%s6] sm:$0xff] %vm46, %v156
    %159 = vst.msk [vmem:[%s6 + $0x8] sm:$0xff] %vm46, %v157
  $region33: #{decoder_block.11} parent=0 // pred_fallthru
    _
  // Predicated region
  $region34: #{decoder_block.11} parent=0 // pred_check
    _
  $region35: #{decoder_block.11} parent=0 // pred_check_branch
    %161 = sbr.rel (0) target = $region37
  $region36: #{decoder_block.11} parent=0 // pred_region
    _
  $region37: #{decoder_block.11} parent=0 // pred_fallthru
    _
  // Predicated region
  $region38: #{decoder_block.11} parent=0 // pred_check
    _
  $region39: #{decoder_block.11} parent=0 // pred_check_branch
    %163 = sbr.rel (0) target = $region41
  $region40: #{decoder_block.11} parent=0 // pred_region
    _
  $region41: #{decoder_block.11} parent=0 // pred_fallthru
    _

// kernel: decoder_block.10
$region0: #{decoder_block.10}
  #allocation0 [shape = 'u32[]', space=smem, size = 0x4, offset = 0x4, fixed_abs, tag = 'smem constant byte address 0x4 - core index']
  #allocation1 [shape = 'u32[144,128]{1,0:T(1,128)}', space=vmem, size = 0x12000, scoped, tag = 'internal scratch']
  #allocation2 [shape = 'f32[4,8,1]{2,1,0:T(8,128)}', space=vmem, size = 0x4000, scoped, tag = 'scratch operand']
  #allocation3 [shape = 'f32[4,8,1]{2,1,0:T(8,128)}', space=vmem, size = 0x4000, scoped, tag = 'scratch operand']
  #allocation4 [shape = 'f32[4,8,8]{2,1,0:T(8,128)}', space=vmem, size = 0x4000, scoped, tag = 'scratch operand']
  %s0 = inlined_call_operand.vmem [shape: bf16[2,8,32], index: 0, kind: input, shape index: {}]
  %s1 = inlined_call_operand.vmem [shape: bf16[2,8,32], index: 1, kind: input, shape index: {}]
  %s2 = inlined_call_operand.vmem [shape: bf16[2,8,32], index: 2, kind: input, shape index: {}]
  %s3 = inlined_call_operand.vmem [shape: bf16[2,8,32], index: 3, kind: output, shape index: {}]
  %s4 = sld [smem:[#allocation0]]
  $region53: #{decoder_block.10} parent=0
    _
  %s6 = ssub.s32 1, %s4
  %s7 = scalar_select 0, %s6, %s4
  loop: start=0, step=1, limit=4
  $region2: #{decoder_block.10} parent=0 // loop_pre_header
    _
  $region3: #{decoder_block.10} parent=0 // loop_header
    %s9 = sphi 0, %s13
    %p10 = scmp.ge.s32.totalorder %s9, 4
    %s16 = sphi 0, %s35
    %s17 = sphi 0, %s31
    %s18 = sphi 0, %s27
    %s19 = sphi 0, %s16
    %s20 = sphi 0, %s17
    %s21 = sphi 0, %s18
    %s22 = sphi 0, %s19
    %s23 = sphi 0, %s20
    %s24 = sphi 0, %s21
    %s40 = sphi 0, %s42
    %s43 = sphi 0, %s40
    %s44 = sphi 0, %s43
    %s60 = sphi 0, %s44
    %s68 = sphi 0, %s70
    %s71 = sphi 0, %s68
    %s72 = sphi 0, %s71
    %s88 = sphi 0, %s72
    %s96 = sphi 0, %s98
    %s99 = sphi 0, %s96
    %s100 = sphi 0, %s99
    %s116 = sphi 0, %s100
    %s124 = sphi 0, %s126
    %s127 = sphi 0, %s124
    %s128 = sphi 0, %s127
    %s144 = sphi 0, %s128
  $region4: #{decoder_block.10} parent=0 // loop_header_branch
    %12 = sbr.rel (%p10) target = $region8
  $region5: #{decoder_block.10} parent=0 // loop_body
    %s14 = ssub.s32 %s9, 1
    %s15 = ssub.s32 %s9, 2
    %s25 = sadd.s32 1, %s18
    %p26 = scmp.ge.s32.totalorder %s25, 1
    %s27 = scalar_select %p26, 0, %s25
    %s28 = sadd.s32 1, %s17
    %s29 = scalar_select %p26, %s28, %s17
    %p30 = scmp.ge.s32.totalorder %s29, 1
    %s31 = scalar_select %p30, 0, %s29
    %s32 = sadd.s32 1, %s16
    %s33 = scalar_select %p30, %s32, %s16
    %p34 = scmp.ge.s32.totalorder %s33, 2
    %s35 = scalar_select %p34, 0, %s33
    %s36 = ssub.s32 %s16, %s35
    %s37 = ssub.s32 %s17, %s31
    %s38 = sor.u32 %s36, %s37
    %p39 = scmp.eq.s32.totalorder %s38, 0
    %s41 = sadd.s32 %s40, 1
    %s42 = scalar_select %p39, %s40, %s41
    %p45 = pneg %p39
    %p46 = scmp.eq.s32.totalorder %s9, 1
    %p47 = por %p45, %p46
    %p48 = scmp.ne.s32.totalorder %s40, %s43
    %p49 = scmp.eq.s32.totalorder %s9, 0
    %p50 = por %p48, %p49
    %p51 = scmp.ne.s32.totalorder %s40, %s43
    %p52 = scmp.eq.s32.totalorder %s14, 1
    %p53 = por %p51, %p52
    %p54 = scmp.ne.s32.totalorder %s43, %s44
    %p55 = scmp.eq.s32.totalorder %s14, 0
    %p56 = por %p54, %p55
    %p57 = scmp.ne.s32.totalorder %s43, %s44
    %p58 = scmp.eq.s32.totalorder %s15, 1
    %p59 = por %p57, %p58
    %p61 = scmp.ne.s32.totalorder %s44, %s60
    %p62 = scmp.eq.s32.totalorder %s15, 0
    %p63 = por %p61, %p62
    %s64 = ssub.s32 %s16, %s35
    %s65 = ssub.s32 %s18, %s27
    %s66 = sor.u32 %s64, %s65
    %p67 = scmp.eq.s32.totalorder %s66, 0
    %s69 = sadd.s32 %s68, 1
    %s70 = scalar_select %p67, %s68, %s69
    %p73 = pneg %p67
    %p74 = scmp.eq.s32.totalorder %s9, 1
    %p75 = por %p73, %p74
    %p76 = scmp.ne.s32.totalorder %s68, %s71
    %p77 = scmp.eq.s32.totalorder %s9, 0
    %p78 = por %p76, %p77
    %p79 = scmp.ne.s32.totalorder %s68, %s71
    %p80 = scmp.eq.s32.totalorder %s14, 1
    %p81 = por %p79, %p80
    %p82 = scmp.ne.s32.totalorder %s71, %s72
    %p83 = scmp.eq.s32.totalorder %s14, 0
    %p84 = por %p82, %p83
    %p85 = scmp.ne.s32.totalorder %s71, %s72
    %p86 = scmp.eq.s32.totalorder %s15, 1
    %p87 = por %p85, %p86
    %p89 = scmp.ne.s32.totalorder %s72, %s88
    %p90 = scmp.eq.s32.totalorder %s15, 0
    %p91 = por %p89, %p90
    %s92 = ssub.s32 %s16, %s35
    %s93 = ssub.s32 %s18, %s27
    %s94 = sor.u32 %s92, %s93
    %p95 = scmp.eq.s32.totalorder %s94, 0
    %s97 = sadd.s32 %s96, 1
    %s98 = scalar_select %p95, %s96, %s97
    %p101 = pneg %p95
    %p102 = scmp.eq.s32.totalorder %s9, 1
    %p103 = por %p101, %p102
    %p104 = scmp.ne.s32.totalorder %s96, %s99
    %p105 = scmp.eq.s32.totalorder %s9, 0
    %p106 = por %p104, %p105
    %p107 = scmp.ne.s32.totalorder %s96, %s99
    %p108 = scmp.eq.s32.totalorder %s14, 1
    %p109 = por %p107, %p108
    %p110 = scmp.ne.s32.totalorder %s99, %s100
    %p111 = scmp.eq.s32.totalorder %s14, 0
    %p112 = por %p110, %p111
    %p113 = scmp.ne.s32.totalorder %s99, %s100
    %p114 = scmp.eq.s32.totalorder %s15, 1
    %p115 = por %p113, %p114
    %p117 = scmp.ne.s32.totalorder %s100, %s116
    %p118 = scmp.eq.s32.totalorder %s15, 0
    %p119 = por %p117, %p118
    %s120 = ssub.s32 %s16, %s35
    %s121 = ssub.s32 %s17, %s31
    %s122 = sor.u32 %s120, %s121
    %p123 = scmp.eq.s32.totalorder %s122, 0
    %s125 = sadd.s32 %s124, 1
    %s126 = scalar_select %p123, %s124, %s125
    %p129 = pneg %p123
    %p130 = scmp.eq.s32.totalorder %s9, 1
    %p131 = por %p129, %p130
    %p132 = scmp.ne.s32.totalorder %s124, %s127
    %p133 = scmp.eq.s32.totalorder %s9, 0
    %p134 = por %p132, %p133
    %p135 = scmp.ne.s32.totalorder %s124, %s127
    %p136 = scmp.eq.s32.totalorder %s14, 1
    %p137 = por %p135, %p136
    %p138 = scmp.ne.s32.totalorder %s127, %s128
    %p139 = scmp.eq.s32.totalorder %s14, 0
    %p140 = por %p138, %p139
    %p141 = scmp.ne.s32.totalorder %s127, %s128
    %p142 = scmp.eq.s32.totalorder %s15, 1
    %p143 = por %p141, %p142
    %p145 = scmp.ne.s32.totalorder %s128, %s144
    %p146 = scmp.eq.s32.totalorder %s15, 0
    %p147 = por %p145, %p146
    %p148 = scmp.le.s32.totalorder 1, %s9
    %p149 = scmp.lt.s32.totalorder %s9, 3
    %p150 = pnand %p148, %p149
    %p151 = pneg %p150
    // Predicated region
    $region9: #{decoder_block.10} parent=5 // pred_check
      _
    $region10: #{decoder_block.10} parent=5 // pred_check_branch
      %153 = sbr.rel (%p150) target = $region12
    $region11: #{decoder_block.10} parent=5 // pred_region
      %s154 = ssub.s32 %s9, 1
    $region12: #{decoder_block.10} parent=5 // pred_fallthru
      _
    %p155 = scmp.lt.s32.totalorder %s9, 2
    // Predicated region
    $region13: #{decoder_block.10} parent=5 // pred_check
      %p156 = pneg %p155
    $region14: #{decoder_block.10} parent=5 // pred_check_branch
      %158 = sbr.rel (%p156) target = $region16
    $region15: #{decoder_block.10} parent=5 // pred_region
      // Predicated region
      $region17: #{decoder_block.10} parent=15 // pred_check
        %p159 = pneg %p50
      $region18: #{decoder_block.10} parent=15 // pred_check_branch
        %161 = sbr.rel (%p159) target = $region20
      $region19: #{decoder_block.10} parent=15 // pred_region
        %p162 = scmp.lt.s32.totalorder %s16, 1
        %s163 = scalar_select %p162, %s16, 1
        %p164 = scmp.lt.s32.totalorder %s17, 0
        %s165 = scalar_select %p164, %s17, 0
        %s166 = sadd.s32 %s165, %s163
        %s167 = smul.addr %s166, 4
        %s168 = scalar_lea.vmem %s0, %s167
      $region20: #{decoder_block.10} parent=15 // pred_fallthru
        _
      // Predicated region
      $region21: #{decoder_block.10} parent=15 // pred_check
        %p169 = pneg %p78
      $region22: #{decoder_block.10} parent=15 // pred_check_branch
        %171 = sbr.rel (%p169) target = $region24
      $region23: #{decoder_block.10} parent=15 // pred_region
        %p172 = scmp.lt.s32.totalorder %s16, 1
        %s173 = scalar_select %p172, %s16, 1
        %p174 = scmp.lt.s32.totalorder %s18, 0
        %s175 = scalar_select %p174, %s18, 0
        %s176 = sadd.s32 %s175, %s173
        %s177 = smul.addr %s176, 4
        %s178 = scalar_lea.vmem %s1, %s177
      $region24: #{decoder_block.10} parent=15 // pred_fallthru
        _
      // Predicated region
      $region25: #{decoder_block.10} parent=15 // pred_check
        %p179 = pneg %p106
      $region26: #{decoder_block.10} parent=15 // pred_check_branch
        %181 = sbr.rel (%p179) target = $region28
      $region27: #{decoder_block.10} parent=15 // pred_region
        %p182 = scmp.lt.s32.totalorder %s16, 1
        %s183 = scalar_select %p182, %s16, 1
        %p184 = scmp.lt.s32.totalorder %s18, 0
        %s185 = scalar_select %p184, %s18, 0
        %s186 = sadd.s32 %s185, %s183
        %s187 = smul.addr %s186, 4
        %s188 = scalar_lea.vmem %s2, %s187
      $region28: #{decoder_block.10} parent=15 // pred_fallthru
        _
    $region16: #{decoder_block.10} parent=5 // pred_fallthru
      _
    %p189 = scmp.le.s32.totalorder 1, %s9
    %p190 = scmp.lt.s32.totalorder %s9, 3
    %p191 = pnand %p189, %p190
    %p192 = pneg %p191
    // Predicated region
    $region29: #{decoder_block.10} parent=5 // pred_check
      _
    $region30: #{decoder_block.10} parent=5 // pred_check_branch
      %194 = sbr.rel (%p191) target = $region32
    $region31: #{decoder_block.10} parent=5 // pred_region
      %s195 = ssub.s32 %s9, 1
      %p196 = scmp.lt.s32.totalorder %s19, 1
      %s197 = scalar_select %p196, %s19, 1
      %p198 = scmp.lt.s32.totalorder %s20, 0
      %s199 = scalar_select %p198, %s20, 0
      %s200 = sadd.s32 %s199, %s197
      %s201 = smul.addr %s200, 4
      %s202 = scalar_lea.vmem %s0, %s201
      %p203 = pneg %p56
      %p204 = pneg %p53
      %p205 = scmp.lt.s32.totalorder %s19, 1
      %s206 = scalar_select %p205, %s19, 1
      %p207 = scmp.lt.s32.totalorder %s21, 0
      %s208 = scalar_select %p207, %s21, 0
      %s209 = sadd.s32 %s208, %s206
      %s210 = smul.addr %s209, 4
      %s211 = scalar_lea.vmem %s1, %s210
      %p212 = pneg %p84
      %p213 = pneg %p81
      %p214 = scmp.lt.s32.totalorder %s19, 1
      %s215 = scalar_select %p214, %s19, 1
      %p216 = scmp.lt.s32.totalorder %s21, 0
      %s217 = scalar_select %p216, %s21, 0
      %s218 = sadd.s32 %s217, %s215
      %s219 = smul.addr %s218, 4
      %s220 = scalar_lea.vmem %s2, %s219
      %p221 = pneg %p112
      %p222 = pneg %p109
      %p223 = pneg %p140
      %p224 = pneg %p137
      %p225 = scmp.lt.s32.totalorder %s19, 1
      %s226 = scalar_select %p225, %s19, 1
      %p227 = scmp.lt.s32.totalorder %s20, 0
      %s228 = scalar_select %p227, %s20, 0
      %s229 = sadd.s32 %s228, %s226
      %s230 = smul.addr %s229, 4
      %s231 = scalar_lea.vmem %s3, %s230
      %p232 = scmp.lt.s32.totalorder %s19, 1
      %s233 = scalar_select %p232, %s19, 1
      %p234 = scmp.lt.s32.totalorder %s20, 0
      %s235 = scalar_select %p234, %s20, 0
      %s236 = sadd.s32 %s235, %s233
      %s237 = smul.addr %s236, 4
      %s238 = scalar_lea.vmem %s0, %s237
      %p239 = scmp.lt.s32.totalorder %s19, 1
      %s240 = scalar_select %p239, %s19, 1
      %p241 = scmp.lt.s32.totalorder %s21, 0
      %s242 = scalar_select %p241, %s21, 0
      %s243 = sadd.s32 %s242, %s240
      %s244 = smul.addr %s243, 4
      %s245 = scalar_lea.vmem %s1, %s244
      %p246 = scmp.lt.s32.totalorder %s19, 1
      %s247 = scalar_select %p246, %s19, 1
      %p248 = scmp.lt.s32.totalorder %s21, 0
      %s249 = scalar_select %p248, %s21, 0
      %s250 = sadd.s32 %s249, %s247
      %s251 = smul.addr %s250, 4
      %s252 = scalar_lea.vmem %s2, %s251
      %p253 = scmp.lt.s32.totalorder %s19, 1
      %s254 = scalar_select %p253, %s19, 1
      %p255 = scmp.lt.s32.totalorder %s20, 0
      %s256 = scalar_select %p255, %s20, 0
      %s257 = sadd.s32 %s256, %s254
      %s258 = smul.addr %s257, 4
      %s259 = scalar_lea.vmem %s3, %s258
      %p261 = scmp.eq.s32.totalorder %s21, 0
      // Predicated region
      $region33: #{decoder_block.10} parent=31 // pred_check
        %p262 = pneg %p261
      $region34: #{decoder_block.10} parent=31 // pred_check_branch
        %264 = sbr.rel (%p262) target = $region36
      $region35: #{decoder_block.10} parent=31 // pred_region
        %vm265 = vcmask 7168
        %266 = vst.msk [vmem:[#allocation2] sm:$0xff] %vm265, -inf
        %267 = vst.msk [vmem:[#allocation2 + $0x8] sm:$0xff] %vm265, -inf
        %268 = vst.msk [vmem:[#allocation2 + $0x10] sm:$0xff] %vm265, -inf
        %269 = vst.msk [vmem:[#allocation2 + $0x18] sm:$0xff] %vm265, -inf
        %270 = vst.msk [vmem:[#allocation3] sm:$0xff] %vm265, 0.0
        %271 = vst.msk [vmem:[#allocation3 + $0x8] sm:$0xff] %vm265, 0.0
        %272 = vst.msk [vmem:[#allocation3 + $0x10] sm:$0xff] %vm265, 0.0
        %273 = vst.msk [vmem:[#allocation3 + $0x18] sm:$0xff] %vm265, 0.0
        %vm274 = vcmask 64512
        %275 = vst.msk [vmem:[#allocation4] sm:$0xff] %vm274, 0.0
        %276 = vst.msk [vmem:[#allocation4 + $0x8] sm:$0xff] %vm274, 0.0
        %277 = vst.msk [vmem:[#allocation4 + $0x10] sm:$0xff] %vm274, 0.0
        %278 = vst.msk [vmem:[#allocation4 + $0x18] sm:$0xff] %vm274, 0.0
      $region36: #{decoder_block.10} parent=31 // pred_fallthru
        _
      %v279 = vld [vmem:[%s238] sm:$0xf]
      %v280 = vld [vmem:[%s245] sm:$0xf]
      %v281 = vld [vmem:[%s252] sm:$0xf]
      %vm282 = vcmask 64512
      %v284 = vsel %vm282, %v279, 0
      %v287 = vsel %vm282, %v280, 0
      %289 = vmatprep.subr.bf16.mxu0 0
      %290 = vmatpush1.bf16.xpose.msra.mxu0 0
      %291 = vmatprep.subr.bf16.mxu0 0
      %292 = vmatpush1.bf16.xpose.msra.mxu0 0
      %293 = vmatprep.subr.bf16.mxu0 0
      %294 = vmatpush1.bf16.xpose.msra.mxu0 0
      %295 = vmatprep.subr.bf16.mxu0 0
      %296 = vmatpush1.bf16.xpose.msra.mxu0 0
      %297 = vmatprep.subr.bf16.mxu0 0
      %298 = vmatpush1.bf16.xpose.msra.mxu0 0
      %299 = vmatprep.subr.bf16.mxu0 0
      %300 = vmatpush1.bf16.xpose.msra.mxu0 0
      %301 = vmatprep.subr.bf16.mxu0 0
      %302 = vmatpush1.bf16.xpose.msra.mxu0 0
      %303 = vmatprep.subr.bf16.mxu0 0
      %304 = vmatpush1.bf16.xpose.msra.mxu0 %v287
      %305 = vmatprep.subr.bf16.mxu0 0
      %306 = vmatpush2.bf16.xpose.msra.mxu0 0
      %307 = vmatprep.subr.bf16.mxu0 0
      %308 = vmatpush2.bf16.xpose.msra.mxu0 0
      %309 = vmatprep.subr.bf16.mxu0 0
      %310 = vmatpush2.bf16.xpose.msra.mxu0 0
      %311 = vmatprep.subr.bf16.mxu0 0
      %312 = vmatpush2.bf16.xpose.msra.mxu0 0
      %313 = vmatprep.subr.bf16.mxu0 0
      %314 = vmatpush2.bf16.xpose.msra.mxu0 0
      %315 = vmatprep.subr.bf16.mxu0 0
      %316 = vmatpush2.bf16.xpose.msra.mxu0 0
      %317 = vmatprep.subr.bf16.mxu0 0
      %318 = vmatpush2.bf16.xpose.msra.mxu0 0
      %319 = vmatprep.subr.bf16.mxu0 0
      %320 = vmatpush2.bf16.xpose.msra.mxu0 0
      %321 = vmatprep.mubr.bf16.mxu0 0
      %322 = vmatmul.mubr.bf16.gmra.mxu0 %v284
      %v323 = vpop.f32.mrf.mxu0
      %v324 = vadd.f32 0.0, %v323
      %v325 = vpop.f32.mrf.mxu0
      %v326 = vpop.f32.mrf.mxu0
      %v327 = vpop.f32.mrf.mxu0
      %328 = vdwg.mxu0
      %v329 = vld [vmem:[#allocation2] sm:$0xff]
      %v330 = vsel %vm282, %v324, -inf
      %331 = vmax.xlane.f32.xlu0 %v330
      %v332 = vpop.xlane.xlu0 %331
      %v333 = vmax.f32 %v329, %v332
      %v334 = vsub.f32 %v329, %v333
      %v335 = vmul.f32 %v334, 1.442695
      %v336 = vpow.pop %v335
      %338 = vset.pattern.permute.xlu0 0
      %339 = vperm.xlu0 %338, %v333
      %v340 = vpop.permute.xlu0 %339
      %v342 = vsub.f32 %v324, %v340
      %v343 = vmul.f32 %v342, 1.442695
      %v344 = vpow.pop %v343
      %v345 = vld [vmem:[#allocation3] sm:$0xff]
      %v346 = vmul.f32 %v336, %v345
      %v347 = vsel %vm282, %v344, 0.0
      %348 = vadd.xlane.f32.xlu0 %v347
      %v349 = vpop.xlane.xlu0 %348
      %v350 = vadd.f32 %v346, %v349
      %vm351 = vcmask 7168
      %352 = vst.msk [vmem:[#allocation3] sm:$0xff] %vm351, %v350
      %v353 = vld [vmem:[#allocation4] sm:$0xff]
      %355 = vset.pattern.permute.xlu0 0
      %356 = vperm.xlu0 %355, %v336
      %v357 = vpop.permute.xlu0 %356
      %v359 = vmul.f32 %v357, %v353
      %v360 = vpack.c.bf16 %v344, %v344
      %v362 = vsel %vm282, %v360, 0
      %vm364 = vcmask 1043456
      %v366 = vsel %vm364, %v281, 0
      %368 = vmatprep.subr.bf16.mxu0 0
      %369 = vmatpush1.bf16.msra.mxu0 0
      %370 = vmatprep.subr.bf16.mxu0 0
      %371 = vmatpush1.bf16.msra.mxu0 0
      %372 = vmatprep.subr.bf16.mxu0 0
      %373 = vmatpush1.bf16.msra.mxu0 0
      %374 = vmatprep.subr.bf16.mxu0 0
      %375 = vmatpush1.bf16.msra.mxu0 0
      %376 = vmatprep.subr.bf16.mxu0 0
      %377 = vmatpush1.bf16.msra.mxu0 0
      %378 = vmatprep.subr.bf16.mxu0 0
      %379 = vmatpush1.bf16.msra.mxu0 0
      %380 = vmatprep.subr.bf16.mxu0 0
      %381 = vmatpush1.bf16.msra.mxu0 0
      %382 = vmatprep.subr.bf16.mxu0 0
      %383 = vmatpush1.bf16.msra.mxu0 %v366
      %384 = vmatprep.subr.bf16.mxu0 0
      %385 = vmatpush2.bf16.msra.mxu0 0
      %386 = vmatprep.subr.bf16.mxu0 0
      %387 = vmatpush2.bf16.msra.mxu0 0
      %388 = vmatprep.subr.bf16.mxu0 0
      %389 = vmatpush2.bf16.msra.mxu0 0
      %390 = vmatprep.subr.bf16.mxu0 0
      %391 = vmatpush2.bf16.msra.mxu0 0
      %392 = vmatprep.subr.bf16.mxu0 0
      %393 = vmatpush2.bf16.msra.mxu0 0
      %394 = vmatprep.subr.bf16.mxu0 0
      %395 = vmatpush2.bf16.msra.mxu0 0
      %396 = vmatprep.subr.bf16.mxu0 0
      %397 = vmatpush2.bf16.msra.mxu0 0
      %398 = vmatprep.subr.bf16.mxu0 0
      %399 = vmatpush2.bf16.msra.mxu0 0
      %400 = vmatprep.mubr.bf16.mxu0 0
      %401 = vmatmul.mubr.bf16.gmra.mxu0 %v362
      %v402 = vpop.f32.mrf.mxu0
      %v403 = vadd.f32 0.0, %v402
      %v404 = vpop.f32.mrf.mxu0
      %v405 = vpop.f32.mrf.mxu0
      %v406 = vpop.f32.mrf.mxu0
      %407 = vdwg.mxu0
      %v408 = vadd.f32 %v359, %v403
      %409 = vst.msk [vmem:[#allocation4] sm:$0xff] %vm282, %v408
      %410 = vst.msk [vmem:[#allocation2] sm:$0xff] %vm351, %v333
      %v412 = vunpack.c.l.b16 %v279
      %v413 = vpack.c.b16 %v412, %v412
      %414 = vrot.lane.b32.xlu0 %v413, 120
      %v415 = vpop.permute.xlu0 %414
      %v417 = vunpack.c.l.b16 %v280
      %v418 = vpack.c.b16 %v417, %v417
      %419 = vrot.lane.b32.xlu0 %v418, 120
      %v420 = vpop.permute.xlu0 %419
      %v422 = vsel %vm282, %v415, 0
      %v425 = vsel %vm282, %v420, 0
      %427 = vmatprep.subr.bf16.mxu0 0
      %428 = vmatpush1.bf16.xpose.msra.mxu0 0
      %429 = vmatprep.subr.bf16.mxu0 0
      %430 = vmatpush1.bf16.xpose.msra.mxu0 0
      %431 = vmatprep.subr.bf16.mxu0 0
      %432 = vmatpush1.bf16.xpose.msra.mxu0 0
      %433 = vmatprep.subr.bf16.mxu0 0
      %434 = vmatpush1.bf16.xpose.msra.mxu0 0
      %435 = vmatprep.subr.bf16.mxu0 0
      %436 = vmatpush1.bf16.xpose.msra.mxu0 0
      %437 = vmatprep.subr.bf16.mxu0 0
      %438 = vmatpush1.bf16.xpose.msra.mxu0 0
      %439 = vmatprep.subr.bf16.mxu0 0
      %440 = vmatpush1.bf16.xpose.msra.mxu0 0
      %441 = vmatprep.subr.bf16.mxu0 0
      %442 = vmatpush1.bf16.xpose.msra.mxu0 %v425
      %443 = vmatprep.subr.bf16.mxu0 0
      %444 = vmatpush2.bf16.xpose.msra.mxu0 0
      %445 = vmatprep.subr.bf16.mxu0 0
      %446 = vmatpush2.bf16.xpose.msra.mxu0 0
      %447 = vmatprep.subr.bf16.mxu0 0
      %448 = vmatpush2.bf16.xpose.msra.mxu0 0
      %449 = vmatprep.subr.bf16.mxu0 0
      %450 = vmatpush2.bf16.xpose.msra.mxu0 0
      %451 = vmatprep.subr.bf16.mxu0 0
      %452 = vmatpush2.bf16.xpose.msra.mxu0 0
      %453 = vmatprep.subr.bf16.mxu0 0
      %454 = vmatpush2.bf16.xpose.msra.mxu0 0
      %455 = vmatprep.subr.bf16.mxu0 0
      %456 = vmatpush2.bf16.xpose.msra.mxu0 0
      %457 = vmatprep.subr.bf16.mxu0 0
      %458 = vmatpush2.bf16.xpose.msra.mxu0 0
      %459 = vmatprep.mubr.bf16.mxu0 0
      %460 = vmatmul.mubr.bf16.gmra.mxu0 %v422
      %v461 = vpop.f32.mrf.mxu0
      %v462 = vadd.f32 0.0, %v461
      %v463 = vpop.f32.mrf.mxu0
      %v464 = vpop.f32.mrf.mxu0
      %v465 = vpop.f32.mrf.mxu0
      %466 = vdwg.mxu0
      %s467 = scalar_lea.vmem [#allocation2], 8
      %v468 = vld [vmem:[%s467] sm:$0xff]
      %v469 = vsel %vm282, %v462, -inf
      %470 = vmax.xlane.f32.xlu0 %v469
      %v471 = vpop.xlane.xlu0 %470
      %v472 = vmax.f32 %v468, %v471
      %v473 = vsub.f32 %v468, %v472
      %v474 = vmul.f32 %v473, 1.442695
      %v475 = vpow.pop %v474
      %477 = vset.pattern.permute.xlu0 0
      %478 = vperm.xlu0 %477, %v472
      %v479 = vpop.permute.xlu0 %478
      %v481 = vsub.f32 %v462, %v479
      %v482 = vmul.f32 %v481, 1.442695
      %v483 = vpow.pop %v482
      %s484 = scalar_lea.vmem [#allocation3], 8
      %v485 = vld [vmem:[%s484] sm:$0xff]
      %v486 = vmul.f32 %v475, %v485
      %v487 = vsel %vm282, %v483, 0.0
      %488 = vadd.xlane.f32.xlu0 %v487
      %v489 = vpop.xlane.xlu0 %488
      %v490 = vadd.f32 %v486, %v489
      %491 = vst.msk [vmem:[%s484] sm:$0xff] %vm351, %v490
      %s492 = scalar_lea.vmem [#allocation4], 8
      %v493 = vld [vmem:[%s492] sm:$0xff]
      %495 = vset.pattern.permute.xlu0 0
      %496 = vperm.xlu0 %495, %v475
      %v497 = vpop.permute.xlu0 %496
      %v499 = vmul.f32 %v497, %v493
      %v500 = vpack.c.bf16 %v483, %v483
      %v502 = vunpack.c.l.b16 %v281
      %v503 = vpack.c.b16 %v502, %v502
      %504 = vrot.lane.b32.xlu0 %v503, 120
      %v505 = vpop.permute.xlu0 %504
      %v507 = vsel %vm282, %v500, 0
      %v510 = vsel %vm364, %v505, 0
      %512 = vmatprep.subr.bf16.mxu0 0
      %513 = vmatpush1.bf16.msra.mxu0 0
      %514 = vmatprep.subr.bf16.mxu0 0
      %515 = vmatpush1.bf16.msra.mxu0 0
      %516 = vmatprep.subr.bf16.mxu0 0
      %517 = vmatpush1.bf16.msra.mxu0 0
      %518 = vmatprep.subr.bf16.mxu0 0
      %519 = vmatpush1.bf16.msra.mxu0 0
      %520 = vmatprep.subr.bf16.mxu0 0
      %521 = vmatpush1.bf16.msra.mxu0 0
      %522 = vmatprep.subr.bf16.mxu0 0
      %523 = vmatpush1.bf16.msra.mxu0 0
      %524 = vmatprep.subr.bf16.mxu0 0
      %525 = vmatpush1.bf16.msra.mxu0 0
      %526 = vmatprep.subr.bf16.mxu0 0
      %527 = vmatpush1.bf16.msra.mxu0 %v510
      %528 = vmatprep.subr.bf16.mxu0 0
      %529 = vmatpush2.bf16.msra.mxu0 0
      %530 = vmatprep.subr.bf16.mxu0 0
      %531 = vmatpush2.bf16.msra.mxu0 0
      %532 = vmatprep.subr.bf16.mxu0 0
      %533 = vmatpush2.bf16.msra.mxu0 0
      %534 = vmatprep.subr.bf16.mxu0 0
      %535 = vmatpush2.bf16.msra.mxu0 0
      %536 = vmatprep.subr.bf16.mxu0 0
      %537 = vmatpush2.bf16.msra.mxu0 0
      %538 = vmatprep.subr.bf16.mxu0 0
      %539 = vmatpush2.bf16.msra.mxu0 0
      %540 = vmatprep.subr.bf16.mxu0 0
      %541 = vmatpush2.bf16.msra.mxu0 0
      %542 = vmatprep.subr.bf16.mxu0 0
      %543 = vmatpush2.bf16.msra.mxu0 0
      %544 = vmatprep.mubr.bf16.mxu0 0
      %545 = vmatmul.mubr.bf16.gmra.mxu0 %v507
      %v546 = vpop.f32.mrf.mxu0
      %v547 = vadd.f32 0.0, %v546
      %v548 = vpop.f32.mrf.mxu0
      %v549 = vpop.f32.mrf.mxu0
      %v550 = vpop.f32.mrf.mxu0
      %551 = vdwg.mxu0
      %v552 = vadd.f32 %v499, %v547
      %553 = vst.msk [vmem:[%s492] sm:$0xff] %vm282, %v552
      %554 = vst.msk [vmem:[%s467] sm:$0xff] %vm351, %v472
      %555 = vrot.lane.b32.xlu0 %v413, 112
      %v556 = vpop.permute.xlu0 %555
      %557 = vrot.lane.b32.xlu0 %v418, 112
      %v558 = vpop.permute.xlu0 %557
      %v560 = vsel %vm282, %v556, 0
      %v563 = vsel %vm282, %v558, 0
      %565 = vmatprep.subr.bf16.mxu0 0
      %566 = vmatpush1.bf16.xpose.msra.mxu0 0
      %567 = vmatprep.subr.bf16.mxu0 0
      %568 = vmatpush1.bf16.xpose.msra.mxu0 0
      %569 = vmatprep.subr.bf16.mxu0 0
      %570 = vmatpush1.bf16.xpose.msra.mxu0 0
      %571 = vmatprep.subr.bf16.mxu0 0
      %572 = vmatpush1.bf16.xpose.msra.mxu0 0
      %573 = vmatprep.subr.bf16.mxu0 0
      %574 = vmatpush1.bf16.xpose.msra.mxu0 0
      %575 = vmatprep.subr.bf16.mxu0 0
      %576 = vmatpush1.bf16.xpose.msra.mxu0 0
      %577 = vmatprep.subr.bf16.mxu0 0
      %578 = vmatpush1.bf16.xpose.msra.mxu0 0
      %579 = vmatprep.subr.bf16.mxu0 0
      %580 = vmatpush1.bf16.xpose.msra.mxu0 %v563
      %581 = vmatprep.subr.bf16.mxu0 0
      %582 = vmatpush2.bf16.xpose.msra.mxu0 0
      %583 = vmatprep.subr.bf16.mxu0 0
      %584 = vmatpush2.bf16.xpose.msra.mxu0 0
      %585 = vmatprep.subr.bf16.mxu0 0
      %586 = vmatpush2.bf16.xpose.msra.mxu0 0
      %587 = vmatprep.subr.bf16.mxu0 0
      %588 = vmatpush2.bf16.xpose.msra.mxu0 0
      %589 = vmatprep.subr.bf16.mxu0 0
      %590 = vmatpush2.bf16.xpose.msra.mxu0 0
      %591 = vmatprep.subr.bf16.mxu0 0
      %592 = vmatpush2.bf16.xpose.msra.mxu0 0
      %593 = vmatprep.subr.bf16.mxu0 0
      %594 = vmatpush2.bf16.xpose.msra.mxu0 0
      %595 = vmatprep.subr.bf16.mxu0 0
      %596 = vmatpush2.bf16.xpose.msra.mxu0 0
      %597 = vmatprep.mubr.bf16.mxu0 0
      %598 = vmatmul.mubr.bf16.gmra.mxu0 %v560
      %v599 = vpop.f32.mrf.mxu0
      %v600 = vadd.f32 0.0, %v599
      %v601 = vpop.f32.mrf.mxu0
      %v602 = vpop.f32.mrf.mxu0
      %v603 = vpop.f32.mrf.mxu0
      %604 = vdwg.mxu0
      %s605 = scalar_lea.vmem [#allocation2], 16
      %v606 = vld [vmem:[%s605] sm:$0xff]
      %v607 = vsel %vm282, %v600, -inf
      %608 = vmax.xlane.f32.xlu0 %v607
      %v609 = vpop.xlane.xlu0 %608
      %v610 = vmax.f32 %v606, %v609
      %v611 = vsub.f32 %v606, %v610
      %v612 = vmul.f32 %v611, 1.442695
      %v613 = vpow.pop %v612
      %615 = vset.pattern.permute.xlu0 0
      %616 = vperm.xlu0 %615, %v610
      %v617 = vpop.permute.xlu0 %616
      %v619 = vsub.f32 %v600, %v617
      %v620 = vmul.f32 %v619, 1.442695
      %v621 = vpow.pop %v620
      %s622 = scalar_lea.vmem [#allocation3], 16
      %v623 = vld [vmem:[%s622] sm:$0xff]
      %v624 = vmul.f32 %v613, %v623
      %v625 = vsel %vm282, %v621, 0.0
      %626 = vadd.xlane.f32.xlu0 %v625
      %v627 = vpop.xlane.xlu0 %626
      %v628 = vadd.f32 %v624, %v627
      %629 = vst.msk [vmem:[%s622] sm:$0xff] %vm351, %v628
      %s630 = scalar_lea.vmem [#allocation4], 16
      %v631 = vld [vmem:[%s630] sm:$0xff]
      %633 = vset.pattern.permute.xlu0 0
      %634 = vperm.xlu0 %633, %v613
      %v635 = vpop.permute.xlu0 %634
      %v637 = vmul.f32 %v635, %v631
      %v638 = vpack.c.bf16 %v621, %v621
      %639 = vrot.lane.b32.xlu0 %v503, 112
      %v640 = vpop.permute.xlu0 %639
      %v642 = vsel %vm282, %v638, 0
      %v645 = vsel %vm364, %v640, 0
      %647 = vmatprep.subr.bf16.mxu0 0
      %648 = vmatpush1.bf16.msra.mxu0 0
      %649 = vmatprep.subr.bf16.mxu0 0
      %650 = vmatpush1.bf16.msra.mxu0 0
      %651 = vmatprep.subr.bf16.mxu0 0
      %652 = vmatpush1.bf16.msra.mxu0 0
      %653 = vmatprep.subr.bf16.mxu0 0
      %654 = vmatpush1.bf16.msra.mxu0 0
      %655 = vmatprep.subr.bf16.mxu0 0
      %656 = vmatpush1.bf16.msra.mxu0 0
      %657 = vmatprep.subr.bf16.mxu0 0
      %658 = vmatpush1.bf16.msra.mxu0 0
      %659 = vmatprep.subr.bf16.mxu0 0
      %660 = vmatpush1.bf16.msra.mxu0 0
      %661 = vmatprep.subr.bf16.mxu0 0
      %662 = vmatpush1.bf16.msra.mxu0 %v645
      %663 = vmatprep.subr.bf16.mxu0 0
      %664 = vmatpush2.bf16.msra.mxu0 0
      %665 = vmatprep.subr.bf16.mxu0 0
      %666 = vmatpush2.bf16.msra.mxu0 0
      %667 = vmatprep.subr.bf16.mxu0 0
      %668 = vmatpush2.bf16.msra.mxu0 0
      %669 = vmatprep.subr.bf16.mxu0 0
      %670 = vmatpush2.bf16.msra.mxu0 0
      %671 = vmatprep.subr.bf16.mxu0 0
      %672 = vmatpush2.bf16.msra.mxu0 0
      %673 = vmatprep.subr.bf16.mxu0 0
      %674 = vmatpush2.bf16.msra.mxu0 0
      %675 = vmatprep.subr.bf16.mxu0 0
      %676 = vmatpush2.bf16.msra.mxu0 0
      %677 = vmatprep.subr.bf16.mxu0 0
      %678 = vmatpush2.bf16.msra.mxu0 0
      %679 = vmatprep.mubr.bf16.mxu0 0
      %680 = vmatmul.mubr.bf16.gmra.mxu0 %v642
      %v681 = vpop.f32.mrf.mxu0
      %v682 = vadd.f32 0.0, %v681
      %v683 = vpop.f32.mrf.mxu0
      %v684 = vpop.f32.mrf.mxu0
      %v685 = vpop.f32.mrf.mxu0
      %686 = vdwg.mxu0
      %v687 = vadd.f32 %v637, %v682
      %688 = vst.msk [vmem:[%s630] sm:$0xff] %vm282, %v687
      %689 = vst.msk [vmem:[%s605] sm:$0xff] %vm351, %v610
      %690 = vrot.lane.b32.xlu0 %v413, 104
      %v691 = vpop.permute.xlu0 %690
      %692 = vrot.lane.b32.xlu0 %v418, 104
      %v693 = vpop.permute.xlu0 %692
      %v695 = vsel %vm282, %v691, 0
      %v698 = vsel %vm282, %v693, 0
      %700 = vmatprep.subr.bf16.mxu0 0
      %701 = vmatpush1.bf16.xpose.msra.mxu0 0
      %702 = vmatprep.subr.bf16.mxu0 0
      %703 = vmatpush1.bf16.xpose.msra.mxu0 0
      %704 = vmatprep.subr.bf16.mxu0 0
      %705 = vmatpush1.bf16.xpose.msra.mxu0 0
      %706 = vmatprep.subr.bf16.mxu0 0
      %707 = vmatpush1.bf16.xpose.msra.mxu0 0
      %708 = vmatprep.subr.bf16.mxu0 0
      %709 = vmatpush1.bf16.xpose.msra.mxu0 0
      %710 = vmatprep.subr.bf16.mxu0 0
      %711 = vmatpush1.bf16.xpose.msra.mxu0 0
      %712 = vmatprep.subr.bf16.mxu0 0
      %713 = vmatpush1.bf16.xpose.msra.mxu0 0
      %714 = vmatprep.subr.bf16.mxu0 0
      %715 = vmatpush1.bf16.xpose.msra.mxu0 %v698
      %716 = vmatprep.subr.bf16.mxu0 0
      %717 = vmatpush2.bf16.xpose.msra.mxu0 0
      %718 = vmatprep.subr.bf16.mxu0 0
      %719 = vmatpush2.bf16.xpose.msra.mxu0 0
      %720 = vmatprep.subr.bf16.mxu0 0
      %721 = vmatpush2.bf16.xpose.msra.mxu0 0
      %722 = vmatprep.subr.bf16.mxu0 0
      %723 = vmatpush2.bf16.xpose.msra.mxu0 0
      %724 = vmatprep.subr.bf16.mxu0 0
      %725 = vmatpush2.bf16.xpose.msra.mxu0 0
      %726 = vmatprep.subr.bf16.mxu0 0
      %727 = vmatpush2.bf16.xpose.msra.mxu0 0
      %728 = vmatprep.subr.bf16.mxu0 0
      %729 = vmatpush2.bf16.xpose.msra.mxu0 0
      %730 = vmatprep.subr.bf16.mxu0 0
      %731 = vmatpush2.bf16.xpose.msra.mxu0 0
      %732 = vmatprep.mubr.bf16.mxu0 0
      %733 = vmatmul.mubr.bf16.gmra.mxu0 %v695
      %v734 = vpop.f32.mrf.mxu0
      %v735 = vadd.f32 0.0, %v734
      %v736 = vpop.f32.mrf.mxu0
      %v737 = vpop.f32.mrf.mxu0
      %v738 = vpop.f32.mrf.mxu0
      %739 = vdwg.mxu0
      %s740 = scalar_lea.vmem [#allocation2], 24
      %v741 = vld [vmem:[%s740] sm:$0xff]
      %v742 = vsel %vm282, %v735, -inf
      %743 = vmax.xlane.f32.xlu0 %v742
      %v744 = vpop.xlane.xlu0 %743
      %v745 = vmax.f32 %v741, %v744
      %v746 = vsub.f32 %v741, %v745
      %v747 = vmul.f32 %v746, 1.442695
      %v748 = vpow.pop %v747
      %750 = vset.pattern.permute.xlu0 0
      %751 = vperm.xlu0 %750, %v745
      %v752 = vpop.permute.xlu0 %751
      %v754 = vsub.f32 %v735, %v752
      %v755 = vmul.f32 %v754, 1.442695
      %v756 = vpow.pop %v755
      %s757 = scalar_lea.vmem [#allocation3], 24
      %v758 = vld [vmem:[%s757] sm:$0xff]
      %v759 = vmul.f32 %v748, %v758
      %v760 = vsel %vm282, %v756, 0.0
      %761 = vadd.xlane.f32.xlu0 %v760
      %v762 = vpop.xlane.xlu0 %761
      %v763 = vadd.f32 %v759, %v762
      %764 = vst.msk [vmem:[%s757] sm:$0xff] %vm351, %v763
      %s765 = scalar_lea.vmem [#allocation4], 24
      %v766 = vld [vmem:[%s765] sm:$0xff]
      %768 = vset.pattern.permute.xlu0 0
      %769 = vperm.xlu0 %768, %v748
      %v770 = vpop.permute.xlu0 %769
      %v772 = vmul.f32 %v770, %v766
      %v773 = vpack.c.bf16 %v756, %v756
      %774 = vrot.lane.b32.xlu0 %v503, 104
      %v775 = vpop.permute.xlu0 %774
      %v777 = vsel %vm282, %v773, 0
      %v780 = vsel %vm364, %v775, 0
      %782 = vmatprep.subr.bf16.mxu0 0
      %783 = vmatpush1.bf16.msra.mxu0 0
      %784 = vmatprep.subr.bf16.mxu0 0
      %785 = vmatpush1.bf16.msra.mxu0 0
      %786 = vmatprep.subr.bf16.mxu0 0
      %787 = vmatpush1.bf16.msra.mxu0 0
      %788 = vmatprep.subr.bf16.mxu0 0
      %789 = vmatpush1.bf16.msra.mxu0 0
      %790 = vmatprep.subr.bf16.mxu0 0
      %791 = vmatpush1.bf16.msra.mxu0 0
      %792 = vmatprep.subr.bf16.mxu0 0
      %793 = vmatpush1.bf16.msra.mxu0 0
      %794 = vmatprep.subr.bf16.mxu0 0
      %795 = vmatpush1.bf16.msra.mxu0 0
      %796 = vmatprep.subr.bf16.mxu0 0
      %797 = vmatpush1.bf16.msra.mxu0 %v780
      %798 = vmatprep.subr.bf16.mxu0 0
      %799 = vmatpush2.bf16.msra.mxu0 0
      %800 = vmatprep.subr.bf16.mxu0 0
      %801 = vmatpush2.bf16.msra.mxu0 0
      %802 = vmatprep.subr.bf16.mxu0 0
      %803 = vmatpush2.bf16.msra.mxu0 0
      %804 = vmatprep.subr.bf16.mxu0 0
      %805 = vmatpush2.bf16.msra.mxu0 0
      %806 = vmatprep.subr.bf16.mxu0 0
      %807 = vmatpush2.bf16.msra.mxu0 0
      %808 = vmatprep.subr.bf16.mxu0 0
      %809 = vmatpush2.bf16.msra.mxu0 0
      %810 = vmatprep.subr.bf16.mxu0 0
      %811 = vmatpush2.bf16.msra.mxu0 0
      %812 = vmatprep.subr.bf16.mxu0 0
      %813 = vmatpush2.bf16.msra.mxu0 0
      %814 = vmatprep.mubr.bf16.mxu0 0
      %815 = vmatmul.mubr.bf16.gmra.mxu0 %v777
      %v816 = vpop.f32.mrf.mxu0
      %v817 = vadd.f32 0.0, %v816
      %v818 = vpop.f32.mrf.mxu0
      %v819 = vpop.f32.mrf.mxu0
      %v820 = vpop.f32.mrf.mxu0
      %821 = vdwg.mxu0
      %v822 = vadd.f32 %v772, %v817
      %823 = vst.msk [vmem:[%s765] sm:$0xff] %vm282, %v822
      %824 = vst.msk [vmem:[%s740] sm:$0xff] %vm351, %v745
      // Predicated region
      $region37: #{decoder_block.10} parent=31 // pred_check
        %p825 = pneg %p261
      $region38: #{decoder_block.10} parent=31 // pred_check_branch
        %827 = sbr.rel (%p825) target = $region40
      $region39: #{decoder_block.10} parent=31 // pred_region
        %v828 = vld [vmem:[#allocation4] sm:$0xff]
        %v829 = vld [vmem:[#allocation3] sm:$0xff]
        %831 = vset.pattern.permute.xlu0 0
        %832 = vperm.xlu0 %831, %v829
        %v833 = vpop.permute.xlu0 %832
        %v835 = vrcp.pop %v833
        %v836 = vmul.f32 %v828, %v835
        %v837 = vpack.c.bf16 %v836, %v836
        %vm838 = vcmask 60416
        %839 = vst.msk [vmem:[%s259] sm:$0xf] %vm838, %v837
        %v840 = vld [vmem:[%s492] sm:$0xff]
        %v841 = vld [vmem:[%s484] sm:$0xff]
        %843 = vset.pattern.permute.xlu0 0
        %844 = vperm.xlu0 %843, %v841
        %v845 = vpop.permute.xlu0 %844
        %v847 = vrcp.pop %v845
        %v848 = vmul.f32 %v840, %v847
        %v849 = vpack.c.bf16 %v848, %v848
        %v851 = vunpack.c.l.b16 %v849
        %v852 = vpack.c.b16 %v851, %v851
        %853 = vrot.lane.b32.xlu0 %v852, 8
        %v854 = vpop.permute.xlu0 %853
        %vm856 = vcmask 126016
        %857 = vst.msk [vmem:[%s259] sm:$0xf] %vm856, %v854
        %v858 = vld [vmem:[%s630] sm:$0xff]
        %v859 = vld [vmem:[%s622] sm:$0xff]
        %861 = vset.pattern.permute.xlu0 0
        %862 = vperm.xlu0 %861, %v859
        %v863 = vpop.permute.xlu0 %862
        %v865 = vrcp.pop %v863
        %v866 = vmul.f32 %v858, %v865
        %v867 = vpack.c.bf16 %v866, %v866
        %v869 = vunpack.c.l.b16 %v867
        %v870 = vpack.c.b16 %v869, %v869
        %871 = vrot.lane.b32.xlu0 %v870, 16
        %v872 = vpop.permute.xlu0 %871
        %vm874 = vcmask 191616
        %875 = vst.msk [vmem:[%s259] sm:$0xf] %vm874, %v872
        %v876 = vld [vmem:[%s765] sm:$0xff]
        %v877 = vld [vmem:[%s757] sm:$0xff]
        %879 = vset.pattern.permute.xlu0 0
        %880 = vperm.xlu0 %879, %v877
        %v881 = vpop.permute.xlu0 %880
        %v883 = vrcp.pop %v881
        %v884 = vmul.f32 %v876, %v883
        %v885 = vpack.c.bf16 %v884, %v884
        %v887 = vunpack.c.l.b16 %v885
        %v888 = vpack.c.b16 %v887, %v887
        %889 = vrot.lane.b32.xlu0 %v888, 24
        %v890 = vpop.permute.xlu0 %889
        %vm892 = vcmask 257216
        %893 = vst.msk [vmem:[%s259] sm:$0xf] %vm892, %v890
      $region40: #{decoder_block.10} parent=31 // pred_fallthru
        _
      %p894 = scmp.lt.s32.totalorder %s19, 1
      %s895 = scalar_select %p894, %s19, 1
      %p896 = scmp.lt.s32.totalorder %s20, 0
      %s897 = scalar_select %p896, %s20, 0
      %s898 = sadd.s32 %s897, %s895
      %s899 = smul.addr %s898, 4
      %s900 = scalar_lea.vmem %s3, %s899
      // Predicated region
      $region41: #{decoder_block.10} parent=31 // pred_check
        %p901 = pneg %p137
      $region42: #{decoder_block.10} parent=31 // pred_check_branch
        %903 = sbr.rel (%p901) target = $region44
      $region43: #{decoder_block.10} parent=31 // pred_region
        _
      $region44: #{decoder_block.10} parent=31 // pred_fallthru
        _
    $region32: #{decoder_block.10} parent=5 // pred_fallthru
      _
    %p904 = scmp.le.s32.totalorder 2, %s9
    // Predicated region
    $region45: #{decoder_block.10} parent=5 // pred_check
      %p905 = pneg %p904
    $region46: #{decoder_block.10} parent=5 // pred_check_branch
      %907 = sbr.rel (%p905) target = $region48
    $region47: #{decoder_block.10} parent=5 // pred_region
      %s908 = ssub.s32 %s9, 2
      // Predicated region
      $region49: #{decoder_block.10} parent=47 // pred_check
        %p909 = pneg %p143
      $region50: #{decoder_block.10} parent=47 // pred_check_branch
        %911 = sbr.rel (%p909) target = $region52
      $region51: #{decoder_block.10} parent=47 // pred_region
        %p912 = scmp.lt.s32.totalorder %s22, 1
        %s913 = scalar_select %p912, %s22, 1
        %p914 = scmp.lt.s32.totalorder %s23, 0
        %s915 = scalar_select %p914, %s23, 0
        %s916 = sadd.s32 %s915, %s913
        %s917 = smul.addr %s916, 4
        %s918 = scalar_lea.vmem %s3, %s917
      $region52: #{decoder_block.10} parent=47 // pred_fallthru
        _
    $region48: #{decoder_block.10} parent=5 // pred_fallthru
      _
  $region6: #{decoder_block.10} parent=0 // loop_footer
    %s13 = sadd.s32 1, %s9
  $region7: #{decoder_block.10} parent=0 // loop_footer_branch
    %8 = sbr.rel target = $region3
  $region8: #{decoder_block.10} parent=0 // loop_exit
    _

// kernel: decoder_block.12
$region0: #{decoder_block.12}
  #allocation0 [shape = 'u32[]', space=smem, size = 0x4, offset = 0x4, fixed_abs, tag = 'smem constant byte address 0x4 - core index']
  #allocation1 [shape = 'u32[144,128]{1,0:T(1,128)}', space=vmem, size = 0x12000, scoped, tag = 'internal scratch']
  #allocation2 [shape = 'f32[16,32]{1,0:T(8,128)}', space=vmem, size = 0x2000, scoped, tag = 'scratch operand']
  %s0 = inlined_call_operand.vmem [shape: f32[16,32], index: 0, kind: input, shape index: {}]
  %s1 = inlined_call_operand.vmem [shape: f32[32,32], index: 1, kind: input, shape index: {}]
  %s2 = inlined_call_operand.vmem [shape: f32[1,32], index: 2, kind: input, shape index: {}]
  %s3 = inlined_call_operand.vmem [shape: bf16[16,32], index: 3, kind: output, shape index: {}]
  %s4 = sld [smem:[#allocation0]]
  $region30: #{decoder_block.12} parent=0
    _
  %s6 = ssub.s32 1, %s4
  %s7 = scalar_select 0, %s6, %s4
  // Predicated region
  $region2: #{decoder_block.12} parent=0 // pred_check
    _
  $region3: #{decoder_block.12} parent=0 // pred_check_branch
    %9 = sbr.rel (0) target = $region5
  $region4: #{decoder_block.12} parent=0 // pred_region
    _
  $region5: #{decoder_block.12} parent=0 // pred_fallthru
    _
  // Predicated region
  $region6: #{decoder_block.12} parent=0 // pred_check
    _
  $region7: #{decoder_block.12} parent=0 // pred_check_branch
    %11 = sbr.rel (0) target = $region9
  $region8: #{decoder_block.12} parent=0 // pred_region
    _
  $region9: #{decoder_block.12} parent=0 // pred_fallthru
    _
  // Predicated region
  $region10: #{decoder_block.12} parent=0 // pred_check
    _
  $region11: #{decoder_block.12} parent=0 // pred_check_branch
    %13 = sbr.rel (0) target = $region13
  $region12: #{decoder_block.12} parent=0 // pred_region
    _
  $region13: #{decoder_block.12} parent=0 // pred_fallthru
    _
  %p15 = scmp.eq.s32.totalorder 0, 0
  // Predicated region
  $region14: #{decoder_block.12} parent=0 // pred_check
    %p16 = pneg %p15
  $region15: #{decoder_block.12} parent=0 // pred_check_branch
    %18 = sbr.rel (%p16) target = $region17
  $region16: #{decoder_block.12} parent=0 // pred_region
    %vm19 = vcmask 261120
    %20 = vst.msk [vmem:[#allocation2] sm:$0xff] %vm19, 0.0
    %21 = vst.msk [vmem:[#allocation2 + $0x8] sm:$0xff] %vm19, 0.0
  $region17: #{decoder_block.12} parent=0 // pred_fallthru
    _
  %v22 = vld [vmem:[#allocation2] sm:$0xff]
  %v23 = vld [vmem:[#allocation2 + $0x8] sm:$0xff]
  %v24 = vld [vmem:[%s0] sm:$0xff]
  %v25 = vld [vmem:[%s0 + $0x8] sm:$0xff]
  %v26 = vpack.c.bf16 %v25, %v24
  %v27 = vld [vmem:[%s1] sm:$0xff]
  %v28 = vld [vmem:[%s1 + $0x8] sm:$0xff]
  %v29 = vld [vmem:[%s1 + $0x10] sm:$0xff]
  %v30 = vld [vmem:[%s1 + $0x18] sm:$0xff]
  %v31 = vpack.c.bf16 %v28, %v27
  %v32 = vpack.c.bf16 %v30, %v29
  %vm33 = vcmask 261120
  %v35 = vsel %vm33, %v26, 0
  %37 = vmatprep.subr.bf16.mxu0 0
  %38 = vmatpush1.bf16.msra.mxu0 0
  %39 = vmatprep.subr.bf16.mxu0 0
  %40 = vmatpush1.bf16.msra.mxu0 0
  %41 = vmatprep.subr.bf16.mxu0 0
  %42 = vmatpush1.bf16.msra.mxu0 0
  %43 = vmatprep.subr.bf16.mxu0 0
  %44 = vmatpush1.bf16.msra.mxu0 0
  %45 = vmatprep.subr.bf16.mxu0 0
  %46 = vmatpush1.bf16.msra.mxu0 0
  %47 = vmatprep.subr.bf16.mxu0 0
  %48 = vmatpush1.bf16.msra.mxu0 0
  %49 = vmatprep.subr.bf16.mxu0 0
  %50 = vmatpush1.bf16.msra.mxu0 %v32
  %51 = vmatprep.subr.bf16.mxu0 0
  %52 = vmatpush1.bf16.msra.mxu0 %v31
  %53 = vmatprep.subr.bf16.mxu0 0
  %54 = vmatpush2.bf16.msra.mxu0 0
  %55 = vmatprep.subr.bf16.mxu0 0
  %56 = vmatpush2.bf16.msra.mxu0 0
  %57 = vmatprep.subr.bf16.mxu0 0
  %58 = vmatpush2.bf16.msra.mxu0 0
  %59 = vmatprep.subr.bf16.mxu0 0
  %60 = vmatpush2.bf16.msra.mxu0 0
  %61 = vmatprep.subr.bf16.mxu0 0
  %62 = vmatpush2.bf16.msra.mxu0 0
  %63 = vmatprep.subr.bf16.mxu0 0
  %64 = vmatpush2.bf16.msra.mxu0 0
  %65 = vmatprep.subr.bf16.mxu0 0
  %66 = vmatpush2.bf16.msra.mxu0 0
  %67 = vmatprep.subr.bf16.mxu0 0
  %68 = vmatpush2.bf16.msra.mxu0 0
  %69 = vmatprep.mubr.bf16.mxu0 0
  %70 = vmatmul.mubr.bf16.gmra.mxu0 %v35
  %v71 = vpop.f32.mrf.mxu0
  %v72 = vadd.f32 0.0, %v71
  %v73 = vpop.f32.mrf.mxu0
  %v74 = vpop.f32.mrf.mxu0
  %v75 = vadd.f32 0.0, %v74
  %v76 = vpop.f32.mrf.mxu0
  %77 = vdwg.mxu0
  %v78 = vadd.f32 %v22, %v72
  %v79 = vadd.f32 %v23, %v75
  %80 = vst.msk [vmem:[#allocation2] sm:$0xff] %vm33, %v78
  %81 = vst.msk [vmem:[#allocation2 + $0x8] sm:$0xff] %vm33, %v79
  // Predicated region
  $region18: #{decoder_block.12} parent=0 // pred_check
    %p82 = pneg %p15
  $region19: #{decoder_block.12} parent=0 // pred_check_branch
    %84 = sbr.rel (%p82) target = $region21
  $region20: #{decoder_block.12} parent=0 // pred_region
    %v85 = vld [vmem:[#allocation2] sm:$0xff]
    %v86 = vld [vmem:[#allocation2 + $0x8] sm:$0xff]
    %v87 = vld [vmem:[%s2] sm:$0x1]
    %v89 = vlaneseq
    %v90 = vshrl.u32 %v89, 7
    %v91 = vsub.s32 0, %v90
    %v92 = vrot.slane %v87, %v91
    %v94 = vadd.f32 %v85, %v92
    %v95 = vadd.f32 %v86, %v92
    %v96 = vpack.c.bf16 %v95, %v94
    %v98 = vunpack.c.l.b16 %v96
    %v99 = vunpack.c.h.b16 %v96
    %v100 = vpack.c.b16 %v98, %v98
    %v101 = vpack.c.b16 %v99, %v99
    %vm104 = vcmask 257024
    %105 = vst.msk [vmem:[%s3] sm:$0xf] %vm104, %v100
    %106 = vst.msk [vmem:[%s3 + $0x4] sm:$0xf] %vm104, %v101
  $region21: #{decoder_block.12} parent=0 // pred_fallthru
    _
  // Predicated region
  $region22: #{decoder_block.12} parent=0 // pred_check
    _
  $region23: #{decoder_block.12} parent=0 // pred_check_branch
    %108 = sbr.rel (0) target = $region25
  $region24: #{decoder_block.12} parent=0 // pred_region
    _
  $region25: #{decoder_block.12} parent=0 // pred_fallthru
    _
  // Predicated region
  $region26: #{decoder_block.12} parent=0 // pred_check
    _
  $region27: #{decoder_block.12} parent=0 // pred_check_branch
    %110 = sbr.rel (0) target = $region29
  $region28: #{decoder_block.12} parent=0 // pred_region
    _
  $region29: #{decoder_block.12} parent=0 // pred_fallthru
    _

// kernel: decoder_block.16
$region0: #{decoder_block.16}
  #allocation0 [shape = 'u32[]', space=smem, size = 0x4, offset = 0x4, fixed_abs, tag = 'smem constant byte address 0x4 - core index']
  #allocation1 [shape = 'u32[144,128]{1,0:T(1,128)}', space=vmem, size = 0x12000, scoped, tag = 'internal scratch']
  #allocation2 [shape = 'f32[16,4]{1,0:T(8,128)}', space=vmem, size = 0x2000, scoped, tag = 'scratch operand']
  %s0 = inlined_call_operand.vmem [shape: f32[16,32], index: 0, kind: input, shape index: {}]
  %s1 = inlined_call_operand.vmem [shape: f32[32,4], index: 1, kind: input, shape index: {}]
  %s2 = inlined_call_operand.vmem [shape: f32[1,4], index: 2, kind: input, shape index: {}]
  %s3 = inlined_call_operand.vmem [shape: f32[16,4], index: 3, kind: output, shape index: {}]
  %s4 = sld [smem:[#allocation0]]
  $region30: #{decoder_block.16} parent=0
    _
  %s6 = ssub.s32 1, %s4
  %s7 = scalar_select 0, %s6, %s4
  // Predicated region
  $region2: #{decoder_block.16} parent=0 // pred_check
    _
  $region3: #{decoder_block.16} parent=0 // pred_check_branch
    %9 = sbr.rel (0) target = $region5
  $region4: #{decoder_block.16} parent=0 // pred_region
    _
  $region5: #{decoder_block.16} parent=0 // pred_fallthru
    _
  // Predicated region
  $region6: #{decoder_block.16} parent=0 // pred_check
    _
  $region7: #{decoder_block.16} parent=0 // pred_check_branch
    %11 = sbr.rel (0) target = $region9
  $region8: #{decoder_block.16} parent=0 // pred_region
    _
  $region9: #{decoder_block.16} parent=0 // pred_fallthru
    _
  // Predicated region
  $region10: #{decoder_block.16} parent=0 // pred_check
    _
  $region11: #{decoder_block.16} parent=0 // pred_check_branch
    %13 = sbr.rel (0) target = $region13
  $region12: #{decoder_block.16} parent=0 // pred_region
    _
  $region13: #{decoder_block.16} parent=0 // pred_fallthru
    _
  %p15 = scmp.eq.s32.totalorder 0, 0
  // Predicated region
  $region14: #{decoder_block.16} parent=0 // pred_check
    %p16 = pneg %p15
  $region15: #{decoder_block.16} parent=0 // pred_check_branch
    %18 = sbr.rel (%p16) target = $region17
  $region16: #{decoder_block.16} parent=0 // pred_region
    %vm19 = vcmask 31744
    %20 = vst.msk [vmem:[#allocation2] sm:$0xff] %vm19, 0.0
    %21 = vst.msk [vmem:[#allocation2 + $0x8] sm:$0xff] %vm19, 0.0
  $region17: #{decoder_block.16} parent=0 // pred_fallthru
    _
  %v22 = vld [vmem:[#allocation2] sm:$0xff]
  %v23 = vld [vmem:[#allocation2 + $0x8] sm:$0xff]
  %v24 = vld [vmem:[%s0] sm:$0xff]
  %v25 = vld [vmem:[%s0 + $0x8] sm:$0xff]
  %v26 = vpack.c.bf16 %v25, %v24
  %v27 = vld [vmem:[%s1] sm:$0xff]
  %v28 = vld [vmem:[%s1 + $0x8] sm:$0xff]
  %v29 = vld [vmem:[%s1 + $0x10] sm:$0xff]
  %v30 = vld [vmem:[%s1 + $0x18] sm:$0xff]
  %v31 = vpack.c.bf16 %v28, %v27
  %v32 = vpack.c.bf16 %v30, %v29
  %vm33 = vcmask 261120
  %v35 = vsel %vm33, %v26, 0
  %37 = vmatprep.subr.bf16.mxu0 0
  %38 = vmatpush1.bf16.msra.mxu0 0
  %39 = vmatprep.subr.bf16.mxu0 0
  %40 = vmatpush1.bf16.msra.mxu0 0
  %41 = vmatprep.subr.bf16.mxu0 0
  %42 = vmatpush1.bf16.msra.mxu0 0
  %43 = vmatprep.subr.bf16.mxu0 0
  %44 = vmatpush1.bf16.msra.mxu0 0
  %45 = vmatprep.subr.bf16.mxu0 0
  %46 = vmatpush1.bf16.msra.mxu0 0
  %47 = vmatprep.subr.bf16.mxu0 0
  %48 = vmatpush1.bf16.msra.mxu0 0
  %49 = vmatprep.subr.bf16.mxu0 0
  %50 = vmatpush1.bf16.msra.mxu0 %v32
  %51 = vmatprep.subr.bf16.mxu0 0
  %52 = vmatpush1.bf16.msra.mxu0 %v31
  %53 = vmatprep.subr.bf16.mxu0 0
  %54 = vmatpush2.bf16.msra.mxu0 0
  %55 = vmatprep.subr.bf16.mxu0 0
  %56 = vmatpush2.bf16.msra.mxu0 0
  %57 = vmatprep.subr.bf16.mxu0 0
  %58 = vmatpush2.bf16.msra.mxu0 0
  %59 = vmatprep.subr.bf16.mxu0 0
  %60 = vmatpush2.bf16.msra.mxu0 0
  %61 = vmatprep.subr.bf16.mxu0 0
  %62 = vmatpush2.bf16.msra.mxu0 0
  %63 = vmatprep.subr.bf16.mxu0 0
  %64 = vmatpush2.bf16.msra.mxu0 0
  %65 = vmatprep.subr.bf16.mxu0 0
  %66 = vmatpush2.bf16.msra.mxu0 0
  %67 = vmatprep.subr.bf16.mxu0 0
  %68 = vmatpush2.bf16.msra.mxu0 0
  %69 = vmatprep.mubr.bf16.mxu0 0
  %70 = vmatmul.mubr.bf16.gmra.mxu0 %v35
  %v71 = vpop.f32.mrf.mxu0
  %v72 = vadd.f32 0.0, %v71
  %v73 = vpop.f32.mrf.mxu0
  %v74 = vpop.f32.mrf.mxu0
  %v75 = vadd.f32 0.0, %v74
  %v76 = vpop.f32.mrf.mxu0
  %77 = vdwg.mxu0
  %v78 = vadd.f32 %v22, %v72
  %v79 = vadd.f32 %v23, %v75
  %vm80 = vcmask 31744
  %81 = vst.msk [vmem:[#allocation2] sm:$0xff] %vm80, %v78
  %82 = vst.msk [vmem:[#allocation2 + $0x8] sm:$0xff] %vm80, %v79
  // Predicated region
  $region18: #{decoder_block.16} parent=0 // pred_check
    %p83 = pneg %p15
  $region19: #{decoder_block.16} parent=0 // pred_check_branch
    %85 = sbr.rel (%p83) target = $region21
  $region20: #{decoder_block.16} parent=0 // pred_region
    %v86 = vld [vmem:[#allocation2] sm:$0xff]
    %v87 = vld [vmem:[#allocation2 + $0x8] sm:$0xff]
    %v88 = vld [vmem:[%s2] sm:$0x1]
    %v90 = vlaneseq
    %v91 = vshrl.u32 %v90, 7
    %v92 = vsub.s32 0, %v91
    %v93 = vrot.slane %v88, %v92
    %v95 = vadd.f32 %v86, %v93
    %v96 = vadd.f32 %v87, %v93
    %97 = vst.msk [vmem:[%s3] sm:$0xff] %vm80, %v95
    %98 = vst.msk [vmem:[%s3 + $0x8] sm:$0xff] %vm80, %v96
  $region21: #{decoder_block.16} parent=0 // pred_fallthru
    _
  // Predicated region
  $region22: #{decoder_block.16} parent=0 // pred_check
    _
  $region23: #{decoder_block.16} parent=0 // pred_check_branch
    %100 = sbr.rel (0) target = $region25
  $region24: #{decoder_block.16} parent=0 // pred_region
    _
  $region25: #{decoder_block.16} parent=0 // pred_fallthru
    _
  // Predicated region
  $region26: #{decoder_block.16} parent=0 // pred_check
    _
  $region27: #{decoder_block.16} parent=0 // pred_check_branch
    %102 = sbr.rel (0) target = $region29
  $region28: #{decoder_block.16} parent=0 // pred_region
    _
  $region29: #{decoder_block.16} parent=0 // pred_fallthru
    _

// kernel: decoder_block.17
$region0: #{decoder_block.17}
  #allocation0 [shape = 'u32[]', space=smem, size = 0x4, offset = 0x4, fixed_abs, tag = 'smem constant byte address 0x4 - core index']
  #allocation1 [shape = 'u32[144,128]{1,0:T(1,128)}', space=vmem, size = 0x12000, scoped, tag = 'internal scratch']
  #allocation2 [shape = 'f32[16,32]{1,0:T(8,128)}', space=vmem, size = 0x2000, scoped, tag = 'scratch operand']
  #allocation3 [shape = 'f32[16,32]{1,0:T(8,128)}', space=vmem, size = 0x2000, scoped, tag = 'scratch operand']
  %s0 = inlined_call_operand.vmem [shape: f32[16,32], index: 0, kind: input, shape index: {}]
  %s1 = inlined_call_operand.vmem [shape: f32[4,16,1], index: 1, kind: input, shape index: {}]
  %s2 = inlined_call_operand.vmem [shape: f32[4,32,128], index: 2, kind: input, shape index: {}]
  %s3 = inlined_call_operand.vmem [shape: f32[4,1,128], index: 3, kind: input, shape index: {}]
  %s4 = inlined_call_operand.vmem [shape: f32[4,128,32], index: 4, kind: input, shape index: {}]
  %s5 = inlined_call_operand.vmem [shape: f32[4,1,32], index: 5, kind: input, shape index: {}]
  %s6 = inlined_call_operand.vmem [shape: f32[1,32], index: 6, kind: input, shape index: {}]
  %s7 = inlined_call_operand.vmem [shape: f32[1,32], index: 7, kind: input, shape index: {}]
  %s8 = inlined_call_operand.hbm [shape: f32[16,32], index: 8, kind: output, shape index: {}]
  %s9 = sld [smem:[#allocation0]]
  $region81: #{decoder_block.17} parent=0
    _
  %s11 = ssub.s32 1, %s9
  %s12 = scalar_select 0, %s11, %s9
  $region1: #{decoder_block.17} parent=0
    #allocation4 [shape = 'u8[8192]{0}', space=vmem, size = 0x2000, scoped, tag = 'output window, operand 0, single buffered']
    #allocation5 [shape = 's32[2]{0}', space=sflag, size = 0x8, scoped, tag = 'scoped memory for decoder_block.17']
    %13 = vsyncpa [#allocation5], 0
    loop: start=0, step=1, limit=6
    $region2: #{decoder_block.17} parent=1 // loop_pre_header
      _
    $region3: #{decoder_block.17} parent=1 // loop_header
      %s15 = sphi 0, %s19
      %p16 = scmp.ge.s32.totalorder %s15, 6
      %s22 = sphi 0, %s41
      %s23 = sphi 0, %s37
      %s24 = sphi 0, %s33
      %s25 = sphi 0, %s22
      %s26 = sphi 0, %s23
      %s27 = sphi 0, %s24
      %s28 = sphi 0, %s25
      %s29 = sphi 0, %s26
      %s30 = sphi 0, %s27
      %s44 = sphi 0, %s46
      %s47 = sphi 0, %s44
      %s48 = sphi 0, %s47
      %s64 = sphi 0, %s48
      %s72 = sphi 0, %s74
      %s75 = sphi 0, %s72
      %s76 = sphi 0, %s75
      %s92 = sphi 0, %s76
      %s100 = sphi 0, %s102
      %s103 = sphi 0, %s100
      %s104 = sphi 0, %s103
      %s120 = sphi 0, %s104
      %s128 = sphi 0, %s130
      %s131 = sphi 0, %s128
      %s132 = sphi 0, %s131
      %s148 = sphi 0, %s132
      %s156 = sphi 0, %s158
      %s159 = sphi 0, %s156
      %s160 = sphi 0, %s159
      %s176 = sphi 0, %s160
      %s182 = sphi 0, %s184
      %s185 = sphi 0, %s182
      %s186 = sphi 0, %s185
      %s202 = sphi 0, %s186
      %s206 = sphi 0, %s206
      %s208 = sphi 0, %s206
      %s209 = sphi 0, %s208
      %s223 = sphi 0, %s209
      %s227 = sphi 0, %s227
      %s229 = sphi 0, %s227
      %s230 = sphi 0, %s229
      %s244 = sphi 0, %s230
      %s250 = sphi 0, %s252
      %s253 = sphi 0, %s250
      %s254 = sphi 0, %s253
      %s270 = sphi 0, %s254
    $region4: #{decoder_block.17} parent=1 // loop_header_branch
      %18 = sbr.rel (%p16) target = $region8
    $region5: #{decoder_block.17} parent=1 // loop_body
      %s20 = ssub.s32 %s15, 1
      %s21 = ssub.s32 %s15, 2
      %s31 = sadd.s32 1, %s24
      %p32 = scmp.ge.s32.totalorder %s31, 1
      %s33 = scalar_select %p32, 0, %s31
      %s34 = sadd.s32 1, %s23
      %s35 = scalar_select %p32, %s34, %s23
      %p36 = scmp.ge.s32.totalorder %s35, 4
      %s37 = scalar_select %p36, 0, %s35
      %s38 = sadd.s32 1, %s22
      %s39 = scalar_select %p36, %s38, %s22
      %p40 = scmp.ge.s32.totalorder %s39, 1
      %s41 = scalar_select %p40, 0, %s39
      %s42 = ssub.s32 %s22, %s41
      %p43 = scmp.eq.s32.totalorder %s42, 0
      %s45 = sadd.s32 %s44, 1
      %s46 = scalar_select %p43, %s44, %s45
      %p49 = pneg %p43
      %p50 = scmp.eq.s32.totalorder %s15, 3
      %p51 = por %p49, %p50
      %p52 = scmp.ne.s32.totalorder %s44, %s47
      %p53 = scmp.eq.s32.totalorder %s15, 0
      %p54 = por %p52, %p53
      %p55 = scmp.ne.s32.totalorder %s44, %s47
      %p56 = scmp.eq.s32.totalorder %s20, 3
      %p57 = por %p55, %p56
      %p58 = scmp.ne.s32.totalorder %s47, %s48
      %p59 = scmp.eq.s32.totalorder %s20, 0
      %p60 = por %p58, %p59
      %p61 = scmp.ne.s32.totalorder %s47, %s48
      %p62 = scmp.eq.s32.totalorder %s21, 3
      %p63 = por %p61, %p62
      %p65 = scmp.ne.s32.totalorder %s48, %s64
      %p66 = scmp.eq.s32.totalorder %s21, 0
      %p67 = por %p65, %p66
      %s68 = ssub.s32 %s23, %s37
      %s69 = ssub.s32 %s22, %s41
      %s70 = sor.u32 %s68, %s69
      %p71 = scmp.eq.s32.totalorder %s70, 0
      %s73 = sadd.s32 %s72, 1
      %s74 = scalar_select %p71, %s72, %s73
      %p77 = pneg %p71
      %p78 = scmp.eq.s32.totalorder %s15, 3
      %p79 = por %p77, %p78
      %p80 = scmp.ne.s32.totalorder %s72, %s75
      %p81 = scmp.eq.s32.totalorder %s15, 0
      %p82 = por %p80, %p81
      %p83 = scmp.ne.s32.totalorder %s72, %s75
      %p84 = scmp.eq.s32.totalorder %s20, 3
      %p85 = por %p83, %p84
      %p86 = scmp.ne.s32.totalorder %s75, %s76
      %p87 = scmp.eq.s32.totalorder %s20, 0
      %p88 = por %p86, %p87
      %p89 = scmp.ne.s32.totalorder %s75, %s76
      %p90 = scmp.eq.s32.totalorder %s21, 3
      %p91 = por %p89, %p90
      %p93 = scmp.ne.s32.totalorder %s76, %s92
      %p94 = scmp.eq.s32.totalorder %s21, 0
      %p95 = por %p93, %p94
      %s96 = ssub.s32 %s23, %s37
      %s97 = ssub.s32 %s24, %s33
      %s98 = sor.u32 %s96, %s97
      %p99 = scmp.eq.s32.totalorder %s98, 0
      %s101 = sadd.s32 %s100, 1
      %s102 = scalar_select %p99, %s100, %s101
      %p105 = pneg %p99
      %p106 = scmp.eq.s32.totalorder %s15, 3
      %p107 = por %p105, %p106
      %p108 = scmp.ne.s32.totalorder %s100, %s103
      %p109 = scmp.eq.s32.totalorder %s15, 0
      %p110 = por %p108, %p109
      %p111 = scmp.ne.s32.totalorder %s100, %s103
      %p112 = scmp.eq.s32.totalorder %s20, 3
      %p113 = por %p111, %p112
      %p114 = scmp.ne.s32.totalorder %s103, %s104
      %p115 = scmp.eq.s32.totalorder %s20, 0
      %p116 = por %p114, %p115
      %p117 = scmp.ne.s32.totalorder %s103, %s104
      %p118 = scmp.eq.s32.totalorder %s21, 3
      %p119 = por %p117, %p118
      %p121 = scmp.ne.s32.totalorder %s104, %s120
      %p122 = scmp.eq.s32.totalorder %s21, 0
      %p123 = por %p121, %p122
      %s124 = ssub.s32 %s23, %s37
      %s125 = ssub.s32 %s24, %s33
      %s126 = sor.u32 %s124, %s125
      %p127 = scmp.eq.s32.totalorder %s126, 0
      %s129 = sadd.s32 %s128, 1
      %s130 = scalar_select %p127, %s128, %s129
      %p133 = pneg %p127
      %p134 = scmp.eq.s32.totalorder %s15, 3
      %p135 = por %p133, %p134
      %p136 = scmp.ne.s32.totalorder %s128, %s131
      %p137 = scmp.eq.s32.totalorder %s15, 0
      %p138 = por %p136, %p137
      %p139 = scmp.ne.s32.totalorder %s128, %s131
      %p140 = scmp.eq.s32.totalorder %s20, 3
      %p141 = por %p139, %p140
      %p142 = scmp.ne.s32.totalorder %s131, %s132
      %p143 = scmp.eq.s32.totalorder %s20, 0
      %p144 = por %p142, %p143
      %p145 = scmp.ne.s32.totalorder %s131, %s132
      %p146 = scmp.eq.s32.totalorder %s21, 3
      %p147 = por %p145, %p146
      %p149 = scmp.ne.s32.totalorder %s132, %s148
      %p150 = scmp.eq.s32.totalorder %s21, 0
      %p151 = por %p149, %p150
      %s152 = ssub.s32 %s23, %s37
      %s153 = ssub.s32 %s24, %s33
      %s154 = sor.u32 %s152, %s153
      %p155 = scmp.eq.s32.totalorder %s154, 0
      %s157 = sadd.s32 %s156, 1
      %s158 = scalar_select %p155, %s156, %s157
      %p161 = pneg %p155
      %p162 = scmp.eq.s32.totalorder %s15, 3
      %p163 = por %p161, %p162
      %p164 = scmp.ne.s32.totalorder %s156, %s159
      %p165 = scmp.eq.s32.totalorder %s15, 0
      %p166 = por %p164, %p165
      %p167 = scmp.ne.s32.totalorder %s156, %s159
      %p168 = scmp.eq.s32.totalorder %s20, 3
      %p169 = por %p167, %p168
      %p170 = scmp.ne.s32.totalorder %s159, %s160
      %p171 = scmp.eq.s32.totalorder %s20, 0
      %p172 = por %p170, %p171
      %p173 = scmp.ne.s32.totalorder %s159, %s160
      %p174 = scmp.eq.s32.totalorder %s21, 3
      %p175 = por %p173, %p174
      %p177 = scmp.ne.s32.totalorder %s160, %s176
      %p178 = scmp.eq.s32.totalorder %s21, 0
      %p179 = por %p177, %p178
      %s180 = ssub.s32 %s23, %s37
      %p181 = scmp.eq.s32.totalorder %s180, 0
      %s183 = sadd.s32 %s182, 1
      %s184 = scalar_select %p181, %s182, %s183
      %p187 = pneg %p181
      %p188 = scmp.eq.s32.totalorder %s15, 3
      %p189 = por %p187, %p188
      %p190 = scmp.ne.s32.totalorder %s182, %s185
      %p191 = scmp.eq.s32.totalorder %s15, 0
      %p192 = por %p190, %p191
      %p193 = scmp.ne.s32.totalorder %s182, %s185
      %p194 = scmp.eq.s32.totalorder %s20, 3
      %p195 = por %p193, %p194
      %p196 = scmp.ne.s32.totalorder %s185, %s186
      %p197 = scmp.eq.s32.totalorder %s20, 0
      %p198 = por %p196, %p197
      %p199 = scmp.ne.s32.totalorder %s185, %s186
      %p200 = scmp.eq.s32.totalorder %s21, 3
      %p201 = por %p199, %p200
      %p203 = scmp.ne.s32.totalorder %s186, %s202
      %p204 = scmp.eq.s32.totalorder %s21, 0
      %p205 = por %p203, %p204
      %s207 = sadd.s32 %s206, 1
      %p210 = scmp.eq.s32.totalorder %s15, 3
      %p211 = scmp.ne.s32.totalorder %s206, %s208
      %p212 = scmp.eq.s32.totalorder %s15, 0
      %p213 = por %p211, %p212
      %p214 = scmp.ne.s32.totalorder %s206, %s208
      %p215 = scmp.eq.s32.totalorder %s20, 3
      %p216 = por %p214, %p215
      %p217 = scmp.ne.s32.totalorder %s208, %s209
      %p218 = scmp.eq.s32.totalorder %s20, 0
      %p219 = por %p217, %p218
      %p220 = scmp.ne.s32.totalorder %s208, %s209
      %p221 = scmp.eq.s32.totalorder %s21, 3
      %p222 = por %p220, %p221
      %p224 = scmp.ne.s32.totalorder %s209, %s223
      %p225 = scmp.eq.s32.totalorder %s21, 0
      %p226 = por %p224, %p225
      %s228 = sadd.s32 %s227, 1
      %p231 = scmp.eq.s32.totalorder %s15, 3
      %p232 = scmp.ne.s32.totalorder %s227, %s229
      %p233 = scmp.eq.s32.totalorder %s15, 0
      %p234 = por %p232, %p233
      %p235 = scmp.ne.s32.totalorder %s227, %s229
      %p236 = scmp.eq.s32.totalorder %s20, 3
      %p237 = por %p235, %p236
      %p238 = scmp.ne.s32.totalorder %s229, %s230
      %p239 = scmp.eq.s32.totalorder %s20, 0
      %p240 = por %p238, %p239
      %p241 = scmp.ne.s32.totalorder %s229, %s230
      %p242 = scmp.eq.s32.totalorder %s21, 3
      %p243 = por %p241, %p242
      %p245 = scmp.ne.s32.totalorder %s230, %s244
      %p246 = scmp.eq.s32.totalorder %s21, 0
      %p247 = por %p245, %p246
      %s248 = ssub.s32 %s22, %s41
      %p249 = scmp.eq.s32.totalorder %s248, 0
      %s251 = sadd.s32 %s250, 1
      %s252 = scalar_select %p249, %s250, %s251
      %p255 = pneg %p249
      %p256 = scmp.eq.s32.totalorder %s15, 3
      %p257 = por %p255, %p256
      %p258 = scmp.ne.s32.totalorder %s250, %s253
      %p259 = scmp.eq.s32.totalorder %s15, 0
      %p260 = por %p258, %p259
      %p261 = scmp.ne.s32.totalorder %s250, %s253
      %p262 = scmp.eq.s32.totalorder %s20, 3
      %p263 = por %p261, %p262
      %p264 = scmp.ne.s32.totalorder %s253, %s254
      %p265 = scmp.eq.s32.totalorder %s20, 0
      %p266 = por %p264, %p265
      %p267 = scmp.ne.s32.totalorder %s253, %s254
      %p268 = scmp.eq.s32.totalorder %s21, 3
      %p269 = por %p267, %p268
      %p271 = scmp.ne.s32.totalorder %s254, %s270
      %p272 = scmp.eq.s32.totalorder %s21, 0
      %p273 = por %p271, %p272
      %p274 = scmp.le.s32.totalorder 1, %s15
      %p275 = scmp.lt.s32.totalorder %s15, 5
      %p276 = pnand %p274, %p275
      %p277 = pneg %p276
      // Predicated region
      $region9: #{decoder_block.17} parent=5 // pred_check
        _
      $region10: #{decoder_block.17} parent=5 // pred_check_branch
        %279 = sbr.rel (%p276) target = $region12
      $region11: #{decoder_block.17} parent=5 // pred_region
        %s280 = ssub.s32 %s15, 1
        // Predicated region
        $region13: #{decoder_block.17} parent=11 // pred_check
          %p281 = pneg %p60
        $region14: #{decoder_block.17} parent=11 // pred_check_branch
          %283 = sbr.rel (%p281) target = $region16
        $region15: #{decoder_block.17} parent=11 // pred_region
          %s284 = smul.u32 2, %s25
          %p285 = scmp.lt.s32.totalorder %s284, 1
          %s286 = scalar_select %p285, %s284, 1
          %s287 = smul.addr %s286, 8
          %s288 = scalar_lea.vmem %s0, %s287
          %s289 = smul.u32 2, %s25
        $region16: #{decoder_block.17} parent=11 // pred_fallthru
          _
        // Predicated region
        $region17: #{decoder_block.17} parent=11 // pred_check
          %p290 = pneg %p219
        $region18: #{decoder_block.17} parent=11 // pred_check_branch
          %292 = sbr.rel (%p290) target = $region20
        $region19: #{decoder_block.17} parent=11 // pred_region
          _
        $region20: #{decoder_block.17} parent=11 // pred_fallthru
          _
        // Predicated region
        $region21: #{decoder_block.17} parent=11 // pred_check
          %p293 = pneg %p240
        $region22: #{decoder_block.17} parent=11 // pred_check_branch
          %295 = sbr.rel (%p293) target = $region24
        $region23: #{decoder_block.17} parent=11 // pred_region
          _
        $region24: #{decoder_block.17} parent=11 // pred_fallthru
          _
      $region12: #{decoder_block.17} parent=5 // pred_fallthru
        _
      %p296 = scmp.lt.s32.totalorder %s15, 4
      // Predicated region
      $region25: #{decoder_block.17} parent=5 // pred_check
        %p297 = pneg %p296
      $region26: #{decoder_block.17} parent=5 // pred_check_branch
        %299 = sbr.rel (%p297) target = $region28
      $region27: #{decoder_block.17} parent=5 // pred_region
        // Predicated region
        $region29: #{decoder_block.17} parent=27 // pred_check
          %p300 = pneg %p82
        $region30: #{decoder_block.17} parent=27 // pred_check_branch
          %302 = sbr.rel (%p300) target = $region32
        $region31: #{decoder_block.17} parent=27 // pred_region
          %s303 = smul.u32 2, %s22
          %p304 = scmp.lt.s32.totalorder %s23, 3
          %s305 = scalar_select %p304, %s23, 3
          %p306 = scmp.lt.s32.totalorder %s303, 1
          %s307 = scalar_select %p306, %s303, 1
          %s308 = smul.addr %s305, 2
          %s309 = sadd.s32 %s307, %s308
          %s310 = smul.addr %s309, 8
          %s311 = scalar_lea.vmem %s1, %s310
          %s312 = smul.u32 2, %s22
        $region32: #{decoder_block.17} parent=27 // pred_fallthru
          _
        // Predicated region
        $region33: #{decoder_block.17} parent=27 // pred_check
          %p313 = pneg %p110
        $region34: #{decoder_block.17} parent=27 // pred_check_branch
          %315 = sbr.rel (%p313) target = $region36
        $region35: #{decoder_block.17} parent=27 // pred_region
          %p316 = scmp.lt.s32.totalorder %s23, 3
          %s317 = scalar_select %p316, %s23, 3
          %p318 = scmp.lt.s32.totalorder %s24, 0
          %s319 = scalar_select %p318, %s24, 0
          %s320 = smul.addr %s317, 4
          %s321 = sadd.s32 %s319, %s320
          %s322 = smul.addr %s321, 8
          %s323 = scalar_lea.vmem %s2, %s322
        $region36: #{decoder_block.17} parent=27 // pred_fallthru
          _
        // Predicated region
        $region37: #{decoder_block.17} parent=27 // pred_check
          %p324 = pneg %p138
        $region38: #{decoder_block.17} parent=27 // pred_check_branch
          %326 = sbr.rel (%p324) target = $region40
        $region39: #{decoder_block.17} parent=27 // pred_region
          %p327 = scmp.lt.s32.totalorder %s23, 3
          %s328 = scalar_select %p327, %s23, 3
          %p329 = scmp.lt.s32.totalorder %s24, 0
          %s330 = scalar_select %p329, %s24, 0
          %s331 = sadd.s32 %s330, %s328
          %s332 = scalar_lea.vmem %s3, %s331
        $region40: #{decoder_block.17} parent=27 // pred_fallthru
          _
        // Predicated region
        $region41: #{decoder_block.17} parent=27 // pred_check
          %p333 = pneg %p166
        $region42: #{decoder_block.17} parent=27 // pred_check_branch
          %335 = sbr.rel (%p333) target = $region44
        $region43: #{decoder_block.17} parent=27 // pred_region
          %s336 = smul.u32 16, %s24
          %p337 = scmp.lt.s32.totalorder %s23, 3
          %s338 = scalar_select %p337, %s23, 3
          %p339 = scmp.lt.s32.totalorder %s336, 15
          %s340 = scalar_select %p339, %s336, 15
          %s341 = smul.addr %s338, 16
          %s342 = sadd.s32 %s340, %s341
          %s343 = smul.addr %s342, 8
          %s344 = scalar_lea.vmem %s4, %s343
          %s345 = smul.u32 16, %s24
        $region44: #{decoder_block.17} parent=27 // pred_fallthru
          _
        // Predicated region
        $region45: #{decoder_block.17} parent=27 // pred_check
          %p346 = pneg %p192
        $region46: #{decoder_block.17} parent=27 // pred_check_branch
          %348 = sbr.rel (%p346) target = $region48
        $region47: #{decoder_block.17} parent=27 // pred_region
          %p349 = scmp.lt.s32.totalorder %s23, 3
          %s350 = scalar_select %p349, %s23, 3
          %s351 = scalar_lea.vmem %s5, %s350
        $region48: #{decoder_block.17} parent=27 // pred_fallthru
          _
      $region28: #{decoder_block.17} parent=5 // pred_fallthru
        _
      %p352 = scmp.le.s32.totalorder 1, %s15
      %p353 = scmp.lt.s32.totalorder %s15, 5
      %p354 = pnand %p352, %p353
      %p355 = pneg %p354
      // Predicated region
      $region49: #{decoder_block.17} parent=5 // pred_check
        _
      $region50: #{decoder_block.17} parent=5 // pred_check_branch
        %357 = sbr.rel (%p354) target = $region52
      $region51: #{decoder_block.17} parent=5 // pred_region
        %s358 = ssub.s32 %s15, 1
        %s359 = smul.u32 2, %s25
        %p360 = scmp.lt.s32.totalorder %s359, 1
        %s361 = scalar_select %p360, %s359, 1
        %s362 = smul.addr %s361, 8
        %s363 = scalar_lea.vmem %s0, %s362
        %p364 = pneg %p60
        %p365 = pneg %p57
        %s366 = smul.u32 2, %s25
        %p367 = scmp.lt.s32.totalorder %s26, 3
        %s368 = scalar_select %p367, %s26, 3
        %p369 = scmp.lt.s32.totalorder %s366, 1
        %s370 = scalar_select %p369, %s366, 1
        %s371 = smul.addr %s368, 2
        %s372 = sadd.s32 %s370, %s371
        %s373 = smul.addr %s372, 8
        %s374 = scalar_lea.vmem %s1, %s373
        %p375 = pneg %p88
        %p376 = pneg %p85
        %p377 = scmp.lt.s32.totalorder %s26, 3
        %s378 = scalar_select %p377, %s26, 3
        %p379 = scmp.lt.s32.totalorder %s27, 0
        %s380 = scalar_select %p379, %s27, 0
        %s381 = smul.addr %s378, 4
        %s382 = sadd.s32 %s380, %s381
        %s383 = smul.addr %s382, 8
        %s384 = scalar_lea.vmem %s2, %s383
        %p385 = pneg %p116
        %p386 = pneg %p113
        %p387 = scmp.lt.s32.totalorder %s26, 3
        %s388 = scalar_select %p387, %s26, 3
        %p389 = scmp.lt.s32.totalorder %s27, 0
        %s390 = scalar_select %p389, %s27, 0
        %s391 = sadd.s32 %s390, %s388
        %s392 = scalar_lea.vmem %s3, %s391
        %p393 = pneg %p144
        %p394 = pneg %p141
        %s395 = smul.u32 16, %s27
        %p396 = scmp.lt.s32.totalorder %s26, 3
        %s397 = scalar_select %p396, %s26, 3
        %p398 = scmp.lt.s32.totalorder %s395, 15
        %s399 = scalar_select %p398, %s395, 15
        %s400 = smul.addr %s397, 16
        %s401 = sadd.s32 %s399, %s400
        %s402 = smul.addr %s401, 8
        %s403 = scalar_lea.vmem %s4, %s402
        %p404 = pneg %p172
        %p405 = pneg %p169
        %p406 = scmp.lt.s32.totalorder %s26, 3
        %s407 = scalar_select %p406, %s26, 3
        %s408 = scalar_lea.vmem %s5, %s407
        %p409 = pneg %p198
        %p410 = pneg %p195
        %p411 = pneg %p219
        %p412 = pneg %p216
        %p413 = pneg %p240
        %p414 = pneg %p237
        %p415 = pneg %p266
        %p416 = pneg %p263
        %s417 = smul.u32 2, %s25
        %p418 = scmp.lt.s32.totalorder %s417, 1
        %s419 = scalar_select %p418, %s417, 1
        %s420 = smul.addr %s419, 8
        %s421 = scalar_lea.vmem %s0, %s420
        %s422 = smul.u32 2, %s25
        %s423 = smul.u32 2, %s25
        %p424 = scmp.lt.s32.totalorder %s26, 3
        %s425 = scalar_select %p424, %s26, 3
        %p426 = scmp.lt.s32.totalorder %s423, 1
        %s427 = scalar_select %p426, %s423, 1
        %s428 = smul.addr %s425, 2
        %s429 = sadd.s32 %s427, %s428
        %s430 = smul.addr %s429, 8
        %s431 = scalar_lea.vmem %s1, %s430
        %s432 = smul.u32 2, %s25
        %p433 = scmp.lt.s32.totalorder %s26, 3
        %s434 = scalar_select %p433, %s26, 3
        %p435 = scmp.lt.s32.totalorder %s27, 0
        %s436 = scalar_select %p435, %s27, 0
        %s437 = smul.addr %s434, 4
        %s438 = sadd.s32 %s436, %s437
        %s439 = smul.addr %s438, 8
        %s440 = scalar_lea.vmem %s2, %s439
        %p441 = scmp.lt.s32.totalorder %s26, 3
        %s442 = scalar_select %p441, %s26, 3
        %p443 = scmp.lt.s32.totalorder %s27, 0
        %s444 = scalar_select %p443, %s27, 0
        %s445 = sadd.s32 %s444, %s442
        %s446 = scalar_lea.vmem %s3, %s445
        %s447 = smul.u32 16, %s27
        %p448 = scmp.lt.s32.totalorder %s26, 3
        %s449 = scalar_select %p448, %s26, 3
        %p450 = scmp.lt.s32.totalorder %s447, 15
        %s451 = scalar_select %p450, %s447, 15
        %s452 = smul.addr %s449, 16
        %s453 = sadd.s32 %s451, %s452
        %s454 = smul.addr %s453, 8
        %s455 = scalar_lea.vmem %s4, %s454
        %s456 = smul.u32 16, %s27
        %p457 = scmp.lt.s32.totalorder %s26, 3
        %s458 = scalar_select %p457, %s26, 3
        %s459 = scalar_lea.vmem %s5, %s458
        %s460 = smul.u32 2, %s25
        %p462 = scmp.eq.s32.totalorder %s26, 0
        %p463 = scmp.eq.s32.totalorder %s27, 0
        %p464 = pnand %p462, %p463
        %p465 = pneg %p464
        // Predicated region
        $region53: #{decoder_block.17} parent=51 // pred_check
          _
        $region54: #{decoder_block.17} parent=51 // pred_check_branch
          %467 = sbr.rel (%p464) target = $region56
        $region55: #{decoder_block.17} parent=51 // pred_region
          %vm468 = vcmask 261120
          %469 = vst.msk [vmem:[#allocation2] sm:$0xff] %vm468, 0.0
          %470 = vst.msk [vmem:[#allocation2 + $0x8] sm:$0xff] %vm468, 0.0
        $region56: #{decoder_block.17} parent=51 // pred_fallthru
          _
        // Predicated region
        $region57: #{decoder_block.17} parent=51 // pred_check
          %p471 = pneg %p463
        $region58: #{decoder_block.17} parent=51 // pred_check_branch
          %473 = sbr.rel (%p471) target = $region60
        $region59: #{decoder_block.17} parent=51 // pred_region
          %vm474 = vcmask 261120
          %475 = vst.msk [vmem:[#allocation3] sm:$0xff] %vm474, 0.0
          %476 = vst.msk [vmem:[#allocation3 + $0x8] sm:$0xff] %vm474, 0.0
        $region60: #{decoder_block.17} parent=51 // pred_fallthru
          _
        %v477 = vld [vmem:[%s421] sm:$0xff]
        %v478 = vld [vmem:[%s421 + $0x8] sm:$0xff]
        %v479 = vpack.c.bf16 %v478, %v477
        %v480 = vld [vmem:[%s440] sm:$0xff]
        %v481 = vld [vmem:[%s440 + $0x8] sm:$0xff]
        %v482 = vld [vmem:[%s440 + $0x10] sm:$0xff]
        %v483 = vld [vmem:[%s440 + $0x18] sm:$0xff]
        %v484 = vpack.c.bf16 %v481, %v480
        %v485 = vpack.c.bf16 %v483, %v482
        %v486 = vld [vmem:[%s446] sm:$0x1]
        %v488 = vlaneseq
        %v489 = vshrl.u32 %v488, 7
        %v490 = vsub.s32 0, %v489
        %v491 = vrot.slane %v486, %v490
        %vm493 = vcmask 261120
        %v495 = vsel %vm493, %v479, 0
        %497 = vmatprep.subr.bf16.mxu0 0
        %498 = vmatpush1.bf16.msra.mxu0 0
        %499 = vmatprep.subr.bf16.mxu0 0
        %500 = vmatpush1.bf16.msra.mxu0 0
        %501 = vmatprep.subr.bf16.mxu0 0
        %502 = vmatpush1.bf16.msra.mxu0 0
        %503 = vmatprep.subr.bf16.mxu0 0
        %504 = vmatpush1.bf16.msra.mxu0 0
        %505 = vmatprep.subr.bf16.mxu0 0
        %506 = vmatpush1.bf16.msra.mxu0 0
        %507 = vmatprep.subr.bf16.mxu0 0
        %508 = vmatpush1.bf16.msra.mxu0 0
        %509 = vmatprep.subr.bf16.mxu0 0
        %510 = vmatpush1.bf16.msra.mxu0 %v485
        %511 = vmatprep.subr.bf16.mxu0 0
        %512 = vmatpush1.bf16.msra.mxu0 %v484
        %513 = vmatprep.subr.bf16.mxu0 0
        %514 = vmatpush2.bf16.msra.mxu0 0
        %515 = vmatprep.subr.bf16.mxu0 0
        %516 = vmatpush2.bf16.msra.mxu0 0
        %517 = vmatprep.subr.bf16.mxu0 0
        %518 = vmatpush2.bf16.msra.mxu0 0
        %519 = vmatprep.subr.bf16.mxu0 0
        %520 = vmatpush2.bf16.msra.mxu0 0
        %521 = vmatprep.subr.bf16.mxu0 0
        %522 = vmatpush2.bf16.msra.mxu0 0
        %523 = vmatprep.subr.bf16.mxu0 0
        %524 = vmatpush2.bf16.msra.mxu0 0
        %525 = vmatprep.subr.bf16.mxu0 0
        %526 = vmatpush2.bf16.msra.mxu0 0
        %527 = vmatprep.subr.bf16.mxu0 0
        %528 = vmatpush2.bf16.msra.mxu0 0
        %529 = vmatprep.mubr.bf16.mxu0 0
        %530 = vmatmul.mubr.bf16.gmra.mxu0 %v495
        %v531 = vpop.f32.mrf.mxu0
        %v532 = vadd.f32 %v491, %v531
        %v533 = vpop.f32.mrf.mxu0
        %v534 = vpop.f32.mrf.mxu0
        %v535 = vadd.f32 %v491, %v534
        %v536 = vpop.f32.mrf.mxu0
        %537 = vdwg.mxu0
        %v538 = vmax.f32 %v532, 0.0
        %v539 = vmax.f32 %v535, 0.0
        %v540 = vld [vmem:[#allocation3] sm:$0xff]
        %v541 = vld [vmem:[#allocation3 + $0x8] sm:$0xff]
        %v542 = vpack.c.bf16 %v539, %v538
        %v543 = vld [vmem:[%s455] sm:$0xff]
        %v544 = vld [vmem:[%s455 + $0x8] sm:$0xff]
        %v545 = vld [vmem:[%s455 + $0x10] sm:$0xff]
        %v546 = vld [vmem:[%s455 + $0x18] sm:$0xff]
        %v547 = vld [vmem:[%s455 + $0x20] sm:$0xff]
        %v548 = vld [vmem:[%s455 + $0x28] sm:$0xff]
        %v549 = vld [vmem:[%s455 + $0x30] sm:$0xff]
        %v550 = vld [vmem:[%s455 + $0x38] sm:$0xff]
        %v551 = vld [vmem:[%s455 + $0x40] sm:$0xff]
        %v552 = vld [vmem:[%s455 + $0x48] sm:$0xff]
        %v553 = vld [vmem:[%s455 + $0x50] sm:$0xff]
        %v554 = vld [vmem:[%s455 + $0x58] sm:$0xff]
        %v555 = vld [vmem:[%s455 + $0x60] sm:$0xff]
        %v556 = vld [vmem:[%s455 + $0x68] sm:$0xff]
        %v557 = vld [vmem:[%s455 + $0x70] sm:$0xff]
        %v558 = vld [vmem:[%s455 + $0x78] sm:$0xff]
        %v559 = vpack.c.bf16 %v544, %v543
        %v560 = vpack.c.bf16 %v546, %v545
        %v561 = vpack.c.bf16 %v548, %v547
        %v562 = vpack.c.bf16 %v550, %v549
        %v563 = vpack.c.bf16 %v552, %v551
        %v564 = vpack.c.bf16 %v554, %v553
        %v565 = vpack.c.bf16 %v556, %v555
        %v566 = vpack.c.bf16 %v558, %v557
        %567 = vmatprep.subr.bf16.mxu0 0
        %568 = vmatpush1.bf16.msra.mxu0 %v566
        %569 = vmatprep.subr.bf16.mxu0 0
        %570 = vmatpush1.bf16.msra.mxu0 %v565
        %571 = vmatprep.subr.bf16.mxu0 0
        %572 = vmatpush1.bf16.msra.mxu0 %v564
        %573 = vmatprep.subr.bf16.mxu0 0
        %574 = vmatpush1.bf16.msra.mxu0 %v563
        %575 = vmatprep.subr.bf16.mxu0 0
        %576 = vmatpush1.bf16.msra.mxu0 %v562
        %577 = vmatprep.subr.bf16.mxu0 0
        %578 = vmatpush1.bf16.msra.mxu0 %v561
        %579 = vmatprep.subr.bf16.mxu0 0
        %580 = vmatpush1.bf16.msra.mxu0 %v560
        %581 = vmatprep.subr.bf16.mxu0 0
        %582 = vmatpush1.bf16.msra.mxu0 %v559
        %583 = vmatprep.subr.bf16.mxu0 0
        %584 = vmatpush2.bf16.msra.mxu0 0
        %585 = vmatprep.subr.bf16.mxu0 0
        %586 = vmatpush2.bf16.msra.mxu0 0
        %587 = vmatprep.subr.bf16.mxu0 0
        %588 = vmatpush2.bf16.msra.mxu0 0
        %589 = vmatprep.subr.bf16.mxu0 0
        %590 = vmatpush2.bf16.msra.mxu0 0
        %591 = vmatprep.subr.bf16.mxu0 0
        %592 = vmatpush2.bf16.msra.mxu0 0
        %593 = vmatprep.subr.bf16.mxu0 0
        %594 = vmatpush2.bf16.msra.mxu0 0
        %595 = vmatprep.subr.bf16.mxu0 0
        %596 = vmatpush2.bf16.msra.mxu0 0
        %597 = vmatprep.subr.bf16.mxu0 0
        %598 = vmatpush2.bf16.msra.mxu0 0
        %599 = vmatprep.mubr.bf16.mxu0 0
        %600 = vmatmul.mubr.bf16.gmra.mxu0 %v542
        %v601 = vpop.f32.mrf.mxu0
        %v602 = vadd.f32 0.0, %v601
        %v603 = vpop.f32.mrf.mxu0
        %v604 = vpop.f32.mrf.mxu0
        %v605 = vadd.f32 0.0, %v604
        %v606 = vpop.f32.mrf.mxu0
        %607 = vdwg.mxu0
        %v608 = vadd.f32 %v540, %v602
        %v609 = vadd.f32 %v541, %v605
        %610 = vst.msk [vmem:[#allocation3] sm:$0xff] %vm493, %v608
        %611 = vst.msk [vmem:[#allocation3 + $0x8] sm:$0xff] %vm493, %v609
        // Predicated region
        $region61: #{decoder_block.17} parent=51 // pred_check
          %p612 = pneg %p463
        $region62: #{decoder_block.17} parent=51 // pred_check_branch
          %614 = sbr.rel (%p612) target = $region64
        $region63: #{decoder_block.17} parent=51 // pred_region
          %v615 = vld [vmem:[#allocation2] sm:$0xff]
          %v616 = vld [vmem:[#allocation2 + $0x8] sm:$0xff]
          %v617 = vld [vmem:[%s431] sm:$0xff]
          %v618 = vld [vmem:[%s431 + $0x8] sm:$0xff]
          %v619 = vld [vmem:[#allocation3] sm:$0xff]
          %v620 = vld [vmem:[#allocation3 + $0x8] sm:$0xff]
          %v621 = vld [vmem:[%s459] sm:$0x1]
          %v623 = vlaneseq
          %v624 = vshrl.u32 %v623, 7
          %v625 = vsub.s32 0, %v624
          %v626 = vrot.slane %v621, %v625
          %v628 = vadd.f32 %v619, %v626
          %v629 = vadd.f32 %v620, %v626
          %631 = vset.pattern.permute.xlu0 0
          %632 = vperm.xlu0 %631, %v617
          %v633 = vpop.permute.xlu0 %632
          %636 = vset.pattern.permute.xlu0 0
          %637 = vperm.xlu0 %636, %v618
          %v638 = vpop.permute.xlu0 %637
          %v640 = vmul.f32 %v633, %v628
          %v641 = vmul.f32 %v638, %v629
          %v642 = vadd.f32 %v615, %v640
          %v643 = vadd.f32 %v616, %v641
          %644 = vst.msk [vmem:[#allocation2] sm:$0xff] %vm493, %v642
          %645 = vst.msk [vmem:[#allocation2 + $0x8] sm:$0xff] %vm493, %v643
        $region64: #{decoder_block.17} parent=51 // pred_fallthru
          _
        %p646 = scmp.eq.s32.totalorder %s26, 3
        %p647 = pnand %p646, %p463
        %p648 = pneg %p647
        // Predicated region
        $region65: #{decoder_block.17} parent=51 // pred_check
          _
        $region66: #{decoder_block.17} parent=51 // pred_check_branch
          %650 = sbr.rel (%p647) target = $region68
        $region67: #{decoder_block.17} parent=51 // pred_region
          %v651 = vld [vmem:[%s421] sm:$0xff]
          %v652 = vld [vmem:[%s421 + $0x8] sm:$0xff]
          %v653 = vld [vmem:[#allocation2] sm:$0xff]
          %v654 = vld [vmem:[#allocation2 + $0x8] sm:$0xff]
          %v655 = vadd.f32 %v651, %v653
          %v656 = vadd.f32 %v652, %v654
          %v657 = vsel %vm493, %v655, 0.0
          %658 = vadd.xlane.f32.xlu0 %v657
          %v659 = vpop.xlane.xlu0 %658
          %v660 = vsel %vm493, %v656, 0.0
          %661 = vadd.xlane.f32.xlu0 %v660
          %v662 = vpop.xlane.xlu0 %661
          %v663 = vrcp.pop 32.0
          %v664 = vmul.f32 %v659, %v663
          %v665 = vmul.f32 %v662, %v663
          %v666 = vsub.f32 %v655, %v664
          %v667 = vsub.f32 %v656, %v665
          %v668 = vmul.f32 %v666, %v666
          %v669 = vmul.f32 %v667, %v667
          %v670 = vsel %vm493, %v668, 0.0
          %671 = vadd.xlane.f32.xlu0 %v670
          %v672 = vpop.xlane.xlu0 %671
          %v673 = vsel %vm493, %v669, 0.0
          %674 = vadd.xlane.f32.xlu0 %v673
          %v675 = vpop.xlane.xlu0 %674
          %v676 = vmul.f32 %v672, %v663
          %v677 = vmul.f32 %v675, %v663
          %v678 = vadd.f32 %v676, 1e-05
          %v679 = vadd.f32 %v677, 1e-05
          %v680 = vrsqrt.pop %v678
          %v681 = vrsqrt.pop %v679
          %v682 = vmul.f32 %v666, %v680
          %v683 = vmul.f32 %v667, %v681
          %v684 = vld [vmem:[%s6] sm:$0x1]
          %v686 = vlaneseq
          %v687 = vshrl.u32 %v686, 7
          %v688 = vsub.s32 0, %v687
          %v689 = vrot.slane %v684, %v688
          %v691 = vmul.f32 %v682, %v689
          %v692 = vmul.f32 %v683, %v689
          %v693 = vld [vmem:[%s7] sm:$0x1]
          %v695 = vlaneseq
          %v696 = vshrl.u32 %v695, 7
          %v697 = vsub.s32 0, %v696
          %v698 = vrot.slane %v693, %v697
          %v700 = vadd.f32 %v691, %v698
          %v701 = vadd.f32 %v692, %v698
          %702 = vst.msk [vmem:[#allocation4] sm:$0xff] %vm493, %v700
          %703 = vst.msk [vmem:[#allocation4 + $0x8] sm:$0xff] %vm493, %v701
        $region68: #{decoder_block.17} parent=51 // pred_fallthru
          _
        // Predicated region
        $region69: #{decoder_block.17} parent=51 // pred_check
          %p704 = pneg %p263
        $region70: #{decoder_block.17} parent=51 // pred_check_branch
          %706 = sbr.rel (%p704) target = $region72
        $region71: #{decoder_block.17} parent=51 // pred_region
          %s707 = smul.u32 2, %s25
          %s709 = ssub.s32 256, 256
          %710 = vsyncadd [#allocation5], %s709
          %s711 = smul.addr %s707, 128
          %s712 = scalar_lea.hbm %s8, %s711
          %s713 = sshll.u32 [#allocation4], 4
          %s714 = int_to_ptr.vmem [resolvable:$true] %s713
          %719 = dma.vmem_to_hbm [thread:$0]  %s714, 256, %s712, [#allocation5], 128, 128, 8
        $region72: #{decoder_block.17} parent=51 // pred_fallthru
          _
        // Predicated region
        $region73: #{decoder_block.17} parent=51 // pred_check
          %p720 = pneg %p263
        $region74: #{decoder_block.17} parent=51 // pred_check_branch
          %722 = sbr.rel (%p720) target = $region76
        $region75: #{decoder_block.17} parent=51 // pred_region
          %723 = dma.done [#allocation5], 256
        $region76: #{decoder_block.17} parent=51 // pred_fallthru
          _
      $region52: #{decoder_block.17} parent=5 // pred_fallthru
        _
      %p724 = scmp.le.s32.totalorder 2, %s15
      // Predicated region
      $region77: #{decoder_block.17} parent=5 // pred_check
        %p725 = pneg %p724
      $region78: #{decoder_block.17} parent=5 // pred_check_branch
        %727 = sbr.rel (%p725) target = $region80
      $region79: #{decoder_block.17} parent=5 // pred_region
        %s728 = ssub.s32 %s15, 2
      $region80: #{decoder_block.17} parent=5 // pred_fallthru
        _
    $region6: #{decoder_block.17} parent=1 // loop_footer
      %s19 = sadd.s32 1, %s15
    $region7: #{decoder_block.17} parent=1 // loop_footer_branch
      %14 = sbr.rel target = $region3
    $region8: #{decoder_block.17} parent=1 // loop_exit
      _
    %729 = vsyncpa [#allocation5], 1
    %s730 = scalar_lea.sflag [#allocation5], 1
    %731 = vsyncpa %s730, 1

</llo_original>
